<compile_context>
chip_gen: v6e
topology: v6e:2x2x1
jax: 0.10.0
libtpu: 0.0.40
codegen_flags: <defaults>
</compile_context>

<pallas_src>
import functools
import math

import jax
import jax.numpy as jnp
from jax.experimental import pallas as pl
from jax.experimental.pallas import tpu as pltpu

COMPUTE_DTYPE = jnp.bfloat16   # streaming dtype for weights/activations
NEG_INF = -1e30
LN_EPS = 1e-5

# Tile targets (multiples of (8, 128)). Chosen so every kernel's per-step VMEM
# (bf16 inputs, f32 accumulator, double-buffered) fits the 32 MiB default
# scoped limit -> also safe on v7x's 64 MiB physical VMEM.
_TM, _TN, _TK = 256, 256, 512
_TK_LN = 256    # smaller K tile for the LN-fused matmul (keeps full-N blocks cheap)
_TQ = 256       # query-tile target for attention


def _round_up(x, m):
    return ((x + m - 1) // m) * m


def _tile_pad(dim, target):
    """Return (tile, padded_dim): full dim if small, else pad to a tile multiple."""
    if dim <= target:
        return dim, dim
    return target, _round_up(dim, target)


def _pad2(x, rows, cols):
    r, c = x.shape
    if r == rows and c == cols:
        return x
    return jnp.pad(x, ((0, rows - r), (0, cols - c)))


# ----------------------------------------------------------------------------
# Tiled matmul with fused bias (+ optional ReLU) epilogue
# ----------------------------------------------------------------------------
def _matmul_kernel(x_ref, w_ref, b_ref, o_ref, acc_ref, *, activation):
    @pl.when(pl.program_id(2) == 0)
    def _():
        acc_ref[...] = jnp.zeros_like(acc_ref)

    acc_ref[...] += jnp.dot(
        x_ref[...], w_ref[...], preferred_element_type=jnp.float32
    )

    @pl.when(pl.program_id(2) == pl.num_programs(2) - 1)
    def _():
        y = acc_ref[...] + b_ref[...].astype(jnp.float32)
        if activation == "relu":
            y = jnp.maximum(y, 0.0)
        o_ref[...] = y.astype(o_ref.dtype)


def linear(x, w, b, activation=None, out_dtype=None):
    """y = act(x @ w + b).  x: (M, K), w: (K, N), b: (N,) -> (M, N)."""
    M, K = x.shape
    K2, N = w.shape
    assert K == K2
    out_dtype = out_dtype if out_dtype is not None else COMPUTE_DTYPE
    x = x.astype(COMPUTE_DTYPE)
    w = w.astype(COMPUTE_DTYPE)

    tm, Mp = _tile_pad(M, _TM)
    tn, Np = _tile_pad(N, _TN)
    tk, Kp = _tile_pad(K, _TK)
    xp = _pad2(x, Mp, Kp)
    wp = _pad2(w, Kp, Np)
    bp = jnp.pad(b.astype(jnp.float32), (0, Np - N)).reshape(1, Np)

    kernel = functools.partial(_matmul_kernel, activation=activation)
    out = pl.pallas_call(
        kernel,
        out_shape=jax.ShapeDtypeStruct((Mp, Np), out_dtype),
        grid=(Mp // tm, Np // tn, Kp // tk),
        in_specs=[
            pl.BlockSpec((tm, tk), lambda i, j, k: (i, k)),
            pl.BlockSpec((tk, tn), lambda i, j, k: (k, j)),
            pl.BlockSpec((1, tn), lambda i, j, k: (0, j)),
        ],
        out_specs=pl.BlockSpec((tm, tn), lambda i, j, k: (i, j)),
        scratch_shapes=[pltpu.VMEM((tm, tn), jnp.float32)],
        compiler_params=pltpu.CompilerParams(
            dimension_semantics=("parallel", "parallel", "arbitrary")
        ),
    )(xp, wp, bp)
    if Mp != M or Np != N:
        out = out[:M, :N]
    return out


# ----------------------------------------------------------------------------
# Tiled matmul with fused bias + residual-add + LayerNorm epilogue
# (output feature dim N = d_model kept whole per block so LN is exact)
# ----------------------------------------------------------------------------
def _matmul_res_ln_kernel(x_ref, w_ref, b_ref, r_ref, g_ref, bt_ref,
                          o_ref, acc_ref, *, eps):
    @pl.when(pl.program_id(1) == 0)
    def _():
        acc_ref[...] = jnp.zeros_like(acc_ref)

    acc_ref[...] += jnp.dot(
        x_ref[...], w_ref[...], preferred_element_type=jnp.float32
    )

    @pl.when(pl.program_id(1) == pl.num_programs(1) - 1)
    def _():
        y = (acc_ref[...]
             + b_ref[...].astype(jnp.float32)
             + r_ref[...].astype(jnp.float32))
        mean = jnp.mean(y, axis=-1, keepdims=True)
        c = y - mean
        var = jnp.mean(c * c, axis=-1, keepdims=True)
        yn = c * jax.lax.rsqrt(var + eps)
        yn = yn * g_ref[...].astype(jnp.float32) + bt_ref[...].astype(jnp.float32)
        o_ref[...] = yn.astype(o_ref.dtype)


def matmul_residual_ln(x, w, b, residual, gamma, beta, eps=LN_EPS):
    """LayerNorm(residual + x @ w + b).  x:(M,K) w:(K,N) residual:(M,N)."""
    M, K = x.shape
    K2, N = w.shape
    assert K == K2 and residual.shape == (M, N)
    x = x.astype(COMPUTE_DTYPE)
    w = w.astype(COMPUTE_DTYPE)
    residual = residual.astype(COMPUTE_DTYPE)

    tm, Mp = _tile_pad(M, _TM)
    tk, Kp = _tile_pad(K, _TK_LN)
    xp = _pad2(x, Mp, Kp)
    wp = _pad2(w, Kp, N)
    rp = _pad2(residual, Mp, N)
    b2 = b.astype(jnp.float32).reshape(1, N)
    g2 = gamma.astype(jnp.float32).reshape(1, N)
    bt2 = beta.astype(jnp.float32).reshape(1, N)

    kernel = functools.partial(_matmul_res_ln_kernel, eps=eps)
    out = pl.pallas_call(
        kernel,
        out_shape=jax.ShapeDtypeStruct((Mp, N), COMPUTE_DTYPE),
        grid=(Mp // tm, Kp // tk),
        in_specs=[
            pl.BlockSpec((tm, tk), lambda i, k: (i, k)),
            pl.BlockSpec((tk, N), lambda i, k: (k, 0)),
            pl.BlockSpec((1, N), lambda i, k: (0, 0)),
            pl.BlockSpec((tm, N), lambda i, k: (i, 0)),
            pl.BlockSpec((1, N), lambda i, k: (0, 0)),
            pl.BlockSpec((1, N), lambda i, k: (0, 0)),
        ],
        out_specs=pl.BlockSpec((tm, N), lambda i, k: (i, 0)),
        scratch_shapes=[pltpu.VMEM((tm, N), jnp.float32)],
        compiler_params=pltpu.CompilerParams(
            dimension_semantics=("parallel", "arbitrary")
        ),
    )(xp, wp, b2, rp, g2, bt2)
    if Mp != M:
        out = out[:M]
    return out


# ----------------------------------------------------------------------------
# Multi-head attention core
#   * reads q/k/v straight from the fused projection buffer via column blocks
#     (no wrapper slices / transposes)
#   * splits heads with in-VMEM value slices, merges with a lane concat
#   * lane-dense (tq, D) output block
# ----------------------------------------------------------------------------
def _attention_kernel(q_ref, k_ref, v_ref, o_ref, *, nhead, scale, causal, q_tile):
    tq, D = q_ref.shape[1], q_ref.shape[2]
    Tk = k_ref.shape[1]
    Dh = D // nhead

    # Scale the (tq, D) query tile once (cheaper than scaling (H, tq, Tk) scores).
    q = (q_ref[0].astype(jnp.float32) * scale).astype(q_ref.dtype)   # (tq, D)
    k = k_ref[0]                                                      # (Tk, D)
    v = v_ref[0]                                                      # (Tk, D)

    if causal:
        q0 = pl.program_id(1) * q_tile
        row = jax.lax.broadcasted_iota(jnp.int32, (tq, Tk), 0) + q0
        col = jax.lax.broadcasted_iota(jnp.int32, (tq, Tk), 1)
        keep = col <= row                                             # shared by heads

    outs = []
    for h in range(nhead):  # small, static unroll
        sl = slice(h * Dh, (h + 1) * Dh)
        qh, kh, vh = q[:, sl], k[:, sl], v[:, sl]
        s = jax.lax.dot_general(
            qh, kh, (((1,), (1,)), ((), ())),
            preferred_element_type=jnp.float32)                       # (tq, Tk)
        if causal:
            s = jnp.where(keep, s, NEG_INF)
        m = jnp.max(s, axis=-1, keepdims=True)
        p = jnp.exp(s - m)
        denom = jnp.sum(p, axis=-1, keepdims=True)
        p = p * pl.reciprocal(denom, approx=True)
        outs.append(jnp.dot(p.astype(v.dtype), vh,
                            preferred_element_type=jnp.float32))      # (tq, Dh)

    o = jnp.concatenate(outs, axis=-1)                                # (tq, D)
    o_ref[0, :, :] = o.astype(o_ref.dtype)


def attention_core(q_src, kv_src, *, d_model, q_col, k_col, v_col, nhead, causal):
    """Scaled-dot-product attention.

    q_src : (B, Tq, nq * d_model)  -- query lives at column block `q_col`
    kv_src: (B, Tk, nk * d_model)  -- key / value at column blocks `k_col` / `v_col`
    Returns (B * Tq, d_model), lane-dense.
    """
    B, Tq = q_src.shape[0], q_src.shape[1]
    Tk = kv_src.shape[1]
    D = d_model
    # Column-block addressing of the fused QKV buffer needs 128-lane-aligned D.
    assert D % 128 == 0, "d_model must be a multiple of 128"
    Dh = D // nhead
    tq = Tq if (Tq <= _TQ or Tq % _TQ != 0) else _TQ

    kernel = functools.partial(
        _attention_kernel, nhead=nhead, scale=1.0 / math.sqrt(Dh),
        causal=causal, q_tile=tq)
    o = pl.pallas_call(
        kernel,
        out_shape=jax.ShapeDtypeStruct((B, Tq, D), q_src.dtype),
        grid=(B, Tq // tq),
        in_specs=[
            pl.BlockSpec((1, tq, D), lambda b, qi: (b, qi, q_col)),
            pl.BlockSpec((1, Tk, D), lambda b, qi: (b, 0, k_col)),
            pl.BlockSpec((1, Tk, D), lambda b, qi: (b, 0, v_col)),
        ],
        out_specs=pl.BlockSpec((1, tq, D), lambda b, qi: (b, qi, 0)),
        compiler_params=pltpu.CompilerParams(
            dimension_semantics=("parallel", "parallel")
        ),
    )(q_src, kv_src, kv_src)
    return o.reshape(B * Tq, D)


# ----------------------------------------------------------------------------
# Model glue (plain JAX): embedding gather, PE add, layer stacking
# ----------------------------------------------------------------------------
def make_positional_encoding(max_len, d_model):
    position = jnp.arange(max_len, dtype=jnp.float32)[:, None]
    div_term = jnp.exp(
        jnp.arange(0, d_model, 2, dtype=jnp.float32) * (-math.log(10000.0) / d_model)
    )
    pe = jnp.zeros((max_len, d_model), jnp.float32)
    pe = pe.at[:, 0::2].set(jnp.sin(position * div_term))
    pe = pe.at[:, 1::2].set(jnp.cos(position * div_term))
    return pe


def decoder_layer(x, memory, p, nhead):
    # Post-norm (PyTorch norm_first=False) TransformerDecoderLayer, eval mode.
    B, T, D = x.shape
    Tm = memory.shape[1]
    x_flat = x.reshape(B * T, D)
    mem_flat = memory.reshape(B * Tm, D)

    # --- self-attention (fused QKV projection; attention reads column blocks) ---
    qkv = linear(x_flat, p["sa_w_qkv"], p["sa_b_qkv"]).reshape(B, T, 3 * D)
    sa = attention_core(qkv, qkv, d_model=D, q_col=0, k_col=1, v_col=2,
                        nhead=nhead, causal=True)                    # (B*T, D)
    x_flat = matmul_residual_ln(sa, p["sa_wo"], p["sa_bo"],
                                x_flat, p["ln1_g"], p["ln1_b"])

    # --- cross-attention (separate Q projection, fused KV projection of memory) ---
    q = linear(x_flat, p["ca_wq"], p["ca_bq"]).reshape(B, T, D)
    kv = linear(mem_flat, p["ca_w_kv"], p["ca_b_kv"]).reshape(B, Tm, 2 * D)
    ca = attention_core(q, kv, d_model=D, q_col=0, k_col=0, v_col=1,
                        nhead=nhead, causal=False)                   # (B*T, D)
    x_flat = matmul_residual_ln(ca, p["ca_wo"], p["ca_bo"],
                                x_flat, p["ln2_g"], p["ln2_b"])

    # --- feed-forward (ReLU fused into FF1, residual+LN fused into FF2) ---
    h = linear(x_flat, p["w_ff1"], p["b_ff1"], activation="relu")
    x_flat = matmul_residual_ln(h, p["w_ff2"], p["b_ff2"],
                                x_flat, p["ln3_g"], p["ln3_b"])
    return x_flat.reshape(B, T, D)


def decoder_forward(params, tgt_tokens, memory, nhead):
    # Embedding gather + PE add are glue; all matmuls/softmax/LN run in Pallas.
    emb = params["embedding"][tgt_tokens]                            # (B, T, D) f32
    T = tgt_tokens.shape[1]
    x = (emb + params["pe"][None, :T, :]).astype(COMPUTE_DTYPE)
    memory = memory.astype(COMPUTE_DTYPE)
    for p in params["layers"]:
        x = decoder_layer(x, memory, p, nhead)
    B, T, D = x.shape
    logits = linear(x.reshape(B * T, D), params["fc_w"], params["fc_b"],
                    out_dtype=jnp.float32)
    return logits.reshape(B, T, -1)


def init_params(key, vocab_size, max_len, d_model, nhead, dim_ff, num_layers):
    keys = jax.random.split(key, 2 + num_layers)

    def dense(k, shape, scale=0.02):
        # Weights are stored bf16 end-to-end (streamed directly into the MXU).
        return (jax.random.normal(k, shape, jnp.float32) * scale).astype(COMPUTE_DTYPE)

    zeros_d = jnp.zeros((d_model,), jnp.float32)
    ones_d = jnp.ones((d_model,), jnp.float32)
    params = {
        "embedding": jax.random.normal(keys[0], (vocab_size, d_model), jnp.float32),
        "pe": make_positional_encoding(max_len + 1, d_model),
        "fc_w": dense(keys[1], (d_model, vocab_size)),
        "fc_b": jnp.zeros((vocab_size,), jnp.float32),
        "layers": [],
    }
    for li in range(num_layers):
        lk = jax.random.split(keys[2 + li], 10)
        params["layers"].append({
            # self-attention: fused QKV weight (D, 3D)
            "sa_w_qkv": jnp.concatenate([dense(lk[0], (d_model, d_model)),
                                         dense(lk[1], (d_model, d_model)),
                                         dense(lk[2], (d_model, d_model))], axis=1),
            "sa_b_qkv": jnp.zeros((3 * d_model,), jnp.float32),
            "sa_wo": dense(lk[3], (d_model, d_model)), "sa_bo": zeros_d,
            # cross-attention: separate Q, fused KV weight (D, 2D)
            "ca_wq": dense(lk[4], (d_model, d_model)), "ca_bq": zeros_d,
            "ca_w_kv": jnp.concatenate([dense(lk[5], (d_model, d_model)),
                                        dense(lk[6], (d_model, d_model))], axis=1),
            "ca_b_kv": jnp.zeros((2 * d_model,), jnp.float32),
            "ca_wo": dense(lk[7], (d_model, d_model)), "ca_bo": zeros_d,
            # feed-forward
            "w_ff1": dense(lk[8], (d_model, dim_ff)),
            "b_ff1": jnp.zeros((dim_ff,), jnp.float32),
            "w_ff2": dense(lk[9], (dim_ff, d_model)),
            "b_ff2": zeros_d,
            # layer norms (f32 epilogue params)
            "ln1_g": ones_d, "ln1_b": zeros_d,
            "ln2_g": ones_d, "ln2_b": zeros_d,
            "ln3_g": ones_d, "ln3_b": zeros_d,
        })
    return params


if __name__ == "__main__":
    # Small, deterministic config consistent with the module's forward.
    # d_model is kept a multiple of 128 so every block is lane-dense.
    vocab_size, max_len = 128, 16
    d_model, nhead, dim_ff, num_layers = 128, 4, 256, 2
    B, T_tgt, T_mem = 2, 8, 8

    key = jax.random.PRNGKey(0)
    kp, kt, km = jax.random.split(key, 3)

    params = init_params(kp, vocab_size, max_len, d_model, nhead, dim_ff, num_layers)
    tgt = jax.random.randint(kt, (B, T_tgt), 0, vocab_size)            # token ids
    memory = jax.random.normal(km, (B, T_mem, d_model), jnp.float32)   # encoder output

    fwd = jax.jit(functools.partial(decoder_forward, nhead=nhead))
    logits = fwd(params, tgt, memory)
    logits = jax.block_until_ready(logits)
    assert logits.shape == (B, T_tgt, vocab_size)
    assert bool(jnp.all(jnp.isfinite(logits)))
    print("KERNEL_OK")
</pallas_src>

<mosaic_0001>
module attributes {stable_mosaic.version = 11 : i64} {
  func.func @_matmul_kernel(%arg0: i32, %arg1: i32, %arg2: i32, %arg3: memref<16x128xbf16, #tpu.memory_space<vmem>>, %arg4: memref<128x128xbf16, #tpu.memory_space<vmem>>, %arg5: memref<1x128xf32, #tpu.memory_space<vmem>>, %arg6: memref<16x128xbf16, #tpu.memory_space<vmem>>, %arg7: memref<16x128xf32, #tpu.memory_space<vmem>>) attributes {dimension_semantics = [#tpu.dimension_semantics<parallel>, #tpu.dimension_semantics<parallel>, #tpu.dimension_semantics<arbitrary>], iteration_bounds = array<i64: 1, 1, 1>, scalar_prefetch = 0 : i64, scratch_operands = 1 : i64, tpu.core_type = #tpu.core_type<tc>, window_params = [{transform_indices = @transform_0, window_bounds = array<i64: 16, 128>}, {transform_indices = @transform_1, window_bounds = array<i64: 128, 128>}, {transform_indices = @transform_2, window_bounds = array<i64: 1, 128>}, {transform_indices = @transform_3, window_bounds = array<i64: 16, 128>}]} {
    %c0_i32 = arith.constant 0 : i32
    %0 = arith.cmpi eq, %arg2, %c0_i32 : i32
    %1 = arith.extui %0 : i1 to i32
    %c0_i32_0 = arith.constant 0 : i32
    %2 = arith.cmpi ne, %1, %c0_i32_0 : i32
    scf.if %2 {
      %cst_10 = arith.constant 0.000000e+00 : f32
      %12 = vector.broadcast %cst_10 : f32 to vector<16x128xf32>
      %c0_11 = arith.constant 0 : index
      %c0_12 = arith.constant 0 : index
      %13 = vector.load %arg7[%c0_11, %c0_12] : memref<16x128xf32, #tpu.memory_space<vmem>>, vector<16x128xf32>
      tpu.vector_store %arg7[%c0_11, %c0_12], %12 {strides = array<i32>} : memref<16x128xf32, #tpu.memory_space<vmem>>, vector<16x128xf32>,
    } else {
    }
    %c0 = arith.constant 0 : index
    %c0_1 = arith.constant 0 : index
    %3 = vector.load %arg7[%c0, %c0_1] : memref<16x128xf32, #tpu.memory_space<vmem>>, vector<16x128xf32>
    %c0_2 = arith.constant 0 : index
    %c0_3 = arith.constant 0 : index
    %4 = vector.load %arg3[%c0_2, %c0_3] : memref<16x128xbf16, #tpu.memory_space<vmem>>, vector<16x128xbf16>
    %c0_4 = arith.constant 0 : index
    %c0_5 = arith.constant 0 : index
    %5 = vector.load %arg4[%c0_4, %c0_5] : memref<128x128xbf16, #tpu.memory_space<vmem>>, vector<128x128xbf16>
    %cst = arith.constant dense<0.000000e+00> : vector<16x128xf32>
    %6 = tpu.matmul %4, %5, %cst {dimension_numbers = #tpu.dot_dimension_numbers<[1], [0], [0], [1], [0, 0, 1, 1], [], []>} : vector<16x128xbf16>, vector<128x128xbf16>, vector<16x128xf32> -> vector<16x128xf32>
    %7 = arith.addf %3, %6 : vector<16x128xf32>
    %c0_6 = arith.constant 0 : index
    %c0_7 = arith.constant 0 : index
    %8 = vector.load %arg7[%c0_6, %c0_7] : memref<16x128xf32, #tpu.memory_space<vmem>>, vector<16x128xf32>
    tpu.vector_store %arg7[%c0_6, %c0_7], %7 {strides = array<i32>} : memref<16x128xf32, #tpu.memory_space<vmem>>, vector<16x128xf32>,
    %c0_i32_8 = arith.constant 0 : i32
    %9 = arith.cmpi eq, %arg2, %c0_i32_8 : i32
    %10 = arith.extui %9 : i1 to i32
    %c0_i32_9 = arith.constant 0 : i32
    %11 = arith.cmpi ne, %10, %c0_i32_9 : i32
    scf.if %11 {
      %c0_10 = arith.constant 0 : index
      %c0_11 = arith.constant 0 : index
      %12 = vector.load %arg7[%c0_10, %c0_11] : memref<16x128xf32, #tpu.memory_space<vmem>>, vector<16x128xf32>
      %c0_12 = arith.constant 0 : index
      %c0_13 = arith.constant 0 : index
      %13 = vector.load %arg5[%c0_12, %c0_13] : memref<1x128xf32, #tpu.memory_space<vmem>>, vector<1x128xf32>
      %14 = vector.broadcast %13 : vector<1x128xf32> to vector<16x128xf32>
      %15 = arith.addf %12, %14 : vector<16x128xf32>
      %16 = arith.truncf %15 : vector<16x128xf32> to vector<16x128xbf16>
      %c0_14 = arith.constant 0 : index
      %c0_15 = arith.constant 0 : index
      %17 = vector.load %arg6[%c0_14, %c0_15] : memref<16x128xbf16, #tpu.memory_space<vmem>>, vector<16x128xbf16>
      tpu.vector_store %arg6[%c0_14, %c0_15], %16 {strides = array<i32>} : memref<16x128xbf16, #tpu.memory_space<vmem>>, vector<16x128xbf16>,
    } else {
    }
    return
  }
  func.func @transform_0(%arg0: i32, %arg1: i32, %arg2: i32) -> (i32, i32) {
    %c0_i32 = arith.constant 0 : i32
    return %arg0, %arg2 : i32, i32
  }
  func.func @transform_1(%arg0: i32, %arg1: i32, %arg2: i32) -> (i32, i32) {
    %c0_i32 = arith.constant 0 : i32
    return %arg2, %arg1 : i32, i32
  }
  func.func @transform_2(%arg0: i32, %arg1: i32, %arg2: i32) -> (i32, i32) {
    %c0_i32 = arith.constant 0 : i32
    %c0_i32_0 = arith.constant 0 : i32
    return %c0_i32, %arg1 : i32, i32
  }
  func.func @transform_3(%arg0: i32, %arg1: i32, %arg2: i32) -> (i32, i32) {
    %c0_i32 = arith.constant 0 : i32
    return %arg0, %arg1 : i32, i32
  }
}

module attributes {stable_mosaic.version = 11 : i64} {
  func.func @_matmul_res_ln_kernel(%arg0: i32, %arg1: i32, %arg2: memref<16x128xbf16, #tpu.memory_space<vmem>>, %arg3: memref<128x128xbf16, #tpu.memory_space<vmem>>, %arg4: memref<1x128xf32, #tpu.memory_space<vmem>>, %arg5: memref<16x128xbf16, #tpu.memory_space<vmem>>, %arg6: memref<1x128xf32, #tpu.memory_space<vmem>>, %arg7: memref<1x128xf32, #tpu.memory_space<vmem>>, %arg8: memref<16x128xbf16, #tpu.memory_space<vmem>>, %arg9: memref<16x128xf32, #tpu.memory_space<vmem>>) attributes {dimension_semantics = [#tpu.dimension_semantics<parallel>, #tpu.dimension_semantics<arbitrary>], iteration_bounds = array<i64: 1, 1>, scalar_prefetch = 0 : i64, scratch_operands = 1 : i64, tpu.core_type = #tpu.core_type<tc>, window_params = [{transform_indices = @transform_0, window_bounds = array<i64: 16, 128>}, {transform_indices = @transform_1, window_bounds = array<i64: 128, 128>}, {pipeline_mode = #tpu.pipeline_mode<synchronous>, transform_indices = @transform_2, window_bounds = array<i64: 1, 128>}, {transform_indices = @transform_3, window_bounds = array<i64: 16, 128>}, {pipeline_mode = #tpu.pipeline_mode<synchronous>, transform_indices = @transform_4, window_bounds = array<i64: 1, 128>}, {pipeline_mode = #tpu.pipeline_mode<synchronous>, transform_indices = @transform_5, window_bounds = array<i64: 1, 128>}, {transform_indices = @transform_6, window_bounds = array<i64: 16, 128>}]} {
    %c0_i32 = arith.constant 0 : i32
    %0 = arith.cmpi eq, %arg1, %c0_i32 : i32
    %1 = arith.extui %0 : i1 to i32
    %c0_i32_0 = arith.constant 0 : i32
    %2 = arith.cmpi ne, %1, %c0_i32_0 : i32
    scf.if %2 {
      %cst_10 = arith.constant 0.000000e+00 : f32
      %12 = vector.broadcast %cst_10 : f32 to vector<16x128xf32>
      %c0_11 = arith.constant 0 : index
      %c0_12 = arith.constant 0 : index
      %13 = vector.load %arg9[%c0_11, %c0_12] : memref<16x128xf32, #tpu.memory_space<vmem>>, vector<16x128xf32>
      tpu.vector_store %arg9[%c0_11, %c0_12], %12 {strides = array<i32>} : memref<16x128xf32, #tpu.memory_space<vmem>>, vector<16x128xf32>,
    } else {
    }
    %c0 = arith.constant 0 : index
    %c0_1 = arith.constant 0 : index
    %3 = vector.load %arg9[%c0, %c0_1] : memref<16x128xf32, #tpu.memory_space<vmem>>, vector<16x128xf32>
    %c0_2 = arith.constant 0 : index
    %c0_3 = arith.constant 0 : index
    %4 = vector.load %arg2[%c0_2, %c0_3] : memref<16x128xbf16, #tpu.memory_space<vmem>>, vector<16x128xbf16>
    %c0_4 = arith.constant 0 : index
    %c0_5 = arith.constant 0 : index
    %5 = vector.load %arg3[%c0_4, %c0_5] : memref<128x128xbf16, #tpu.memory_space<vmem>>, vector<128x128xbf16>
    %cst = arith.constant dense<0.000000e+00> : vector<16x128xf32>
    %6 = tpu.matmul %4, %5, %cst {dimension_numbers = #tpu.dot_dimension_numbers<[1], [0], [0], [1], [0, 0, 1, 1], [], []>} : vector<16x128xbf16>, vector<128x128xbf16>, vector<16x128xf32> -> vector<16x128xf32>
    %7 = arith.addf %3, %6 : vector<16x128xf32>
    %c0_6 = arith.constant 0 : index
    %c0_7 = arith.constant 0 : index
    %8 = vector.load %arg9[%c0_6, %c0_7] : memref<16x128xf32, #tpu.memory_space<vmem>>, vector<16x128xf32>
    tpu.vector_store %arg9[%c0_6, %c0_7], %7 {strides = array<i32>} : memref<16x128xf32, #tpu.memory_space<vmem>>, vector<16x128xf32>,
    %c0_i32_8 = arith.constant 0 : i32
    %9 = arith.cmpi eq, %arg1, %c0_i32_8 : i32
    %10 = arith.extui %9 : i1 to i32
    %c0_i32_9 = arith.constant 0 : i32
    %11 = arith.cmpi ne, %10, %c0_i32_9 : i32
    scf.if %11 {
      %c0_10 = arith.constant 0 : index
      %c0_11 = arith.constant 0 : index
      %12 = vector.load %arg9[%c0_10, %c0_11] : memref<16x128xf32, #tpu.memory_space<vmem>>, vector<16x128xf32>
      %c0_12 = arith.constant 0 : index
      %c0_13 = arith.constant 0 : index
      %13 = vector.load %arg4[%c0_12, %c0_13] : memref<1x128xf32, #tpu.memory_space<vmem>>, vector<1x128xf32>
      %14 = vector.broadcast %13 : vector<1x128xf32> to vector<16x128xf32>
      %15 = arith.addf %12, %14 : vector<16x128xf32>
      %c0_14 = arith.constant 0 : index
      %c0_15 = arith.constant 0 : index
      %16 = vector.load %arg5[%c0_14, %c0_15] : memref<16x128xbf16, #tpu.memory_space<vmem>>, vector<16x128xbf16>
      %17 = arith.extf %16 : vector<16x128xbf16> to vector<16x128xf32>
      %18 = arith.addf %15, %17 : vector<16x128xf32>
      %cst_16 = arith.constant dense<0.000000e+00> : vector<16xf32>
      %19 = vector.multi_reduction <add>, %18, %cst_16 [1] : vector<16x128xf32> to vector<16xf32>
      %20 = vector.shape_cast %19 : vector<16xf32> to vector<16x1xf32>
      %cst_17 = arith.constant 1.280000e+02 : f32
      %21 = vector.broadcast %cst_17 : f32 to vector<16x1xf32>
      %22 = arith.divf %20, %21 : vector<16x1xf32>
      %23 = vector.broadcast %22 : vector<16x1xf32> to vector<16x128xf32>
      %24 = arith.subf %18, %23 : vector<16x128xf32>
      %25 = arith.mulf %24, %24 : vector<16x128xf32>
      %cst_18 = arith.constant dense<0.000000e+00> : vector<16xf32>
      %26 = vector.multi_reduction <add>, %25, %cst_18 [1] : vector<16x128xf32> to vector<16xf32>
      %27 = vector.shape_cast %26 : vector<16xf32> to vector<16x1xf32>
      %cst_19 = arith.constant 1.280000e+02 : f32
      %28 = vector.broadcast %cst_19 : f32 to vector<16x1xf32>
      %29 = arith.divf %27, %28 : vector<16x1xf32>
      %cst_20 = arith.constant 9.99999974E-6 : f32
      %30 = vector.broadcast %cst_20 : f32 to vector<16x1xf32>
      %31 = arith.addf %29, %30 : vector<16x1xf32>
      %32 = math.rsqrt %31 : vector<16x1xf32>
      %33 = vector.broadcast %32 : vector<16x1xf32> to vector<16x128xf32>
      %34 = arith.mulf %24, %33 : vector<16x128xf32>
      %c0_21 = arith.constant 0 : index
      %c0_22 = arith.constant 0 : index
      %35 = vector.load %arg6[%c0_21, %c0_22] : memref<1x128xf32, #tpu.memory_space<vmem>>, vector<1x128xf32>
      %36 = vector.broadcast %35 : vector<1x128xf32> to vector<16x128xf32>
      %37 = arith.mulf %34, %36 : vector<16x128xf32>
      %c0_23 = arith.constant 0 : index
      %c0_24 = arith.constant 0 : index
      %38 = vector.load %arg7[%c0_23, %c0_24] : memref<1x128xf32, #tpu.memory_space<vmem>>, vector<1x128xf32>
      %39 = vector.broadcast %38 : vector<1x128xf32> to vector<16x128xf32>
      %40 = arith.addf %37, %39 : vector<16x128xf32>
      %41 = arith.truncf %40 : vector<16x128xf32> to vector<16x128xbf16>
      %c0_25 = arith.constant 0 : index
      %c0_26 = arith.constant 0 : index
      %42 = vector.load %arg8[%c0_25, %c0_26] : memref<16x128xbf16, #tpu.memory_space<vmem>>, vector<16x128xbf16>
      tpu.vector_store %arg8[%c0_25, %c0_26], %41 {strides = array<i32>} : memref<16x128xbf16, #tpu.memory_space<vmem>>, vector<16x128xbf16>,
    } else {
    }
    return
  }
  func.func @transform_0(%arg0: i32, %arg1: i32) -> (i32, i32) {
    %c0_i32 = arith.constant 0 : i32
    return %arg0, %arg1 : i32, i32
  }
  func.func @transform_1(%arg0: i32, %arg1: i32) -> (i32, i32) {
    %c0_i32 = arith.constant 0 : i32
    %c0_i32_0 = arith.constant 0 : i32
    return %arg1, %c0_i32 : i32, i32
  }
  func.func @transform_2(%arg0: i32, %arg1: i32) -> (i32, i32) {
    %c0_i32 = arith.constant 0 : i32
    %c0_i32_0 = arith.constant 0 : i32
    %c0_i32_1 = arith.constant 0 : i32
    return %c0_i32, %c0_i32_0 : i32, i32
  }
  func.func @transform_3(%arg0: i32, %arg1: i32) -> (i32, i32) {
    %c0_i32 = arith.constant 0 : i32
    %c0_i32_0 = arith.constant 0 : i32
    return %arg0, %c0_i32 : i32, i32
  }
  func.func @transform_4(%arg0: i32, %arg1: i32) -> (i32, i32) {
    %c0_i32 = arith.constant 0 : i32
    %c0_i32_0 = arith.constant 0 : i32
    %c0_i32_1 = arith.constant 0 : i32
    return %c0_i32, %c0_i32_0 : i32, i32
  }
  func.func @transform_5(%arg0: i32, %arg1: i32) -> (i32, i32) {
    %c0_i32 = arith.constant 0 : i32
    %c0_i32_0 = arith.constant 0 : i32
    %c0_i32_1 = arith.constant 0 : i32
    return %c0_i32, %c0_i32_0 : i32, i32
  }
  func.func @transform_6(%arg0: i32, %arg1: i32) -> (i32, i32) {
    %c0_i32 = arith.constant 0 : i32
    %c0_i32_0 = arith.constant 0 : i32
    return %arg0, %c0_i32 : i32, i32
  }
}

module attributes {stable_mosaic.version = 11 : i64} {
  func.func @_matmul_kernel(%arg0: i32, %arg1: i32, %arg2: i32, %arg3: memref<16x128xbf16, #tpu.memory_space<vmem>>, %arg4: memref<128x256xbf16, #tpu.memory_space<vmem>>, %arg5: memref<1x256xf32, #tpu.memory_space<vmem>>, %arg6: memref<16x256xbf16, #tpu.memory_space<vmem>>, %arg7: memref<16x256xf32, #tpu.memory_space<vmem>>) attributes {dimension_semantics = [#tpu.dimension_semantics<parallel>, #tpu.dimension_semantics<parallel>, #tpu.dimension_semantics<arbitrary>], iteration_bounds = array<i64: 1, 2, 1>, scalar_prefetch = 0 : i64, scratch_operands = 1 : i64, tpu.core_type = #tpu.core_type<tc>, window_params = [{transform_indices = @transform_0, window_bounds = array<i64: 16, 128>}, {transform_indices = @transform_1, window_bounds = array<i64: 128, 256>}, {transform_indices = @transform_2, window_bounds = array<i64: 1, 256>}, {transform_indices = @transform_3, window_bounds = array<i64: 16, 256>}]} {
    %c0_i32 = arith.constant 0 : i32
    %0 = arith.cmpi eq, %arg2, %c0_i32 : i32
    %1 = arith.extui %0 : i1 to i32
    %c0_i32_0 = arith.constant 0 : i32
    %2 = arith.cmpi ne, %1, %c0_i32_0 : i32
    scf.if %2 {
      %cst_10 = arith.constant 0.000000e+00 : f32
      %12 = vector.broadcast %cst_10 : f32 to vector<16x256xf32>
      %c0_11 = arith.constant 0 : index
      %c0_12 = arith.constant 0 : index
      %13 = vector.load %arg7[%c0_11, %c0_12] : memref<16x256xf32, #tpu.memory_space<vmem>>, vector<16x256xf32>
      tpu.vector_store %arg7[%c0_11, %c0_12], %12 {strides = array<i32>} : memref<16x256xf32, #tpu.memory_space<vmem>>, vector<16x256xf32>,
    } else {
    }
    %c0 = arith.constant 0 : index
    %c0_1 = arith.constant 0 : index
    %3 = vector.load %arg7[%c0, %c0_1] : memref<16x256xf32, #tpu.memory_space<vmem>>, vector<16x256xf32>
    %c0_2 = arith.constant 0 : index
    %c0_3 = arith.constant 0 : index
    %4 = vector.load %arg3[%c0_2, %c0_3] : memref<16x128xbf16, #tpu.memory_space<vmem>>, vector<16x128xbf16>
    %c0_4 = arith.constant 0 : index
    %c0_5 = arith.constant 0 : index
    %5 = vector.load %arg4[%c0_4, %c0_5] : memref<128x256xbf16, #tpu.memory_space<vmem>>, vector<128x256xbf16>
    %cst = arith.constant dense<0.000000e+00> : vector<16x256xf32>
    %6 = tpu.matmul %4, %5, %cst {dimension_numbers = #tpu.dot_dimension_numbers<[1], [0], [0], [1], [0, 0, 1, 1], [], []>} : vector<16x128xbf16>, vector<128x256xbf16>, vector<16x256xf32> -> vector<16x256xf32>
    %7 = arith.addf %3, %6 : vector<16x256xf32>
    %c0_6 = arith.constant 0 : index
    %c0_7 = arith.constant 0 : index
    %8 = vector.load %arg7[%c0_6, %c0_7] : memref<16x256xf32, #tpu.memory_space<vmem>>, vector<16x256xf32>
    tpu.vector_store %arg7[%c0_6, %c0_7], %7 {strides = array<i32>} : memref<16x256xf32, #tpu.memory_space<vmem>>, vector<16x256xf32>,
    %c0_i32_8 = arith.constant 0 : i32
    %9 = arith.cmpi eq, %arg2, %c0_i32_8 : i32
    %10 = arith.extui %9 : i1 to i32
    %c0_i32_9 = arith.constant 0 : i32
    %11 = arith.cmpi ne, %10, %c0_i32_9 : i32
    scf.if %11 {
      %c0_10 = arith.constant 0 : index
      %c0_11 = arith.constant 0 : index
      %12 = vector.load %arg7[%c0_10, %c0_11] : memref<16x256xf32, #tpu.memory_space<vmem>>, vector<16x256xf32>
      %c0_12 = arith.constant 0 : index
      %c0_13 = arith.constant 0 : index
      %13 = vector.load %arg5[%c0_12, %c0_13] : memref<1x256xf32, #tpu.memory_space<vmem>>, vector<1x256xf32>
      %14 = vector.broadcast %13 : vector<1x256xf32> to vector<16x256xf32>
      %15 = arith.addf %12, %14 : vector<16x256xf32>
      %16 = arith.truncf %15 : vector<16x256xf32> to vector<16x256xbf16>
      %c0_14 = arith.constant 0 : index
      %c0_15 = arith.constant 0 : index
      %17 = vector.load %arg6[%c0_14, %c0_15] : memref<16x256xbf16, #tpu.memory_space<vmem>>, vector<16x256xbf16>
      tpu.vector_store %arg6[%c0_14, %c0_15], %16 {strides = array<i32>} : memref<16x256xbf16, #tpu.memory_space<vmem>>, vector<16x256xbf16>,
    } else {
    }
    return
  }
  func.func @transform_0(%arg0: i32, %arg1: i32, %arg2: i32) -> (i32, i32) {
    %c0_i32 = arith.constant 0 : i32
    return %arg0, %arg2 : i32, i32
  }
  func.func @transform_1(%arg0: i32, %arg1: i32, %arg2: i32) -> (i32, i32) {
    %c0_i32 = arith.constant 0 : i32
    return %arg2, %arg1 : i32, i32
  }
  func.func @transform_2(%arg0: i32, %arg1: i32, %arg2: i32) -> (i32, i32) {
    %c0_i32 = arith.constant 0 : i32
    %c0_i32_0 = arith.constant 0 : i32
    return %c0_i32, %arg1 : i32, i32
  }
  func.func @transform_3(%arg0: i32, %arg1: i32, %arg2: i32) -> (i32, i32) {
    %c0_i32 = arith.constant 0 : i32
    return %arg0, %arg1 : i32, i32
  }
}

module attributes {stable_mosaic.version = 11 : i64} {
  func.func @_attention_kernel(%arg0: i32, %arg1: i32, %arg2: memref<1x8x128xbf16, #tpu.memory_space<vmem>>, %arg3: memref<1x8x128xbf16, #tpu.memory_space<vmem>>, %arg4: memref<1x8x128xbf16, #tpu.memory_space<vmem>>, %arg5: memref<1x8x128xbf16, #tpu.memory_space<vmem>>) attributes {dimension_semantics = [#tpu.dimension_semantics<parallel>, #tpu.dimension_semantics<parallel>], iteration_bounds = array<i64: 2, 1>, scalar_prefetch = 0 : i64, scratch_operands = 0 : i64, tpu.core_type = #tpu.core_type<tc>, window_params = [{transform_indices = @transform_0, window_bounds = array<i64: 1, 8, 128>}, {transform_indices = @transform_1, window_bounds = array<i64: 1, 8, 128>}, {transform_indices = @transform_2, window_bounds = array<i64: 1, 8, 128>}, {transform_indices = @transform_3, window_bounds = array<i64: 1, 8, 128>}]} {
    %c0 = arith.constant 0 : index
    %c0_0 = arith.constant 0 : index
    %c0_1 = arith.constant 0 : index
    %0 = vector.load %arg2[%c0, %c0_0, %c0_1] : memref<1x8x128xbf16, #tpu.memory_space<vmem>>, vector<1x8x128xbf16>
    %1 = vector.shape_cast %0 : vector<1x8x128xbf16> to vector<8x128xbf16>
    %2 = arith.extf %1 : vector<8x128xbf16> to vector<8x128xf32>
    %cst = arith.constant 0.176776692 : f32
    %3 = vector.broadcast %cst : f32 to vector<8x128xf32>
    %4 = arith.mulf %2, %3 : vector<8x128xf32>
    %5 = arith.truncf %4 : vector<8x128xf32> to vector<8x128xbf16>
    %c0_2 = arith.constant 0 : index
    %c0_3 = arith.constant 0 : index
    %c0_4 = arith.constant 0 : index
    %6 = vector.load %arg3[%c0_2, %c0_3, %c0_4] : memref<1x8x128xbf16, #tpu.memory_space<vmem>>, vector<1x8x128xbf16>
    %7 = vector.shape_cast %6 : vector<1x8x128xbf16> to vector<8x128xbf16>
    %c0_5 = arith.constant 0 : index
    %c0_6 = arith.constant 0 : index
    %c0_7 = arith.constant 0 : index
    %8 = vector.load %arg4[%c0_5, %c0_6, %c0_7] : memref<1x8x128xbf16, #tpu.memory_space<vmem>>, vector<1x8x128xbf16>
    %9 = vector.shape_cast %8 : vector<1x8x128xbf16> to vector<8x128xbf16>
    %c8_i32 = arith.constant 8 : i32
    %10 = arith.muli %arg1, %c8_i32 : i32
    %11 = tpu.iota {dimensions = array<i32: 0>} : vector<8x8xi32>
    %12 = vector.broadcast %10 : i32 to vector<8x8xi32>
    %13 = arith.addi %11, %12 : vector<8x8xi32>
    %14 = tpu.iota {dimensions = array<i32: 1>} : vector<8x8xi32>
    %15 = arith.cmpi sle, %14, %13 : vector<8x8xi32>
    %16 = vector.extract_strided_slice %5 {offsets = [0, 0], sizes = [8, 32], strides = [1, 1]} : vector<8x128xbf16> to vector<8x32xbf16>
    %17 = vector.extract_strided_slice %7 {offsets = [0, 0], sizes = [8, 32], strides = [1, 1]} : vector<8x128xbf16> to vector<8x32xbf16>
    %18 = vector.extract_strided_slice %9 {offsets = [0, 0], sizes = [8, 32], strides = [1, 1]} : vector<8x128xbf16> to vector<8x32xbf16>
    %cst_8 = arith.constant dense<0.000000e+00> : vector<8x8xf32>
    %19 = tpu.matmul %16, %17, %cst_8 {dimension_numbers = #tpu.dot_dimension_numbers<[1], [1], [0], [0], [0, 0, 1, 0], [], []>} : vector<8x32xbf16>, vector<8x32xbf16>, vector<8x8xf32> -> vector<8x8xf32>
    %cst_9 = arith.constant -1.000000e+30 : f32
    %20 = vector.broadcast %cst_9 : f32 to vector<8x8xf32>
    %21 = arith.select %15, %19, %20 : vector<8x8xi1>, vector<8x8xf32>
    %cst_10 = arith.constant dense<0xFF800000> : vector<8xf32>
    %22 = vector.multi_reduction <maximumf>, %21, %cst_10 [1] : vector<8x8xf32> to vector<8xf32>
    %23 = vector.shape_cast %22 : vector<8xf32> to vector<8x1xf32>
    %24 = vector.broadcast %23 : vector<8x1xf32> to vector<8x8xf32>
    %25 = arith.subf %21, %24 : vector<8x8xf32>
    %26 = math.exp %25 : vector<8x8xf32>
    %cst_11 = arith.constant dense<0.000000e+00> : vector<8xf32>
    %27 = vector.multi_reduction <add>, %26, %cst_11 [1] : vector<8x8xf32> to vector<8xf32>
    %28 = vector.shape_cast %27 : vector<8xf32> to vector<8x1xf32>
    %29 = tpu.reciprocal %28 {approx = true} : vector<8x1xf32> -> vector<8x1xf32>
    %30 = vector.broadcast %29 : vector<8x1xf32> to vector<8x8xf32>
    %31 = arith.mulf %26, %30 : vector<8x8xf32>
    %32 = arith.truncf %31 : vector<8x8xf32> to vector<8x8xbf16>
    %cst_12 = arith.constant dense<0.000000e+00> : vector<8x32xf32>
    %33 = tpu.matmul %32, %18, %cst_12 {dimension_numbers = #tpu.dot_dimension_numbers<[1], [0], [0], [1], [0, 0, 1, 1], [], []>} : vector<8x8xbf16>, vector<8x32xbf16>, vector<8x32xf32> -> vector<8x32xf32>
    %34 = vector.extract_strided_slice %5 {offsets = [0, 32], sizes = [8, 32], strides = [1, 1]} : vector<8x128xbf16> to vector<8x32xbf16>
    %35 = vector.extract_strided_slice %7 {offsets = [0, 32], sizes = [8, 32], strides = [1, 1]} : vector<8x128xbf16> to vector<8x32xbf16>
    %36 = vector.extract_strided_slice %9 {offsets = [0, 32], sizes = [8, 32], strides = [1, 1]} : vector<8x128xbf16> to vector<8x32xbf16>
    %cst_13 = arith.constant dense<0.000000e+00> : vector<8x8xf32>
    %37 = tpu.matmul %34, %35, %cst_13 {dimension_numbers = #tpu.dot_dimension_numbers<[1], [1], [0], [0], [0, 0, 1, 0], [], []>} : vector<8x32xbf16>, vector<8x32xbf16>, vector<8x8xf32> -> vector<8x8xf32>
    %cst_14 = arith.constant -1.000000e+30 : f32
    %38 = vector.broadcast %cst_14 : f32 to vector<8x8xf32>
    %39 = arith.select %15, %37, %38 : vector<8x8xi1>, vector<8x8xf32>
    %cst_15 = arith.constant dense<0xFF800000> : vector<8xf32>
    %40 = vector.multi_reduction <maximumf>, %39, %cst_15 [1] : vector<8x8xf32> to vector<8xf32>
    %41 = vector.shape_cast %40 : vector<8xf32> to vector<8x1xf32>
    %42 = vector.broadcast %41 : vector<8x1xf32> to vector<8x8xf32>
    %43 = arith.subf %39, %42 : vector<8x8xf32>
    %44 = math.exp %43 : vector<8x8xf32>
    %cst_16 = arith.constant dense<0.000000e+00> : vector<8xf32>
    %45 = vector.multi_reduction <add>, %44, %cst_16 [1] : vector<8x8xf32> to vector<8xf32>
    %46 = vector.shape_cast %45 : vector<8xf32> to vector<8x1xf32>
    %47 = tpu.reciprocal %46 {approx = true} : vector<8x1xf32> -> vector<8x1xf32>
    %48 = vector.broadcast %47 : vector<8x1xf32> to vector<8x8xf32>
    %49 = arith.mulf %44, %48 : vector<8x8xf32>
    %50 = arith.truncf %49 : vector<8x8xf32> to vector<8x8xbf16>
    %cst_17 = arith.constant dense<0.000000e+00> : vector<8x32xf32>
    %51 = tpu.matmul %50, %36, %cst_17 {dimension_numbers = #tpu.dot_dimension_numbers<[1], [0], [0], [1], [0, 0, 1, 1], [], []>} : vector<8x8xbf16>, vector<8x32xbf16>, vector<8x32xf32> -> vector<8x32xf32>
    %52 = vector.extract_strided_slice %5 {offsets = [0, 64], sizes = [8, 32], strides = [1, 1]} : vector<8x128xbf16> to vector<8x32xbf16>
    %53 = vector.extract_strided_slice %7 {offsets = [0, 64], sizes = [8, 32], strides = [1, 1]} : vector<8x128xbf16> to vector<8x32xbf16>
    %54 = vector.extract_strided_slice %9 {offsets = [0, 64], sizes = [8, 32], strides = [1, 1]} : vector<8x128xbf16> to vector<8x32xbf16>
    %cst_18 = arith.constant dense<0.000000e+00> : vector<8x8xf32>
    %55 = tpu.matmul %52, %53, %cst_18 {dimension_numbers = #tpu.dot_dimension_numbers<[1], [1], [0], [0], [0, 0, 1, 0], [], []>} : vector<8x32xbf16>, vector<8x32xbf16>, vector<8x8xf32> -> vector<8x8xf32>
    %cst_19 = arith.constant -1.000000e+30 : f32
    %56 = vector.broadcast %cst_19 : f32 to vector<8x8xf32>
    %57 = arith.select %15, %55, %56 : vector<8x8xi1>, vector<8x8xf32>
    %cst_20 = arith.constant dense<0xFF800000> : vector<8xf32>
    %58 = vector.multi_reduction <maximumf>, %57, %cst_20 [1] : vector<8x8xf32> to vector<8xf32>
    %59 = vector.shape_cast %58 : vector<8xf32> to vector<8x1xf32>
    %60 = vector.broadcast %59 : vector<8x1xf32> to vector<8x8xf32>
    %61 = arith.subf %57, %60 : vector<8x8xf32>
    %62 = math.exp %61 : vector<8x8xf32>
    %cst_21 = arith.constant dense<0.000000e+00> : vector<8xf32>
    %63 = vector.multi_reduction <add>, %62, %cst_21 [1] : vector<8x8xf32> to vector<8xf32>
    %64 = vector.shape_cast %63 : vector<8xf32> to vector<8x1xf32>
    %65 = tpu.reciprocal %64 {approx = true} : vector<8x1xf32> -> vector<8x1xf32>
    %66 = vector.broadcast %65 : vector<8x1xf32> to vector<8x8xf32>
    %67 = arith.mulf %62, %66 : vector<8x8xf32>
    %68 = arith.truncf %67 : vector<8x8xf32> to vector<8x8xbf16>
    %cst_22 = arith.constant dense<0.000000e+00> : vector<8x32xf32>
    %69 = tpu.matmul %68, %54, %cst_22 {dimension_numbers = #tpu.dot_dimension_numbers<[1], [0], [0], [1], [0, 0, 1, 1], [], []>} : vector<8x8xbf16>, vector<8x32xbf16>, vector<8x32xf32> -> vector<8x32xf32>
    %70 = vector.extract_strided_slice %5 {offsets = [0, 96], sizes = [8, 32], strides = [1, 1]} : vector<8x128xbf16> to vector<8x32xbf16>
    %71 = vector.extract_strided_slice %7 {offsets = [0, 96], sizes = [8, 32], strides = [1, 1]} : vector<8x128xbf16> to vector<8x32xbf16>
    %72 = vector.extract_strided_slice %9 {offsets = [0, 96], sizes = [8, 32], strides = [1, 1]} : vector<8x128xbf16> to vector<8x32xbf16>
    %cst_23 = arith.constant dense<0.000000e+00> : vector<8x8xf32>
    %73 = tpu.matmul %70, %71, %cst_23 {dimension_numbers = #tpu.dot_dimension_numbers<[1], [1], [0], [0], [0, 0, 1, 0], [], []>} : vector<8x32xbf16>, vector<8x32xbf16>, vector<8x8xf32> -> vector<8x8xf32>
    %cst_24 = arith.constant -1.000000e+30 : f32
    %74 = vector.broadcast %cst_24 : f32 to vector<8x8xf32>
    %75 = arith.select %15, %73, %74 : vector<8x8xi1>, vector<8x8xf32>
    %cst_25 = arith.constant dense<0xFF800000> : vector<8xf32>
    %76 = vector.multi_reduction <maximumf>, %75, %cst_25 [1] : vector<8x8xf32> to vector<8xf32>
    %77 = vector.shape_cast %76 : vector<8xf32> to vector<8x1xf32>
    %78 = vector.broadcast %77 : vector<8x1xf32> to vector<8x8xf32>
    %79 = arith.subf %75, %78 : vector<8x8xf32>
    %80 = math.exp %79 : vector<8x8xf32>
    %cst_26 = arith.constant dense<0.000000e+00> : vector<8xf32>
    %81 = vector.multi_reduction <add>, %80, %cst_26 [1] : vector<8x8xf32> to vector<8xf32>
    %82 = vector.shape_cast %81 : vector<8xf32> to vector<8x1xf32>
    %83 = tpu.reciprocal %82 {approx = true} : vector<8x1xf32> -> vector<8x1xf32>
    %84 = vector.broadcast %83 : vector<8x1xf32> to vector<8x8xf32>
    %85 = arith.mulf %80, %84 : vector<8x8xf32>
    %86 = arith.truncf %85 : vector<8x8xf32> to vector<8x8xbf16>
    %cst_27 = arith.constant dense<0.000000e+00> : vector<8x32xf32>
    %87 = tpu.matmul %86, %72, %cst_27 {dimension_numbers = #tpu.dot_dimension_numbers<[1], [0], [0], [1], [0, 0, 1, 1], [], []>} : vector<8x8xbf16>, vector<8x32xbf16>, vector<8x32xf32> -> vector<8x32xf32>
    %88 = tpu.concatenate %33, %51, %69, %87 in 1 : vector<8x32xf32>, vector<8x32xf32>, vector<8x32xf32>, vector<8x32xf32> -> vector<8x128xf32>
    %89 = arith.truncf %88 : vector<8x128xf32> to vector<8x128xbf16>
    %c0_28 = arith.constant 0 : index
    %c0_29 = arith.constant 0 : index
    %c0_30 = arith.constant 0 : index
    %90 = vector.load %arg5[%c0_28, %c0_29, %c0_30] : memref<1x8x128xbf16, #tpu.memory_space<vmem>>, vector<1x8x128xbf16>
    %91 = vector.shape_cast %90 : vector<1x8x128xbf16> to vector<8x128xbf16>
    %92 = vector.shape_cast %89 : vector<8x128xbf16> to vector<1x8x128xbf16>
    tpu.vector_store %arg5[%c0_28, %c0_29, %c0_30], %92 {strides = array<i32>} : memref<1x8x128xbf16, #tpu.memory_space<vmem>>, vector<1x8x128xbf16>,
    return
  }
  func.func @transform_0(%arg0: i32, %arg1: i32) -> (i32, i32, i32) {
    %c0_i32 = arith.constant 0 : i32
    %c0_i32_0 = arith.constant 0 : i32
    return %arg0, %arg1, %c0_i32 : i32, i32, i32
  }
  func.func @transform_1(%arg0: i32, %arg1: i32) -> (i32, i32, i32) {
    %c0_i32 = arith.constant 0 : i32
    %c1_i32 = arith.constant 1 : i32
    %c0_i32_0 = arith.constant 0 : i32
    return %arg0, %c0_i32, %c1_i32 : i32, i32, i32
  }
  func.func @transform_2(%arg0: i32, %arg1: i32) -> (i32, i32, i32) {
    %c0_i32 = arith.constant 0 : i32
    %c2_i32 = arith.constant 2 : i32
    %c0_i32_0 = arith.constant 0 : i32
    return %arg0, %c0_i32, %c2_i32 : i32, i32, i32
  }
  func.func @transform_3(%arg0: i32, %arg1: i32) -> (i32, i32, i32) {
    %c0_i32 = arith.constant 0 : i32
    %c0_i32_0 = arith.constant 0 : i32
    return %arg0, %arg1, %c0_i32 : i32, i32, i32
  }
}

module attributes {stable_mosaic.version = 11 : i64} {
  func.func @_matmul_kernel(%arg0: i32, %arg1: i32, %arg2: i32, %arg3: memref<16x128xbf16, #tpu.memory_space<vmem>>, %arg4: memref<128x256xbf16, #tpu.memory_space<vmem>>, %arg5: memref<1x256xf32, #tpu.memory_space<vmem>>, %arg6: memref<16x256xbf16, #tpu.memory_space<vmem>>, %arg7: memref<16x256xf32, #tpu.memory_space<vmem>>) attributes {dimension_semantics = [#tpu.dimension_semantics<parallel>, #tpu.dimension_semantics<parallel>, #tpu.dimension_semantics<arbitrary>], iteration_bounds = array<i64: 1, 1, 1>, scalar_prefetch = 0 : i64, scratch_operands = 1 : i64, tpu.core_type = #tpu.core_type<tc>, window_params = [{transform_indices = @transform_0, window_bounds = array<i64: 16, 128>}, {transform_indices = @transform_1, window_bounds = array<i64: 128, 256>}, {transform_indices = @transform_2, window_bounds = array<i64: 1, 256>}, {transform_indices = @transform_3, window_bounds = array<i64: 16, 256>}]} {
    %c0_i32 = arith.constant 0 : i32
    %0 = arith.cmpi eq, %arg2, %c0_i32 : i32
    %1 = arith.extui %0 : i1 to i32
    %c0_i32_0 = arith.constant 0 : i32
    %2 = arith.cmpi ne, %1, %c0_i32_0 : i32
    scf.if %2 {
      %cst_10 = arith.constant 0.000000e+00 : f32
      %12 = vector.broadcast %cst_10 : f32 to vector<16x256xf32>
      %c0_11 = arith.constant 0 : index
      %c0_12 = arith.constant 0 : index
      %13 = vector.load %arg7[%c0_11, %c0_12] : memref<16x256xf32, #tpu.memory_space<vmem>>, vector<16x256xf32>
      tpu.vector_store %arg7[%c0_11, %c0_12], %12 {strides = array<i32>} : memref<16x256xf32, #tpu.memory_space<vmem>>, vector<16x256xf32>,
    } else {
    }
    %c0 = arith.constant 0 : index
    %c0_1 = arith.constant 0 : index
    %3 = vector.load %arg7[%c0, %c0_1] : memref<16x256xf32, #tpu.memory_space<vmem>>, vector<16x256xf32>
    %c0_2 = arith.constant 0 : index
    %c0_3 = arith.constant 0 : index
    %4 = vector.load %arg3[%c0_2, %c0_3] : memref<16x128xbf16, #tpu.memory_space<vmem>>, vector<16x128xbf16>
    %c0_4 = arith.constant 0 : index
    %c0_5 = arith.constant 0 : index
    %5 = vector.load %arg4[%c0_4, %c0_5] : memref<128x256xbf16, #tpu.memory_space<vmem>>, vector<128x256xbf16>
    %cst = arith.constant dense<0.000000e+00> : vector<16x256xf32>
    %6 = tpu.matmul %4, %5, %cst {dimension_numbers = #tpu.dot_dimension_numbers<[1], [0], [0], [1], [0, 0, 1, 1], [], []>} : vector<16x128xbf16>, vector<128x256xbf16>, vector<16x256xf32> -> vector<16x256xf32>
    %7 = arith.addf %3, %6 : vector<16x256xf32>
    %c0_6 = arith.constant 0 : index
    %c0_7 = arith.constant 0 : index
    %8 = vector.load %arg7[%c0_6, %c0_7] : memref<16x256xf32, #tpu.memory_space<vmem>>, vector<16x256xf32>
    tpu.vector_store %arg7[%c0_6, %c0_7], %7 {strides = array<i32>} : memref<16x256xf32, #tpu.memory_space<vmem>>, vector<16x256xf32>,
    %c0_i32_8 = arith.constant 0 : i32
    %9 = arith.cmpi eq, %arg2, %c0_i32_8 : i32
    %10 = arith.extui %9 : i1 to i32
    %c0_i32_9 = arith.constant 0 : i32
    %11 = arith.cmpi ne, %10, %c0_i32_9 : i32
    scf.if %11 {
      %c0_10 = arith.constant 0 : index
      %c0_11 = arith.constant 0 : index
      %12 = vector.load %arg7[%c0_10, %c0_11] : memref<16x256xf32, #tpu.memory_space<vmem>>, vector<16x256xf32>
      %c0_12 = arith.constant 0 : index
      %c0_13 = arith.constant 0 : index
      %13 = vector.load %arg5[%c0_12, %c0_13] : memref<1x256xf32, #tpu.memory_space<vmem>>, vector<1x256xf32>
      %14 = vector.broadcast %13 : vector<1x256xf32> to vector<16x256xf32>
      %15 = arith.addf %12, %14 : vector<16x256xf32>
      %16 = arith.truncf %15 : vector<16x256xf32> to vector<16x256xbf16>
      %c0_14 = arith.constant 0 : index
      %c0_15 = arith.constant 0 : index
      %17 = vector.load %arg6[%c0_14, %c0_15] : memref<16x256xbf16, #tpu.memory_space<vmem>>, vector<16x256xbf16>
      tpu.vector_store %arg6[%c0_14, %c0_15], %16 {strides = array<i32>} : memref<16x256xbf16, #tpu.memory_space<vmem>>, vector<16x256xbf16>,
    } else {
    }
    return
  }
  func.func @transform_0(%arg0: i32, %arg1: i32, %arg2: i32) -> (i32, i32) {
    %c0_i32 = arith.constant 0 : i32
    return %arg0, %arg2 : i32, i32
  }
  func.func @transform_1(%arg0: i32, %arg1: i32, %arg2: i32) -> (i32, i32) {
    %c0_i32 = arith.constant 0 : i32
    return %arg2, %arg1 : i32, i32
  }
  func.func @transform_2(%arg0: i32, %arg1: i32, %arg2: i32) -> (i32, i32) {
    %c0_i32 = arith.constant 0 : i32
    %c0_i32_0 = arith.constant 0 : i32
    return %c0_i32, %arg1 : i32, i32
  }
  func.func @transform_3(%arg0: i32, %arg1: i32, %arg2: i32) -> (i32, i32) {
    %c0_i32 = arith.constant 0 : i32
    return %arg0, %arg1 : i32, i32
  }
}

module attributes {stable_mosaic.version = 11 : i64} {
  func.func @_matmul_kernel(%arg0: i32, %arg1: i32, %arg2: i32, %arg3: memref<16x128xbf16, #tpu.memory_space<vmem>>, %arg4: memref<128x256xbf16, #tpu.memory_space<vmem>>, %arg5: memref<1x256xf32, #tpu.memory_space<vmem>>, %arg6: memref<16x256xbf16, #tpu.memory_space<vmem>>, %arg7: memref<16x256xf32, #tpu.memory_space<vmem>>) attributes {dimension_semantics = [#tpu.dimension_semantics<parallel>, #tpu.dimension_semantics<parallel>, #tpu.dimension_semantics<arbitrary>], iteration_bounds = array<i64: 1, 1, 1>, scalar_prefetch = 0 : i64, scratch_operands = 1 : i64, tpu.core_type = #tpu.core_type<tc>, window_params = [{transform_indices = @transform_0, window_bounds = array<i64: 16, 128>}, {transform_indices = @transform_1, window_bounds = array<i64: 128, 256>}, {transform_indices = @transform_2, window_bounds = array<i64: 1, 256>}, {transform_indices = @transform_3, window_bounds = array<i64: 16, 256>}]} {
    %c0_i32 = arith.constant 0 : i32
    %0 = arith.cmpi eq, %arg2, %c0_i32 : i32
    %1 = arith.extui %0 : i1 to i32
    %c0_i32_0 = arith.constant 0 : i32
    %2 = arith.cmpi ne, %1, %c0_i32_0 : i32
    scf.if %2 {
      %cst_10 = arith.constant 0.000000e+00 : f32
      %12 = vector.broadcast %cst_10 : f32 to vector<16x256xf32>
      %c0_11 = arith.constant 0 : index
      %c0_12 = arith.constant 0 : index
      %13 = vector.load %arg7[%c0_11, %c0_12] : memref<16x256xf32, #tpu.memory_space<vmem>>, vector<16x256xf32>
      tpu.vector_store %arg7[%c0_11, %c0_12], %12 {strides = array<i32>} : memref<16x256xf32, #tpu.memory_space<vmem>>, vector<16x256xf32>,
    } else {
    }
    %c0 = arith.constant 0 : index
    %c0_1 = arith.constant 0 : index
    %3 = vector.load %arg7[%c0, %c0_1] : memref<16x256xf32, #tpu.memory_space<vmem>>, vector<16x256xf32>
    %c0_2 = arith.constant 0 : index
    %c0_3 = arith.constant 0 : index
    %4 = vector.load %arg3[%c0_2, %c0_3] : memref<16x128xbf16, #tpu.memory_space<vmem>>, vector<16x128xbf16>
    %c0_4 = arith.constant 0 : index
    %c0_5 = arith.constant 0 : index
    %5 = vector.load %arg4[%c0_4, %c0_5] : memref<128x256xbf16, #tpu.memory_space<vmem>>, vector<128x256xbf16>
    %cst = arith.constant dense<0.000000e+00> : vector<16x256xf32>
    %6 = tpu.matmul %4, %5, %cst {dimension_numbers = #tpu.dot_dimension_numbers<[1], [0], [0], [1], [0, 0, 1, 1], [], []>} : vector<16x128xbf16>, vector<128x256xbf16>, vector<16x256xf32> -> vector<16x256xf32>
    %7 = arith.addf %3, %6 : vector<16x256xf32>
    %c0_6 = arith.constant 0 : index
    %c0_7 = arith.constant 0 : index
    %8 = vector.load %arg7[%c0_6, %c0_7] : memref<16x256xf32, #tpu.memory_space<vmem>>, vector<16x256xf32>
    tpu.vector_store %arg7[%c0_6, %c0_7], %7 {strides = array<i32>} : memref<16x256xf32, #tpu.memory_space<vmem>>, vector<16x256xf32>,
    %c0_i32_8 = arith.constant 0 : i32
    %9 = arith.cmpi eq, %arg2, %c0_i32_8 : i32
    %10 = arith.extui %9 : i1 to i32
    %c0_i32_9 = arith.constant 0 : i32
    %11 = arith.cmpi ne, %10, %c0_i32_9 : i32
    scf.if %11 {
      %c0_10 = arith.constant 0 : index
      %c0_11 = arith.constant 0 : index
      %12 = vector.load %arg7[%c0_10, %c0_11] : memref<16x256xf32, #tpu.memory_space<vmem>>, vector<16x256xf32>
      %c0_12 = arith.constant 0 : index
      %c0_13 = arith.constant 0 : index
      %13 = vector.load %arg5[%c0_12, %c0_13] : memref<1x256xf32, #tpu.memory_space<vmem>>, vector<1x256xf32>
      %14 = vector.broadcast %13 : vector<1x256xf32> to vector<16x256xf32>
      %15 = arith.addf %12, %14 : vector<16x256xf32>
      %cst_14 = arith.constant 0.000000e+00 : f32
      %16 = vector.broadcast %cst_14 : f32 to vector<16x256xf32>
      %17 = arith.maximumf %15, %16 : vector<16x256xf32>
      %18 = arith.truncf %17 : vector<16x256xf32> to vector<16x256xbf16>
      %c0_15 = arith.constant 0 : index
      %c0_16 = arith.constant 0 : index
      %19 = vector.load %arg6[%c0_15, %c0_16] : memref<16x256xbf16, #tpu.memory_space<vmem>>, vector<16x256xbf16>
      tpu.vector_store %arg6[%c0_15, %c0_16], %18 {strides = array<i32>} : memref<16x256xbf16, #tpu.memory_space<vmem>>, vector<16x256xbf16>,
    } else {
    }
    return
  }
  func.func @transform_0(%arg0: i32, %arg1: i32, %arg2: i32) -> (i32, i32) {
    %c0_i32 = arith.constant 0 : i32
    return %arg0, %arg2 : i32, i32
  }
  func.func @transform_1(%arg0: i32, %arg1: i32, %arg2: i32) -> (i32, i32) {
    %c0_i32 = arith.constant 0 : i32
    return %arg2, %arg1 : i32, i32
  }
  func.func @transform_2(%arg0: i32, %arg1: i32, %arg2: i32) -> (i32, i32) {
    %c0_i32 = arith.constant 0 : i32
    %c0_i32_0 = arith.constant 0 : i32
    return %c0_i32, %arg1 : i32, i32
  }
  func.func @transform_3(%arg0: i32, %arg1: i32, %arg2: i32) -> (i32, i32) {
    %c0_i32 = arith.constant 0 : i32
    return %arg0, %arg1 : i32, i32
  }
}

module attributes {stable_mosaic.version = 11 : i64} {
  func.func @_attention_kernel(%arg0: i32, %arg1: i32, %arg2: memref<1x8x128xbf16, #tpu.memory_space<vmem>>, %arg3: memref<1x8x128xbf16, #tpu.memory_space<vmem>>, %arg4: memref<1x8x128xbf16, #tpu.memory_space<vmem>>, %arg5: memref<1x8x128xbf16, #tpu.memory_space<vmem>>) attributes {dimension_semantics = [#tpu.dimension_semantics<parallel>, #tpu.dimension_semantics<parallel>], iteration_bounds = array<i64: 2, 1>, scalar_prefetch = 0 : i64, scratch_operands = 0 : i64, tpu.core_type = #tpu.core_type<tc>, window_params = [{transform_indices = @transform_0, window_bounds = array<i64: 1, 8, 128>}, {transform_indices = @transform_1, window_bounds = array<i64: 1, 8, 128>}, {transform_indices = @transform_2, window_bounds = array<i64: 1, 8, 128>}, {transform_indices = @transform_3, window_bounds = array<i64: 1, 8, 128>}]} {
    %c0 = arith.constant 0 : index
    %c0_0 = arith.constant 0 : index
    %c0_1 = arith.constant 0 : index
    %0 = vector.load %arg2[%c0, %c0_0, %c0_1] : memref<1x8x128xbf16, #tpu.memory_space<vmem>>, vector<1x8x128xbf16>
    %1 = vector.shape_cast %0 : vector<1x8x128xbf16> to vector<8x128xbf16>
    %2 = arith.extf %1 : vector<8x128xbf16> to vector<8x128xf32>
    %cst = arith.constant 0.176776692 : f32
    %3 = vector.broadcast %cst : f32 to vector<8x128xf32>
    %4 = arith.mulf %2, %3 : vector<8x128xf32>
    %5 = arith.truncf %4 : vector<8x128xf32> to vector<8x128xbf16>
    %c0_2 = arith.constant 0 : index
    %c0_3 = arith.constant 0 : index
    %c0_4 = arith.constant 0 : index
    %6 = vector.load %arg3[%c0_2, %c0_3, %c0_4] : memref<1x8x128xbf16, #tpu.memory_space<vmem>>, vector<1x8x128xbf16>
    %7 = vector.shape_cast %6 : vector<1x8x128xbf16> to vector<8x128xbf16>
    %c0_5 = arith.constant 0 : index
    %c0_6 = arith.constant 0 : index
    %c0_7 = arith.constant 0 : index
    %8 = vector.load %arg4[%c0_5, %c0_6, %c0_7] : memref<1x8x128xbf16, #tpu.memory_space<vmem>>, vector<1x8x128xbf16>
    %9 = vector.shape_cast %8 : vector<1x8x128xbf16> to vector<8x128xbf16>
    %10 = vector.extract_strided_slice %5 {offsets = [0, 0], sizes = [8, 32], strides = [1, 1]} : vector<8x128xbf16> to vector<8x32xbf16>
    %11 = vector.extract_strided_slice %7 {offsets = [0, 0], sizes = [8, 32], strides = [1, 1]} : vector<8x128xbf16> to vector<8x32xbf16>
    %12 = vector.extract_strided_slice %9 {offsets = [0, 0], sizes = [8, 32], strides = [1, 1]} : vector<8x128xbf16> to vector<8x32xbf16>
    %cst_8 = arith.constant dense<0.000000e+00> : vector<8x8xf32>
    %13 = tpu.matmul %10, %11, %cst_8 {dimension_numbers = #tpu.dot_dimension_numbers<[1], [1], [0], [0], [0, 0, 1, 0], [], []>} : vector<8x32xbf16>, vector<8x32xbf16>, vector<8x8xf32> -> vector<8x8xf32>
    %cst_9 = arith.constant dense<0xFF800000> : vector<8xf32>
    %14 = vector.multi_reduction <maximumf>, %13, %cst_9 [1] : vector<8x8xf32> to vector<8xf32>
    %15 = vector.shape_cast %14 : vector<8xf32> to vector<8x1xf32>
    %16 = vector.broadcast %15 : vector<8x1xf32> to vector<8x8xf32>
    %17 = arith.subf %13, %16 : vector<8x8xf32>
    %18 = math.exp %17 : vector<8x8xf32>
    %cst_10 = arith.constant dense<0.000000e+00> : vector<8xf32>
    %19 = vector.multi_reduction <add>, %18, %cst_10 [1] : vector<8x8xf32> to vector<8xf32>
    %20 = vector.shape_cast %19 : vector<8xf32> to vector<8x1xf32>
    %21 = tpu.reciprocal %20 {approx = true} : vector<8x1xf32> -> vector<8x1xf32>
    %22 = vector.broadcast %21 : vector<8x1xf32> to vector<8x8xf32>
    %23 = arith.mulf %18, %22 : vector<8x8xf32>
    %24 = arith.truncf %23 : vector<8x8xf32> to vector<8x8xbf16>
    %cst_11 = arith.constant dense<0.000000e+00> : vector<8x32xf32>
    %25 = tpu.matmul %24, %12, %cst_11 {dimension_numbers = #tpu.dot_dimension_numbers<[1], [0], [0], [1], [0, 0, 1, 1], [], []>} : vector<8x8xbf16>, vector<8x32xbf16>, vector<8x32xf32> -> vector<8x32xf32>
    %26 = vector.extract_strided_slice %5 {offsets = [0, 32], sizes = [8, 32], strides = [1, 1]} : vector<8x128xbf16> to vector<8x32xbf16>
    %27 = vector.extract_strided_slice %7 {offsets = [0, 32], sizes = [8, 32], strides = [1, 1]} : vector<8x128xbf16> to vector<8x32xbf16>
    %28 = vector.extract_strided_slice %9 {offsets = [0, 32], sizes = [8, 32], strides = [1, 1]} : vector<8x128xbf16> to vector<8x32xbf16>
    %cst_12 = arith.constant dense<0.000000e+00> : vector<8x8xf32>
    %29 = tpu.matmul %26, %27, %cst_12 {dimension_numbers = #tpu.dot_dimension_numbers<[1], [1], [0], [0], [0, 0, 1, 0], [], []>} : vector<8x32xbf16>, vector<8x32xbf16>, vector<8x8xf32> -> vector<8x8xf32>
    %cst_13 = arith.constant dense<0xFF800000> : vector<8xf32>
    %30 = vector.multi_reduction <maximumf>, %29, %cst_13 [1] : vector<8x8xf32> to vector<8xf32>
    %31 = vector.shape_cast %30 : vector<8xf32> to vector<8x1xf32>
    %32 = vector.broadcast %31 : vector<8x1xf32> to vector<8x8xf32>
    %33 = arith.subf %29, %32 : vector<8x8xf32>
    %34 = math.exp %33 : vector<8x8xf32>
    %cst_14 = arith.constant dense<0.000000e+00> : vector<8xf32>
    %35 = vector.multi_reduction <add>, %34, %cst_14 [1] : vector<8x8xf32> to vector<8xf32>
    %36 = vector.shape_cast %35 : vector<8xf32> to vector<8x1xf32>
    %37 = tpu.reciprocal %36 {approx = true} : vector<8x1xf32> -> vector<8x1xf32>
    %38 = vector.broadcast %37 : vector<8x1xf32> to vector<8x8xf32>
    %39 = arith.mulf %34, %38 : vector<8x8xf32>
    %40 = arith.truncf %39 : vector<8x8xf32> to vector<8x8xbf16>
    %cst_15 = arith.constant dense<0.000000e+00> : vector<8x32xf32>
    %41 = tpu.matmul %40, %28, %cst_15 {dimension_numbers = #tpu.dot_dimension_numbers<[1], [0], [0], [1], [0, 0, 1, 1], [], []>} : vector<8x8xbf16>, vector<8x32xbf16>, vector<8x32xf32> -> vector<8x32xf32>
    %42 = vector.extract_strided_slice %5 {offsets = [0, 64], sizes = [8, 32], strides = [1, 1]} : vector<8x128xbf16> to vector<8x32xbf16>
    %43 = vector.extract_strided_slice %7 {offsets = [0, 64], sizes = [8, 32], strides = [1, 1]} : vector<8x128xbf16> to vector<8x32xbf16>
    %44 = vector.extract_strided_slice %9 {offsets = [0, 64], sizes = [8, 32], strides = [1, 1]} : vector<8x128xbf16> to vector<8x32xbf16>
    %cst_16 = arith.constant dense<0.000000e+00> : vector<8x8xf32>
    %45 = tpu.matmul %42, %43, %cst_16 {dimension_numbers = #tpu.dot_dimension_numbers<[1], [1], [0], [0], [0, 0, 1, 0], [], []>} : vector<8x32xbf16>, vector<8x32xbf16>, vector<8x8xf32> -> vector<8x8xf32>
    %cst_17 = arith.constant dense<0xFF800000> : vector<8xf32>
    %46 = vector.multi_reduction <maximumf>, %45, %cst_17 [1] : vector<8x8xf32> to vector<8xf32>
    %47 = vector.shape_cast %46 : vector<8xf32> to vector<8x1xf32>
    %48 = vector.broadcast %47 : vector<8x1xf32> to vector<8x8xf32>
    %49 = arith.subf %45, %48 : vector<8x8xf32>
    %50 = math.exp %49 : vector<8x8xf32>
    %cst_18 = arith.constant dense<0.000000e+00> : vector<8xf32>
    %51 = vector.multi_reduction <add>, %50, %cst_18 [1] : vector<8x8xf32> to vector<8xf32>
    %52 = vector.shape_cast %51 : vector<8xf32> to vector<8x1xf32>
    %53 = tpu.reciprocal %52 {approx = true} : vector<8x1xf32> -> vector<8x1xf32>
    %54 = vector.broadcast %53 : vector<8x1xf32> to vector<8x8xf32>
    %55 = arith.mulf %50, %54 : vector<8x8xf32>
    %56 = arith.truncf %55 : vector<8x8xf32> to vector<8x8xbf16>
    %cst_19 = arith.constant dense<0.000000e+00> : vector<8x32xf32>
    %57 = tpu.matmul %56, %44, %cst_19 {dimension_numbers = #tpu.dot_dimension_numbers<[1], [0], [0], [1], [0, 0, 1, 1], [], []>} : vector<8x8xbf16>, vector<8x32xbf16>, vector<8x32xf32> -> vector<8x32xf32>
    %58 = vector.extract_strided_slice %5 {offsets = [0, 96], sizes = [8, 32], strides = [1, 1]} : vector<8x128xbf16> to vector<8x32xbf16>
    %59 = vector.extract_strided_slice %7 {offsets = [0, 96], sizes = [8, 32], strides = [1, 1]} : vector<8x128xbf16> to vector<8x32xbf16>
    %60 = vector.extract_strided_slice %9 {offsets = [0, 96], sizes = [8, 32], strides = [1, 1]} : vector<8x128xbf16> to vector<8x32xbf16>
    %cst_20 = arith.constant dense<0.000000e+00> : vector<8x8xf32>
    %61 = tpu.matmul %58, %59, %cst_20 {dimension_numbers = #tpu.dot_dimension_numbers<[1], [1], [0], [0], [0, 0, 1, 0], [], []>} : vector<8x32xbf16>, vector<8x32xbf16>, vector<8x8xf32> -> vector<8x8xf32>
    %cst_21 = arith.constant dense<0xFF800000> : vector<8xf32>
    %62 = vector.multi_reduction <maximumf>, %61, %cst_21 [1] : vector<8x8xf32> to vector<8xf32>
    %63 = vector.shape_cast %62 : vector<8xf32> to vector<8x1xf32>
    %64 = vector.broadcast %63 : vector<8x1xf32> to vector<8x8xf32>
    %65 = arith.subf %61, %64 : vector<8x8xf32>
    %66 = math.exp %65 : vector<8x8xf32>
    %cst_22 = arith.constant dense<0.000000e+00> : vector<8xf32>
    %67 = vector.multi_reduction <add>, %66, %cst_22 [1] : vector<8x8xf32> to vector<8xf32>
    %68 = vector.shape_cast %67 : vector<8xf32> to vector<8x1xf32>
    %69 = tpu.reciprocal %68 {approx = true} : vector<8x1xf32> -> vector<8x1xf32>
    %70 = vector.broadcast %69 : vector<8x1xf32> to vector<8x8xf32>
    %71 = arith.mulf %66, %70 : vector<8x8xf32>
    %72 = arith.truncf %71 : vector<8x8xf32> to vector<8x8xbf16>
    %cst_23 = arith.constant dense<0.000000e+00> : vector<8x32xf32>
    %73 = tpu.matmul %72, %60, %cst_23 {dimension_numbers = #tpu.dot_dimension_numbers<[1], [0], [0], [1], [0, 0, 1, 1], [], []>} : vector<8x8xbf16>, vector<8x32xbf16>, vector<8x32xf32> -> vector<8x32xf32>
    %74 = tpu.concatenate %25, %41, %57, %73 in 1 : vector<8x32xf32>, vector<8x32xf32>, vector<8x32xf32>, vector<8x32xf32> -> vector<8x128xf32>
    %75 = arith.truncf %74 : vector<8x128xf32> to vector<8x128xbf16>
    %c0_24 = arith.constant 0 : index
    %c0_25 = arith.constant 0 : index
    %c0_26 = arith.constant 0 : index
    %76 = vector.load %arg5[%c0_24, %c0_25, %c0_26] : memref<1x8x128xbf16, #tpu.memory_space<vmem>>, vector<1x8x128xbf16>
    %77 = vector.shape_cast %76 : vector<1x8x128xbf16> to vector<8x128xbf16>
    %78 = vector.shape_cast %75 : vector<8x128xbf16> to vector<1x8x128xbf16>
    tpu.vector_store %arg5[%c0_24, %c0_25, %c0_26], %78 {strides = array<i32>} : memref<1x8x128xbf16, #tpu.memory_space<vmem>>, vector<1x8x128xbf16>,
    return
  }
  func.func @transform_0(%arg0: i32, %arg1: i32) -> (i32, i32, i32) {
    %c0_i32 = arith.constant 0 : i32
    %c0_i32_0 = arith.constant 0 : i32
    return %arg0, %arg1, %c0_i32 : i32, i32, i32
  }
  func.func @transform_1(%arg0: i32, %arg1: i32) -> (i32, i32, i32) {
    %c0_i32 = arith.constant 0 : i32
    %c0_i32_0 = arith.constant 0 : i32
    %c0_i32_1 = arith.constant 0 : i32
    return %arg0, %c0_i32, %c0_i32_0 : i32, i32, i32
  }
  func.func @transform_2(%arg0: i32, %arg1: i32) -> (i32, i32, i32) {
    %c0_i32 = arith.constant 0 : i32
    %c1_i32 = arith.constant 1 : i32
    %c0_i32_0 = arith.constant 0 : i32
    return %arg0, %c0_i32, %c1_i32 : i32, i32, i32
  }
  func.func @transform_3(%arg0: i32, %arg1: i32) -> (i32, i32, i32) {
    %c0_i32 = arith.constant 0 : i32
    %c0_i32_0 = arith.constant 0 : i32
    return %arg0, %arg1, %c0_i32 : i32, i32, i32
  }
}

module attributes {stable_mosaic.version = 11 : i64} {
  func.func @_matmul_res_ln_kernel(%arg0: i32, %arg1: i32, %arg2: memref<16x256xbf16, #tpu.memory_space<vmem>>, %arg3: memref<256x128xbf16, #tpu.memory_space<vmem>>, %arg4: memref<1x128xf32, #tpu.memory_space<vmem>>, %arg5: memref<16x128xbf16, #tpu.memory_space<vmem>>, %arg6: memref<1x128xf32, #tpu.memory_space<vmem>>, %arg7: memref<1x128xf32, #tpu.memory_space<vmem>>, %arg8: memref<16x128xbf16, #tpu.memory_space<vmem>>, %arg9: memref<16x128xf32, #tpu.memory_space<vmem>>) attributes {dimension_semantics = [#tpu.dimension_semantics<parallel>, #tpu.dimension_semantics<arbitrary>], iteration_bounds = array<i64: 1, 1>, scalar_prefetch = 0 : i64, scratch_operands = 1 : i64, tpu.core_type = #tpu.core_type<tc>, window_params = [{transform_indices = @transform_0, window_bounds = array<i64: 16, 256>}, {transform_indices = @transform_1, window_bounds = array<i64: 256, 128>}, {pipeline_mode = #tpu.pipeline_mode<synchronous>, transform_indices = @transform_2, window_bounds = array<i64: 1, 128>}, {transform_indices = @transform_3, window_bounds = array<i64: 16, 128>}, {pipeline_mode = #tpu.pipeline_mode<synchronous>, transform_indices = @transform_4, window_bounds = array<i64: 1, 128>}, {pipeline_mode = #tpu.pipeline_mode<synchronous>, transform_indices = @transform_5, window_bounds = array<i64: 1, 128>}, {transform_indices = @transform_6, window_bounds = array<i64: 16, 128>}]} {
    %c0_i32 = arith.constant 0 : i32
    %0 = arith.cmpi eq, %arg1, %c0_i32 : i32
    %1 = arith.extui %0 : i1 to i32
    %c0_i32_0 = arith.constant 0 : i32
    %2 = arith.cmpi ne, %1, %c0_i32_0 : i32
    scf.if %2 {
      %cst_10 = arith.constant 0.000000e+00 : f32
      %12 = vector.broadcast %cst_10 : f32 to vector<16x128xf32>
      %c0_11 = arith.constant 0 : index
      %c0_12 = arith.constant 0 : index
      %13 = vector.load %arg9[%c0_11, %c0_12] : memref<16x128xf32, #tpu.memory_space<vmem>>, vector<16x128xf32>
      tpu.vector_store %arg9[%c0_11, %c0_12], %12 {strides = array<i32>} : memref<16x128xf32, #tpu.memory_space<vmem>>, vector<16x128xf32>,
    } else {
    }
    %c0 = arith.constant 0 : index
    %c0_1 = arith.constant 0 : index
    %3 = vector.load %arg9[%c0, %c0_1] : memref<16x128xf32, #tpu.memory_space<vmem>>, vector<16x128xf32>
    %c0_2 = arith.constant 0 : index
    %c0_3 = arith.constant 0 : index
    %4 = vector.load %arg2[%c0_2, %c0_3] : memref<16x256xbf16, #tpu.memory_space<vmem>>, vector<16x256xbf16>
    %c0_4 = arith.constant 0 : index
    %c0_5 = arith.constant 0 : index
    %5 = vector.load %arg3[%c0_4, %c0_5] : memref<256x128xbf16, #tpu.memory_space<vmem>>, vector<256x128xbf16>
    %cst = arith.constant dense<0.000000e+00> : vector<16x128xf32>
    %6 = tpu.matmul %4, %5, %cst {dimension_numbers = #tpu.dot_dimension_numbers<[1], [0], [0], [1], [0, 0, 1, 1], [], []>} : vector<16x256xbf16>, vector<256x128xbf16>, vector<16x128xf32> -> vector<16x128xf32>
    %7 = arith.addf %3, %6 : vector<16x128xf32>
    %c0_6 = arith.constant 0 : index
    %c0_7 = arith.constant 0 : index
    %8 = vector.load %arg9[%c0_6, %c0_7] : memref<16x128xf32, #tpu.memory_space<vmem>>, vector<16x128xf32>
    tpu.vector_store %arg9[%c0_6, %c0_7], %7 {strides = array<i32>} : memref<16x128xf32, #tpu.memory_space<vmem>>, vector<16x128xf32>,
    %c0_i32_8 = arith.constant 0 : i32
    %9 = arith.cmpi eq, %arg1, %c0_i32_8 : i32
    %10 = arith.extui %9 : i1 to i32
    %c0_i32_9 = arith.constant 0 : i32
    %11 = arith.cmpi ne, %10, %c0_i32_9 : i32
    scf.if %11 {
      %c0_10 = arith.constant 0 : index
      %c0_11 = arith.constant 0 : index
      %12 = vector.load %arg9[%c0_10, %c0_11] : memref<16x128xf32, #tpu.memory_space<vmem>>, vector<16x128xf32>
      %c0_12 = arith.constant 0 : index
      %c0_13 = arith.constant 0 : index
      %13 = vector.load %arg4[%c0_12, %c0_13] : memref<1x128xf32, #tpu.memory_space<vmem>>, vector<1x128xf32>
      %14 = vector.broadcast %13 : vector<1x128xf32> to vector<16x128xf32>
      %15 = arith.addf %12, %14 : vector<16x128xf32>
      %c0_14 = arith.constant 0 : index
      %c0_15 = arith.constant 0 : index
      %16 = vector.load %arg5[%c0_14, %c0_15] : memref<16x128xbf16, #tpu.memory_space<vmem>>, vector<16x128xbf16>
      %17 = arith.extf %16 : vector<16x128xbf16> to vector<16x128xf32>
      %18 = arith.addf %15, %17 : vector<16x128xf32>
      %cst_16 = arith.constant dense<0.000000e+00> : vector<16xf32>
      %19 = vector.multi_reduction <add>, %18, %cst_16 [1] : vector<16x128xf32> to vector<16xf32>
      %20 = vector.shape_cast %19 : vector<16xf32> to vector<16x1xf32>
      %cst_17 = arith.constant 1.280000e+02 : f32
      %21 = vector.broadcast %cst_17 : f32 to vector<16x1xf32>
      %22 = arith.divf %20, %21 : vector<16x1xf32>
      %23 = vector.broadcast %22 : vector<16x1xf32> to vector<16x128xf32>
      %24 = arith.subf %18, %23 : vector<16x128xf32>
      %25 = arith.mulf %24, %24 : vector<16x128xf32>
      %cst_18 = arith.constant dense<0.000000e+00> : vector<16xf32>
      %26 = vector.multi_reduction <add>, %25, %cst_18 [1] : vector<16x128xf32> to vector<16xf32>
      %27 = vector.shape_cast %26 : vector<16xf32> to vector<16x1xf32>
      %cst_19 = arith.constant 1.280000e+02 : f32
      %28 = vector.broadcast %cst_19 : f32 to vector<16x1xf32>
      %29 = arith.divf %27, %28 : vector<16x1xf32>
      %cst_20 = arith.constant 9.99999974E-6 : f32
      %30 = vector.broadcast %cst_20 : f32 to vector<16x1xf32>
      %31 = arith.addf %29, %30 : vector<16x1xf32>
      %32 = math.rsqrt %31 : vector<16x1xf32>
      %33 = vector.broadcast %32 : vector<16x1xf32> to vector<16x128xf32>
      %34 = arith.mulf %24, %33 : vector<16x128xf32>
      %c0_21 = arith.constant 0 : index
      %c0_22 = arith.constant 0 : index
      %35 = vector.load %arg6[%c0_21, %c0_22] : memref<1x128xf32, #tpu.memory_space<vmem>>, vector<1x128xf32>
      %36 = vector.broadcast %35 : vector<1x128xf32> to vector<16x128xf32>
      %37 = arith.mulf %34, %36 : vector<16x128xf32>
      %c0_23 = arith.constant 0 : index
      %c0_24 = arith.constant 0 : index
      %38 = vector.load %arg7[%c0_23, %c0_24] : memref<1x128xf32, #tpu.memory_space<vmem>>, vector<1x128xf32>
      %39 = vector.broadcast %38 : vector<1x128xf32> to vector<16x128xf32>
      %40 = arith.addf %37, %39 : vector<16x128xf32>
      %41 = arith.truncf %40 : vector<16x128xf32> to vector<16x128xbf16>
      %c0_25 = arith.constant 0 : index
      %c0_26 = arith.constant 0 : index
      %42 = vector.load %arg8[%c0_25, %c0_26] : memref<16x128xbf16, #tpu.memory_space<vmem>>, vector<16x128xbf16>
      tpu.vector_store %arg8[%c0_25, %c0_26], %41 {strides = array<i32>} : memref<16x128xbf16, #tpu.memory_space<vmem>>, vector<16x128xbf16>,
    } else {
    }
    return
  }
  func.func @transform_0(%arg0: i32, %arg1: i32) -> (i32, i32) {
    %c0_i32 = arith.constant 0 : i32
    return %arg0, %arg1 : i32, i32
  }
  func.func @transform_1(%arg0: i32, %arg1: i32) -> (i32, i32) {
    %c0_i32 = arith.constant 0 : i32
    %c0_i32_0 = arith.constant 0 : i32
    return %arg1, %c0_i32 : i32, i32
  }
  func.func @transform_2(%arg0: i32, %arg1: i32) -> (i32, i32) {
    %c0_i32 = arith.constant 0 : i32
    %c0_i32_0 = arith.constant 0 : i32
    %c0_i32_1 = arith.constant 0 : i32
    return %c0_i32, %c0_i32_0 : i32, i32
  }
  func.func @transform_3(%arg0: i32, %arg1: i32) -> (i32, i32) {
    %c0_i32 = arith.constant 0 : i32
    %c0_i32_0 = arith.constant 0 : i32
    return %arg0, %c0_i32 : i32, i32
  }
  func.func @transform_4(%arg0: i32, %arg1: i32) -> (i32, i32) {
    %c0_i32 = arith.constant 0 : i32
    %c0_i32_0 = arith.constant 0 : i32
    %c0_i32_1 = arith.constant 0 : i32
    return %c0_i32, %c0_i32_0 : i32, i32
  }
  func.func @transform_5(%arg0: i32, %arg1: i32) -> (i32, i32) {
    %c0_i32 = arith.constant 0 : i32
    %c0_i32_0 = arith.constant 0 : i32
    %c0_i32_1 = arith.constant 0 : i32
    return %c0_i32, %c0_i32_0 : i32, i32
  }
  func.func @transform_6(%arg0: i32, %arg1: i32) -> (i32, i32) {
    %c0_i32 = arith.constant 0 : i32
    %c0_i32_0 = arith.constant 0 : i32
    return %arg0, %c0_i32 : i32, i32
  }
}

module attributes {stable_mosaic.version = 11 : i64} {
  func.func @_matmul_kernel(%arg0: i32, %arg1: i32, %arg2: i32, %arg3: memref<16x128xbf16, #tpu.memory_space<vmem>>, %arg4: memref<128x128xbf16, #tpu.memory_space<vmem>>, %arg5: memref<1x128xf32, #tpu.memory_space<vmem>>, %arg6: memref<16x128xf32, #tpu.memory_space<vmem>>, %arg7: memref<16x128xf32, #tpu.memory_space<vmem>>) attributes {dimension_semantics = [#tpu.dimension_semantics<parallel>, #tpu.dimension_semantics<parallel>, #tpu.dimension_semantics<arbitrary>], iteration_bounds = array<i64: 1, 1, 1>, scalar_prefetch = 0 : i64, scratch_operands = 1 : i64, tpu.core_type = #tpu.core_type<tc>, window_params = [{transform_indices = @transform_0, window_bounds = array<i64: 16, 128>}, {transform_indices = @transform_1, window_bounds = array<i64: 128, 128>}, {transform_indices = @transform_2, window_bounds = array<i64: 1, 128>}, {transform_indices = @transform_3, window_bounds = array<i64: 16, 128>}]} {
    %c0_i32 = arith.constant 0 : i32
    %0 = arith.cmpi eq, %arg2, %c0_i32 : i32
    %1 = arith.extui %0 : i1 to i32
    %c0_i32_0 = arith.constant 0 : i32
    %2 = arith.cmpi ne, %1, %c0_i32_0 : i32
    scf.if %2 {
      %cst_10 = arith.constant 0.000000e+00 : f32
      %12 = vector.broadcast %cst_10 : f32 to vector<16x128xf32>
      %c0_11 = arith.constant 0 : index
      %c0_12 = arith.constant 0 : index
      %13 = vector.load %arg7[%c0_11, %c0_12] : memref<16x128xf32, #tpu.memory_space<vmem>>, vector<16x128xf32>
      tpu.vector_store %arg7[%c0_11, %c0_12], %12 {strides = array<i32>} : memref<16x128xf32, #tpu.memory_space<vmem>>, vector<16x128xf32>,
    } else {
    }
    %c0 = arith.constant 0 : index
    %c0_1 = arith.constant 0 : index
    %3 = vector.load %arg7[%c0, %c0_1] : memref<16x128xf32, #tpu.memory_space<vmem>>, vector<16x128xf32>
    %c0_2 = arith.constant 0 : index
    %c0_3 = arith.constant 0 : index
    %4 = vector.load %arg3[%c0_2, %c0_3] : memref<16x128xbf16, #tpu.memory_space<vmem>>, vector<16x128xbf16>
    %c0_4 = arith.constant 0 : index
    %c0_5 = arith.constant 0 : index
    %5 = vector.load %arg4[%c0_4, %c0_5] : memref<128x128xbf16, #tpu.memory_space<vmem>>, vector<128x128xbf16>
    %cst = arith.constant dense<0.000000e+00> : vector<16x128xf32>
    %6 = tpu.matmul %4, %5, %cst {dimension_numbers = #tpu.dot_dimension_numbers<[1], [0], [0], [1], [0, 0, 1, 1], [], []>} : vector<16x128xbf16>, vector<128x128xbf16>, vector<16x128xf32> -> vector<16x128xf32>
    %7 = arith.addf %3, %6 : vector<16x128xf32>
    %c0_6 = arith.constant 0 : index
    %c0_7 = arith.constant 0 : index
    %8 = vector.load %arg7[%c0_6, %c0_7] : memref<16x128xf32, #tpu.memory_space<vmem>>, vector<16x128xf32>
    tpu.vector_store %arg7[%c0_6, %c0_7], %7 {strides = array<i32>} : memref<16x128xf32, #tpu.memory_space<vmem>>, vector<16x128xf32>,
    %c0_i32_8 = arith.constant 0 : i32
    %9 = arith.cmpi eq, %arg2, %c0_i32_8 : i32
    %10 = arith.extui %9 : i1 to i32
    %c0_i32_9 = arith.constant 0 : i32
    %11 = arith.cmpi ne, %10, %c0_i32_9 : i32
    scf.if %11 {
      %c0_10 = arith.constant 0 : index
      %c0_11 = arith.constant 0 : index
      %12 = vector.load %arg7[%c0_10, %c0_11] : memref<16x128xf32, #tpu.memory_space<vmem>>, vector<16x128xf32>
      %c0_12 = arith.constant 0 : index
      %c0_13 = arith.constant 0 : index
      %13 = vector.load %arg5[%c0_12, %c0_13] : memref<1x128xf32, #tpu.memory_space<vmem>>, vector<1x128xf32>
      %14 = vector.broadcast %13 : vector<1x128xf32> to vector<16x128xf32>
      %15 = arith.addf %12, %14 : vector<16x128xf32>
      %c0_14 = arith.constant 0 : index
      %c0_15 = arith.constant 0 : index
      %16 = vector.load %arg6[%c0_14, %c0_15] : memref<16x128xf32, #tpu.memory_space<vmem>>, vector<16x128xf32>
      tpu.vector_store %arg6[%c0_14, %c0_15], %15 {strides = array<i32>} : memref<16x128xf32, #tpu.memory_space<vmem>>, vector<16x128xf32>,
    } else {
    }
    return
  }
  func.func @transform_0(%arg0: i32, %arg1: i32, %arg2: i32) -> (i32, i32) {
    %c0_i32 = arith.constant 0 : i32
    return %arg0, %arg2 : i32, i32
  }
  func.func @transform_1(%arg0: i32, %arg1: i32, %arg2: i32) -> (i32, i32) {
    %c0_i32 = arith.constant 0 : i32
    return %arg2, %arg1 : i32, i32
  }
  func.func @transform_2(%arg0: i32, %arg1: i32, %arg2: i32) -> (i32, i32) {
    %c0_i32 = arith.constant 0 : i32
    %c0_i32_0 = arith.constant 0 : i32
    return %c0_i32, %arg1 : i32, i32
  }
  func.func @transform_3(%arg0: i32, %arg1: i32, %arg2: i32) -> (i32, i32) {
    %c0_i32 = arith.constant 0 : i32
    return %arg0, %arg1 : i32, i32
  }
}

</mosaic_0001>

<llo_original>
// kernel: decoder_forward.21
$region0: #{decoder_forward.21}
  #allocation0 [shape = 'u32[]', space=smem, size = 0x4, offset = 0x4, fixed_abs, tag = 'smem constant byte address 0x4 - core index']
  #allocation1 [shape = 'u32[144,128]{1,0:T(1,128)}', space=vmem, size = 0x12000, scoped, tag = 'internal scratch']
  #allocation2 [shape = 'f32[16,128]{1,0:T(8,128)}', space=vmem, size = 0x2000, scoped, tag = 'scratch operand']
  %s0 = inlined_call_operand.vmem [shape: bf16[16,128], index: 0, kind: input, shape index: {}]
  %s1 = inlined_call_operand.vmem [shape: bf16[128,128], index: 1, kind: input, shape index: {}]
  %s2 = inlined_call_operand.vmem [shape: f32[1,128], index: 2, kind: input, shape index: {}]
  %s3 = inlined_call_operand.vmem [shape: bf16[16,128], index: 3, kind: input, shape index: {}]
  %s4 = inlined_call_operand.vmem [shape: f32[1,128], index: 4, kind: input, shape index: {}]
  %s5 = inlined_call_operand.vmem [shape: f32[1,128], index: 5, kind: input, shape index: {}]
  %s6 = inlined_call_operand.vmem [shape: bf16[16,128], index: 6, kind: output, shape index: {}]
  %s7 = sld [smem:[#allocation0]]
  $region42: #{decoder_forward.21} parent=0
    _
  %s9 = ssub.s32 1, %s7
  %s10 = scalar_select 0, %s9, %s7
  // Predicated region
  $region2: #{decoder_forward.21} parent=0 // pred_check
    _
  $region3: #{decoder_forward.21} parent=0 // pred_check_branch
    %12 = sbr.rel (0) target = $region5
  $region4: #{decoder_forward.21} parent=0 // pred_region
    _
  $region5: #{decoder_forward.21} parent=0 // pred_fallthru
    _
  // Predicated region
  $region6: #{decoder_forward.21} parent=0 // pred_check
    _
  $region7: #{decoder_forward.21} parent=0 // pred_check_branch
    %14 = sbr.rel (0) target = $region9
  $region8: #{decoder_forward.21} parent=0 // pred_region
    _
  $region9: #{decoder_forward.21} parent=0 // pred_fallthru
    _
  // Predicated region
  $region10: #{decoder_forward.21} parent=0 // pred_check
    _
  $region11: #{decoder_forward.21} parent=0 // pred_check_branch
    %16 = sbr.rel (0) target = $region13
  $region12: #{decoder_forward.21} parent=0 // pred_region
    _
  $region13: #{decoder_forward.21} parent=0 // pred_fallthru
    _
  // Predicated region
  $region14: #{decoder_forward.21} parent=0 // pred_check
    _
  $region15: #{decoder_forward.21} parent=0 // pred_check_branch
    %18 = sbr.rel (0) target = $region17
  $region16: #{decoder_forward.21} parent=0 // pred_region
    _
  $region17: #{decoder_forward.21} parent=0 // pred_fallthru
    _
  // Predicated region
  $region18: #{decoder_forward.21} parent=0 // pred_check
    _
  $region19: #{decoder_forward.21} parent=0 // pred_check_branch
    %20 = sbr.rel (0) target = $region21
  $region20: #{decoder_forward.21} parent=0 // pred_region
    _
  $region21: #{decoder_forward.21} parent=0 // pred_fallthru
    _
  // Predicated region
  $region22: #{decoder_forward.21} parent=0 // pred_check
    _
  $region23: #{decoder_forward.21} parent=0 // pred_check_branch
    %22 = sbr.rel (0) target = $region25
  $region24: #{decoder_forward.21} parent=0 // pred_region
    _
  $region25: #{decoder_forward.21} parent=0 // pred_fallthru
    _
  %p24 = scmp.eq.s32.totalorder 0, 0
  // Predicated region
  $region26: #{decoder_forward.21} parent=0 // pred_check
    %p25 = pneg %p24
  $region27: #{decoder_forward.21} parent=0 // pred_check_branch
    %27 = sbr.rel (%p25) target = $region29
  $region28: #{decoder_forward.21} parent=0 // pred_region
    %28 = vst [vmem:[#allocation2] sm:$0xff] 0.0
    %29 = vst [vmem:[#allocation2 + $0x8] sm:$0xff] 0.0
  $region29: #{decoder_forward.21} parent=0 // pred_fallthru
    _
  %v30 = vld [vmem:[#allocation2] sm:$0xff]
  %v31 = vld [vmem:[#allocation2 + $0x8] sm:$0xff]
  %v32 = vld [vmem:[%s0] sm:$0xf]
  %v33 = vld [vmem:[%s0 + $0x4] sm:$0xf]
  %v34 = vld [vmem:[%s1] sm:$0xf]
  %v35 = vld [vmem:[%s1 + $0x4] sm:$0xf]
  %v36 = vld [vmem:[%s1 + $0x8] sm:$0xf]
  %v37 = vld [vmem:[%s1 + $0xc] sm:$0xf]
  %v38 = vld [vmem:[%s1 + $0x10] sm:$0xf]
  %v39 = vld [vmem:[%s1 + $0x14] sm:$0xf]
  %v40 = vld [vmem:[%s1 + $0x18] sm:$0xf]
  %v41 = vld [vmem:[%s1 + $0x1c] sm:$0xf]
  %v42 = vld [vmem:[%s1 + $0x20] sm:$0xf]
  %v43 = vld [vmem:[%s1 + $0x24] sm:$0xf]
  %v44 = vld [vmem:[%s1 + $0x28] sm:$0xf]
  %v45 = vld [vmem:[%s1 + $0x2c] sm:$0xf]
  %v46 = vld [vmem:[%s1 + $0x30] sm:$0xf]
  %v47 = vld [vmem:[%s1 + $0x34] sm:$0xf]
  %v48 = vld [vmem:[%s1 + $0x38] sm:$0xf]
  %v49 = vld [vmem:[%s1 + $0x3c] sm:$0xf]
  %v52 = vunpack.c.l.b16 %v32
  %v53 = vunpack.c.l.b16 %v33
  %v54 = vpack.c.b16 %v53, %v52
  %v72 = vunpack.c.l.b16 %v34
  %v73 = vunpack.c.l.b16 %v35
  %v74 = vunpack.c.l.b16 %v36
  %v75 = vunpack.c.l.b16 %v37
  %v76 = vunpack.c.l.b16 %v38
  %v77 = vunpack.c.l.b16 %v39
  %v78 = vunpack.c.l.b16 %v40
  %v79 = vunpack.c.l.b16 %v41
  %v80 = vunpack.c.l.b16 %v42
  %v81 = vunpack.c.l.b16 %v43
  %v82 = vunpack.c.l.b16 %v44
  %v83 = vunpack.c.l.b16 %v45
  %v84 = vunpack.c.l.b16 %v46
  %v85 = vunpack.c.l.b16 %v47
  %v86 = vunpack.c.l.b16 %v48
  %v87 = vunpack.c.l.b16 %v49
  %v88 = vpack.c.b16 %v73, %v72
  %v89 = vpack.c.b16 %v75, %v74
  %v90 = vpack.c.b16 %v77, %v76
  %v91 = vpack.c.b16 %v79, %v78
  %v92 = vpack.c.b16 %v81, %v80
  %v93 = vpack.c.b16 %v83, %v82
  %v94 = vpack.c.b16 %v85, %v84
  %v95 = vpack.c.b16 %v87, %v86
  %104 = vmatprep.subr.bf16.mxu0 0
  %105 = vmatpush1.bf16.msra.mxu0 %v95
  %106 = vmatprep.subr.bf16.mxu0 0
  %107 = vmatpush1.bf16.msra.mxu0 %v94
  %108 = vmatprep.subr.bf16.mxu0 0
  %109 = vmatpush1.bf16.msra.mxu0 %v93
  %110 = vmatprep.subr.bf16.mxu0 0
  %111 = vmatpush1.bf16.msra.mxu0 %v92
  %112 = vmatprep.subr.bf16.mxu0 0
  %113 = vmatpush1.bf16.msra.mxu0 %v91
  %114 = vmatprep.subr.bf16.mxu0 0
  %115 = vmatpush1.bf16.msra.mxu0 %v90
  %116 = vmatprep.subr.bf16.mxu0 0
  %117 = vmatpush1.bf16.msra.mxu0 %v89
  %118 = vmatprep.subr.bf16.mxu0 0
  %119 = vmatpush1.bf16.msra.mxu0 %v88
  %120 = vmatprep.subr.bf16.mxu0 0
  %121 = vmatpush2.bf16.msra.mxu0 0
  %122 = vmatprep.subr.bf16.mxu0 0
  %123 = vmatpush2.bf16.msra.mxu0 0
  %124 = vmatprep.subr.bf16.mxu0 0
  %125 = vmatpush2.bf16.msra.mxu0 0
  %126 = vmatprep.subr.bf16.mxu0 0
  %127 = vmatpush2.bf16.msra.mxu0 0
  %128 = vmatprep.subr.bf16.mxu0 0
  %129 = vmatpush2.bf16.msra.mxu0 0
  %130 = vmatprep.subr.bf16.mxu0 0
  %131 = vmatpush2.bf16.msra.mxu0 0
  %132 = vmatprep.subr.bf16.mxu0 0
  %133 = vmatpush2.bf16.msra.mxu0 0
  %134 = vmatprep.subr.bf16.mxu0 0
  %135 = vmatpush2.bf16.msra.mxu0 0
  %136 = vmatprep.mubr.bf16.mxu0 0
  %137 = vmatmul.mubr.bf16.gmra.mxu0 %v54
  %v138 = vpop.f32.mrf.mxu0
  %v139 = vadd.f32 0.0, %v138
  %v140 = vpop.f32.mrf.mxu0
  %v141 = vpop.f32.mrf.mxu0
  %v142 = vadd.f32 0.0, %v141
  %v143 = vpop.f32.mrf.mxu0
  %144 = vdwg.mxu0
  %v145 = vadd.f32 %v30, %v139
  %v146 = vadd.f32 %v31, %v142
  %147 = vst [vmem:[#allocation2] sm:$0xff] %v145
  %148 = vst [vmem:[#allocation2 + $0x8] sm:$0xff] %v146
  // Predicated region
  $region30: #{decoder_forward.21} parent=0 // pred_check
    %p149 = pneg %p24
  $region31: #{decoder_forward.21} parent=0 // pred_check_branch
    %151 = sbr.rel (%p149) target = $region33
  $region32: #{decoder_forward.21} parent=0 // pred_region
    %v152 = vld [vmem:[#allocation2] sm:$0xff]
    %v153 = vld [vmem:[#allocation2 + $0x8] sm:$0xff]
    %v154 = vld [vmem:[%s2] sm:$0x1]
    %v156 = vlaneseq
    %v157 = vshrl.u32 %v156, 7
    %v158 = vsub.s32 0, %v157
    %v159 = vrot.slane %v154, %v158
    %v161 = vadd.f32 %v152, %v159
    %v162 = vadd.f32 %v153, %v159
    %v163 = vld [vmem:[%s3] sm:$0xf]
    %v164 = vld [vmem:[%s3 + $0x4] sm:$0xf]
    %v165 = vunpack.c.l.bf16 %v163
    %v166 = vunpack.c.l.bf16 %v164
    %v167 = vadd.f32 %v161, %v165
    %v168 = vadd.f32 %v162, %v166
    %169 = vadd.xlane.f32.xlu0 %v167
    %v170 = vpop.xlane.xlu0 %169
    %171 = vadd.xlane.f32.xlu0 %v168
    %v172 = vpop.xlane.xlu0 %171
    %v173 = vrcp.pop 128.0
    %v174 = vmul.f32 %v170, %v173
    %v175 = vmul.f32 %v172, %v173
    %v176 = vsub.f32 %v167, %v174
    %v177 = vsub.f32 %v168, %v175
    %v178 = vmul.f32 %v176, %v176
    %v179 = vmul.f32 %v177, %v177
    %180 = vadd.xlane.f32.xlu0 %v178
    %v181 = vpop.xlane.xlu0 %180
    %182 = vadd.xlane.f32.xlu0 %v179
    %v183 = vpop.xlane.xlu0 %182
    %v184 = vmul.f32 %v181, %v173
    %v185 = vmul.f32 %v183, %v173
    %v186 = vadd.f32 %v184, 1e-05
    %v187 = vadd.f32 %v185, 1e-05
    %v188 = vrsqrt.pop %v186
    %v189 = vrsqrt.pop %v187
    %v190 = vmul.f32 %v176, %v188
    %v191 = vmul.f32 %v177, %v189
    %v192 = vld [vmem:[%s4] sm:$0x1]
    %v194 = vlaneseq
    %v195 = vshrl.u32 %v194, 7
    %v196 = vsub.s32 0, %v195
    %v197 = vrot.slane %v192, %v196
    %v199 = vmul.f32 %v190, %v197
    %v200 = vmul.f32 %v191, %v197
    %v201 = vld [vmem:[%s5] sm:$0x1]
    %v203 = vlaneseq
    %v204 = vshrl.u32 %v203, 7
    %v205 = vsub.s32 0, %v204
    %v206 = vrot.slane %v201, %v205
    %v208 = vadd.f32 %v199, %v206
    %v209 = vadd.f32 %v200, %v206
    %v210 = vpack.c.bf16 %v209, %v208
    %v212 = vunpack.c.l.b16 %v210
    %v213 = vunpack.c.h.b16 %v210
    %v214 = vpack.c.b16 %v212, %v212
    %v215 = vpack.c.b16 %v213, %v213
    %218 = vst [vmem:[%s6] sm:$0xf] %v214
    %219 = vst [vmem:[%s6 + $0x4] sm:$0xf] %v215
  $region33: #{decoder_forward.21} parent=0 // pred_fallthru
    _
  // Predicated region
  $region34: #{decoder_forward.21} parent=0 // pred_check
    _
  $region35: #{decoder_forward.21} parent=0 // pred_check_branch
    %221 = sbr.rel (0) target = $region37
  $region36: #{decoder_forward.21} parent=0 // pred_region
    _
  $region37: #{decoder_forward.21} parent=0 // pred_fallthru
    _
  // Predicated region
  $region38: #{decoder_forward.21} parent=0 // pred_check
    _
  $region39: #{decoder_forward.21} parent=0 // pred_check_branch
    %223 = sbr.rel (0) target = $region41
  $region40: #{decoder_forward.21} parent=0 // pred_region
    _
  $region41: #{decoder_forward.21} parent=0 // pred_fallthru
    _

// kernel: decoder_forward.22
$region0: #{decoder_forward.22}
  #allocation0 [shape = 'u32[]', space=smem, size = 0x4, offset = 0x4, fixed_abs, tag = 'smem constant byte address 0x4 - core index']
  #allocation1 [shape = 'u32[144,128]{1,0:T(1,128)}', space=vmem, size = 0x12000, scoped, tag = 'internal scratch']
  #allocation2 [shape = 'f32[16,128]{1,0:T(8,128)}', space=vmem, size = 0x2000, scoped, tag = 'scratch operand']
  %s0 = inlined_call_operand.vmem [shape: bf16[16,128], index: 0, kind: input, shape index: {}]
  %s1 = inlined_call_operand.vmem [shape: bf16[128,128], index: 1, kind: input, shape index: {}]
  %s2 = inlined_call_operand.vmem [shape: f32[1,128], index: 2, kind: input, shape index: {}]
  %s3 = inlined_call_operand.vmem [shape: bf16[16,128], index: 3, kind: output, shape index: {}]
  %s4 = sld [smem:[#allocation0]]
  $region30: #{decoder_forward.22} parent=0
    _
  %s6 = ssub.s32 1, %s4
  %s7 = scalar_select 0, %s6, %s4
  // Predicated region
  $region2: #{decoder_forward.22} parent=0 // pred_check
    _
  $region3: #{decoder_forward.22} parent=0 // pred_check_branch
    %9 = sbr.rel (0) target = $region5
  $region4: #{decoder_forward.22} parent=0 // pred_region
    _
  $region5: #{decoder_forward.22} parent=0 // pred_fallthru
    _
  // Predicated region
  $region6: #{decoder_forward.22} parent=0 // pred_check
    _
  $region7: #{decoder_forward.22} parent=0 // pred_check_branch
    %11 = sbr.rel (0) target = $region9
  $region8: #{decoder_forward.22} parent=0 // pred_region
    _
  $region9: #{decoder_forward.22} parent=0 // pred_fallthru
    _
  // Predicated region
  $region10: #{decoder_forward.22} parent=0 // pred_check
    _
  $region11: #{decoder_forward.22} parent=0 // pred_check_branch
    %13 = sbr.rel (0) target = $region13
  $region12: #{decoder_forward.22} parent=0 // pred_region
    _
  $region13: #{decoder_forward.22} parent=0 // pred_fallthru
    _
  %p15 = scmp.eq.s32.totalorder 0, 0
  // Predicated region
  $region14: #{decoder_forward.22} parent=0 // pred_check
    %p16 = pneg %p15
  $region15: #{decoder_forward.22} parent=0 // pred_check_branch
    %18 = sbr.rel (%p16) target = $region17
  $region16: #{decoder_forward.22} parent=0 // pred_region
    %19 = vst [vmem:[#allocation2] sm:$0xff] 0.0
    %20 = vst [vmem:[#allocation2 + $0x8] sm:$0xff] 0.0
  $region17: #{decoder_forward.22} parent=0 // pred_fallthru
    _
  %v21 = vld [vmem:[#allocation2] sm:$0xff]
  %v22 = vld [vmem:[#allocation2 + $0x8] sm:$0xff]
  %v23 = vld [vmem:[%s0] sm:$0xf]
  %v24 = vld [vmem:[%s0 + $0x4] sm:$0xf]
  %v25 = vld [vmem:[%s1] sm:$0xf]
  %v26 = vld [vmem:[%s1 + $0x4] sm:$0xf]
  %v27 = vld [vmem:[%s1 + $0x8] sm:$0xf]
  %v28 = vld [vmem:[%s1 + $0xc] sm:$0xf]
  %v29 = vld [vmem:[%s1 + $0x10] sm:$0xf]
  %v30 = vld [vmem:[%s1 + $0x14] sm:$0xf]
  %v31 = vld [vmem:[%s1 + $0x18] sm:$0xf]
  %v32 = vld [vmem:[%s1 + $0x1c] sm:$0xf]
  %v33 = vld [vmem:[%s1 + $0x20] sm:$0xf]
  %v34 = vld [vmem:[%s1 + $0x24] sm:$0xf]
  %v35 = vld [vmem:[%s1 + $0x28] sm:$0xf]
  %v36 = vld [vmem:[%s1 + $0x2c] sm:$0xf]
  %v37 = vld [vmem:[%s1 + $0x30] sm:$0xf]
  %v38 = vld [vmem:[%s1 + $0x34] sm:$0xf]
  %v39 = vld [vmem:[%s1 + $0x38] sm:$0xf]
  %v40 = vld [vmem:[%s1 + $0x3c] sm:$0xf]
  %v43 = vunpack.c.l.b16 %v23
  %v44 = vunpack.c.l.b16 %v24
  %v45 = vpack.c.b16 %v44, %v43
  %v63 = vunpack.c.l.b16 %v25
  %v64 = vunpack.c.l.b16 %v26
  %v65 = vunpack.c.l.b16 %v27
  %v66 = vunpack.c.l.b16 %v28
  %v67 = vunpack.c.l.b16 %v29
  %v68 = vunpack.c.l.b16 %v30
  %v69 = vunpack.c.l.b16 %v31
  %v70 = vunpack.c.l.b16 %v32
  %v71 = vunpack.c.l.b16 %v33
  %v72 = vunpack.c.l.b16 %v34
  %v73 = vunpack.c.l.b16 %v35
  %v74 = vunpack.c.l.b16 %v36
  %v75 = vunpack.c.l.b16 %v37
  %v76 = vunpack.c.l.b16 %v38
  %v77 = vunpack.c.l.b16 %v39
  %v78 = vunpack.c.l.b16 %v40
  %v79 = vpack.c.b16 %v64, %v63
  %v80 = vpack.c.b16 %v66, %v65
  %v81 = vpack.c.b16 %v68, %v67
  %v82 = vpack.c.b16 %v70, %v69
  %v83 = vpack.c.b16 %v72, %v71
  %v84 = vpack.c.b16 %v74, %v73
  %v85 = vpack.c.b16 %v76, %v75
  %v86 = vpack.c.b16 %v78, %v77
  %95 = vmatprep.subr.bf16.mxu0 0
  %96 = vmatpush1.bf16.msra.mxu0 %v86
  %97 = vmatprep.subr.bf16.mxu0 0
  %98 = vmatpush1.bf16.msra.mxu0 %v85
  %99 = vmatprep.subr.bf16.mxu0 0
  %100 = vmatpush1.bf16.msra.mxu0 %v84
  %101 = vmatprep.subr.bf16.mxu0 0
  %102 = vmatpush1.bf16.msra.mxu0 %v83
  %103 = vmatprep.subr.bf16.mxu0 0
  %104 = vmatpush1.bf16.msra.mxu0 %v82
  %105 = vmatprep.subr.bf16.mxu0 0
  %106 = vmatpush1.bf16.msra.mxu0 %v81
  %107 = vmatprep.subr.bf16.mxu0 0
  %108 = vmatpush1.bf16.msra.mxu0 %v80
  %109 = vmatprep.subr.bf16.mxu0 0
  %110 = vmatpush1.bf16.msra.mxu0 %v79
  %111 = vmatprep.subr.bf16.mxu0 0
  %112 = vmatpush2.bf16.msra.mxu0 0
  %113 = vmatprep.subr.bf16.mxu0 0
  %114 = vmatpush2.bf16.msra.mxu0 0
  %115 = vmatprep.subr.bf16.mxu0 0
  %116 = vmatpush2.bf16.msra.mxu0 0
  %117 = vmatprep.subr.bf16.mxu0 0
  %118 = vmatpush2.bf16.msra.mxu0 0
  %119 = vmatprep.subr.bf16.mxu0 0
  %120 = vmatpush2.bf16.msra.mxu0 0
  %121 = vmatprep.subr.bf16.mxu0 0
  %122 = vmatpush2.bf16.msra.mxu0 0
  %123 = vmatprep.subr.bf16.mxu0 0
  %124 = vmatpush2.bf16.msra.mxu0 0
  %125 = vmatprep.subr.bf16.mxu0 0
  %126 = vmatpush2.bf16.msra.mxu0 0
  %127 = vmatprep.mubr.bf16.mxu0 0
  %128 = vmatmul.mubr.bf16.gmra.mxu0 %v45
  %v129 = vpop.f32.mrf.mxu0
  %v130 = vadd.f32 0.0, %v129
  %v131 = vpop.f32.mrf.mxu0
  %v132 = vpop.f32.mrf.mxu0
  %v133 = vadd.f32 0.0, %v132
  %v134 = vpop.f32.mrf.mxu0
  %135 = vdwg.mxu0
  %v136 = vadd.f32 %v21, %v130
  %v137 = vadd.f32 %v22, %v133
  %138 = vst [vmem:[#allocation2] sm:$0xff] %v136
  %139 = vst [vmem:[#allocation2 + $0x8] sm:$0xff] %v137
  // Predicated region
  $region18: #{decoder_forward.22} parent=0 // pred_check
    %p140 = pneg %p15
  $region19: #{decoder_forward.22} parent=0 // pred_check_branch
    %142 = sbr.rel (%p140) target = $region21
  $region20: #{decoder_forward.22} parent=0 // pred_region
    %v143 = vld [vmem:[#allocation2] sm:$0xff]
    %v144 = vld [vmem:[#allocation2 + $0x8] sm:$0xff]
    %v145 = vld [vmem:[%s2] sm:$0x1]
    %v147 = vlaneseq
    %v148 = vshrl.u32 %v147, 7
    %v149 = vsub.s32 0, %v148
    %v150 = vrot.slane %v145, %v149
    %v152 = vadd.f32 %v143, %v150
    %v153 = vadd.f32 %v144, %v150
    %v154 = vpack.c.bf16 %v153, %v152
    %v156 = vunpack.c.l.b16 %v154
    %v157 = vunpack.c.h.b16 %v154
    %v158 = vpack.c.b16 %v156, %v156
    %v159 = vpack.c.b16 %v157, %v157
    %162 = vst [vmem:[%s3] sm:$0xf] %v158
    %163 = vst [vmem:[%s3 + $0x4] sm:$0xf] %v159
  $region21: #{decoder_forward.22} parent=0 // pred_fallthru
    _
  // Predicated region
  $region22: #{decoder_forward.22} parent=0 // pred_check
    _
  $region23: #{decoder_forward.22} parent=0 // pred_check_branch
    %165 = sbr.rel (0) target = $region25
  $region24: #{decoder_forward.22} parent=0 // pred_region
    _
  $region25: #{decoder_forward.22} parent=0 // pred_fallthru
    _
  // Predicated region
  $region26: #{decoder_forward.22} parent=0 // pred_check
    _
  $region27: #{decoder_forward.22} parent=0 // pred_check_branch
    %167 = sbr.rel (0) target = $region29
  $region28: #{decoder_forward.22} parent=0 // pred_region
    _
  $region29: #{decoder_forward.22} parent=0 // pred_fallthru
    _

// kernel: decoder_forward.19
$region0: #{decoder_forward.19}
  #allocation0 [shape = 'u32[]', space=smem, size = 0x4, offset = 0x4, fixed_abs, tag = 'smem constant byte address 0x4 - core index']
  #allocation1 [shape = 'u32[144,128]{1,0:T(1,128)}', space=vmem, size = 0x12000, scoped, tag = 'internal scratch']
  #allocation2 [shape = 'f32[16,256]{1,0:T(8,128)}', space=vmem, size = 0x4000, scoped, tag = 'scratch operand']
  %s0 = inlined_call_operand.vmem [shape: bf16[16,128], index: 0, kind: input, shape index: {}]
  %s1 = inlined_call_operand.vmem [shape: bf16[128,512], index: 1, kind: input, shape index: {}]
  %s2 = inlined_call_operand.vmem [shape: f32[1,512], index: 2, kind: input, shape index: {}]
  %s3 = inlined_call_operand.vmem [shape: bf16[16,512], index: 3, kind: output, shape index: {}]
  %s4 = sld [smem:[#allocation0]]
  $region125: #{decoder_forward.19} parent=0
    _
  %s6 = ssub.s32 1, %s4
  %s7 = scalar_select 0, %s6, %s4
  $region1: #{decoder_forward.19} parent=0
    #allocation3 [shape = 'u8[131072]{0}', space=vmem, size = 0x20000, scoped, tag = 'input window, operand 1']
    #allocation4 [shape = 'u8[16384]{0}', space=vmem, size = 0x4000, scoped, tag = 'output window, operand 0']
    loop: start=0, step=1, limit=4
    $region2: #{decoder_forward.19} parent=1 // loop_pre_header
      _
    $region3: #{decoder_forward.19} parent=1 // loop_header
      %s9 = sphi 0, %s13
      %p10 = scmp.ge.s32.totalorder %s9, 4
      %s16 = sphi 0, %s35
      %s17 = sphi 0, %s31
      %s18 = sphi 0, %s27
      %s19 = sphi 0, %s16
      %s20 = sphi 0, %s17
      %s21 = sphi 0, %s18
      %s22 = sphi 0, %s19
      %s23 = sphi 0, %s20
      %s24 = sphi 0, %s21
      %s40 = sphi 0, %s42
      %s43 = sphi 0, %s40
      %s44 = sphi 0, %s43
      %s60 = sphi 0, %s44
      %s68 = sphi 0, %s70
      %s71 = sphi 0, %s68
      %s72 = sphi 0, %s71
      %s88 = sphi 0, %s72
      %s94 = sphi 0, %s96
      %s97 = sphi 0, %s94
      %s98 = sphi 0, %s97
      %s114 = sphi 0, %s98
      %s122 = sphi 0, %s124
      %s125 = sphi 0, %s122
      %s126 = sphi 0, %s125
      %s142 = sphi 0, %s126
    $region4: #{decoder_forward.19} parent=1 // loop_header_branch
      %12 = sbr.rel (%p10) target = $region8
    $region5: #{decoder_forward.19} parent=1 // loop_body
      %s14 = ssub.s32 %s9, 1
      %s15 = ssub.s32 %s9, 2
      %s25 = sadd.s32 1, %s18
      %p26 = scmp.ge.s32.totalorder %s25, 1
      %s27 = scalar_select %p26, 0, %s25
      %s28 = sadd.s32 1, %s17
      %s29 = scalar_select %p26, %s28, %s17
      %p30 = scmp.ge.s32.totalorder %s29, 2
      %s31 = scalar_select %p30, 0, %s29
      %s32 = sadd.s32 1, %s16
      %s33 = scalar_select %p30, %s32, %s16
      %p34 = scmp.ge.s32.totalorder %s33, 1
      %s35 = scalar_select %p34, 0, %s33
      %s36 = ssub.s32 %s16, %s35
      %s37 = ssub.s32 %s18, %s27
      %s38 = sor.u32 %s36, %s37
      %p39 = scmp.eq.s32.totalorder %s38, 0
      %s41 = sadd.s32 %s40, 1
      %s42 = scalar_select %p39, %s40, %s41
      %p45 = pneg %p39
      %p46 = scmp.eq.s32.totalorder %s9, 1
      %p47 = por %p45, %p46
      %p48 = scmp.ne.s32.totalorder %s40, %s43
      %p49 = scmp.eq.s32.totalorder %s9, 0
      %p50 = por %p48, %p49
      %p51 = scmp.ne.s32.totalorder %s40, %s43
      %p52 = scmp.eq.s32.totalorder %s14, 1
      %p53 = por %p51, %p52
      %p54 = scmp.ne.s32.totalorder %s43, %s44
      %p55 = scmp.eq.s32.totalorder %s14, 0
      %p56 = por %p54, %p55
      %p57 = scmp.ne.s32.totalorder %s43, %s44
      %p58 = scmp.eq.s32.totalorder %s15, 1
      %p59 = por %p57, %p58
      %p61 = scmp.ne.s32.totalorder %s44, %s60
      %p62 = scmp.eq.s32.totalorder %s15, 0
      %p63 = por %p61, %p62
      %s64 = ssub.s32 %s18, %s27
      %s65 = ssub.s32 %s17, %s31
      %s66 = sor.u32 %s64, %s65
      %p67 = scmp.eq.s32.totalorder %s66, 0
      %s69 = sadd.s32 %s68, 1
      %s70 = scalar_select %p67, %s68, %s69
      %p73 = pneg %p67
      %p74 = scmp.eq.s32.totalorder %s9, 1
      %p75 = por %p73, %p74
      %p76 = scmp.ne.s32.totalorder %s68, %s71
      %p77 = scmp.eq.s32.totalorder %s9, 0
      %p78 = por %p76, %p77
      %p79 = scmp.ne.s32.totalorder %s68, %s71
      %p80 = scmp.eq.s32.totalorder %s14, 1
      %p81 = por %p79, %p80
      %p82 = scmp.ne.s32.totalorder %s71, %s72
      %p83 = scmp.eq.s32.totalorder %s14, 0
      %p84 = por %p82, %p83
      %p85 = scmp.ne.s32.totalorder %s71, %s72
      %p86 = scmp.eq.s32.totalorder %s15, 1
      %p87 = por %p85, %p86
      %p89 = scmp.ne.s32.totalorder %s72, %s88
      %p90 = scmp.eq.s32.totalorder %s15, 0
      %p91 = por %p89, %p90
      %s92 = ssub.s32 %s17, %s31
      %p93 = scmp.eq.s32.totalorder %s92, 0
      %s95 = sadd.s32 %s94, 1
      %s96 = scalar_select %p93, %s94, %s95
      %p99 = pneg %p93
      %p100 = scmp.eq.s32.totalorder %s9, 1
      %p101 = por %p99, %p100
      %p102 = scmp.ne.s32.totalorder %s94, %s97
      %p103 = scmp.eq.s32.totalorder %s9, 0
      %p104 = por %p102, %p103
      %p105 = scmp.ne.s32.totalorder %s94, %s97
      %p106 = scmp.eq.s32.totalorder %s14, 1
      %p107 = por %p105, %p106
      %p108 = scmp.ne.s32.totalorder %s97, %s98
      %p109 = scmp.eq.s32.totalorder %s14, 0
      %p110 = por %p108, %p109
      %p111 = scmp.ne.s32.totalorder %s97, %s98
      %p112 = scmp.eq.s32.totalorder %s15, 1
      %p113 = por %p111, %p112
      %p115 = scmp.ne.s32.totalorder %s98, %s114
      %p116 = scmp.eq.s32.totalorder %s15, 0
      %p117 = por %p115, %p116
      %s118 = ssub.s32 %s16, %s35
      %s119 = ssub.s32 %s17, %s31
      %s120 = sor.u32 %s118, %s119
      %p121 = scmp.eq.s32.totalorder %s120, 0
      %s123 = sadd.s32 %s122, 1
      %s124 = scalar_select %p121, %s122, %s123
      %p127 = pneg %p121
      %p128 = scmp.eq.s32.totalorder %s9, 1
      %p129 = por %p127, %p128
      %p130 = scmp.ne.s32.totalorder %s122, %s125
      %p131 = scmp.eq.s32.totalorder %s9, 0
      %p132 = por %p130, %p131
      %p133 = scmp.ne.s32.totalorder %s122, %s125
      %p134 = scmp.eq.s32.totalorder %s14, 1
      %p135 = por %p133, %p134
      %p136 = scmp.ne.s32.totalorder %s125, %s126
      %p137 = scmp.eq.s32.totalorder %s14, 0
      %p138 = por %p136, %p137
      %p139 = scmp.ne.s32.totalorder %s125, %s126
      %p140 = scmp.eq.s32.totalorder %s15, 1
      %p141 = por %p139, %p140
      %p143 = scmp.ne.s32.totalorder %s126, %s142
      %p144 = scmp.eq.s32.totalorder %s15, 0
      %p145 = por %p143, %p144
      %p146 = scmp.le.s32.totalorder 1, %s9
      %p147 = scmp.lt.s32.totalorder %s9, 3
      %p148 = pnand %p146, %p147
      %p149 = pneg %p148
      // Predicated region
      $region9: #{decoder_forward.19} parent=5 // pred_check
        _
      $region10: #{decoder_forward.19} parent=5 // pred_check_branch
        %151 = sbr.rel (%p148) target = $region12
      $region11: #{decoder_forward.19} parent=5 // pred_region
        %s152 = ssub.s32 %s9, 1
        // Predicated region
        $region13: #{decoder_forward.19} parent=11 // pred_check
          %p153 = pneg %p56
        $region14: #{decoder_forward.19} parent=11 // pred_check_branch
          %155 = sbr.rel (%p153) target = $region16
        $region15: #{decoder_forward.19} parent=11 // pred_region
          %s156 = smul.u32 2, %s19
          %p157 = scmp.lt.s32.totalorder %s156, 1
          %s158 = scalar_select %p157, %s156, 1
          %p159 = scmp.lt.s32.totalorder %s21, 0
          %s160 = scalar_select %p159, %s21, 0
          %s161 = sadd.s32 %s160, %s158
          %s162 = smul.addr %s161, 4
          %s163 = scalar_lea.vmem %s0, %s162
          %s164 = smul.u32 2, %s19
        $region16: #{decoder_forward.19} parent=11 // pred_fallthru
          _
      $region12: #{decoder_forward.19} parent=5 // pred_fallthru
        _
      %p165 = scmp.lt.s32.totalorder %s9, 2
      // Predicated region
      $region17: #{decoder_forward.19} parent=5 // pred_check
        %p166 = pneg %p165
      $region18: #{decoder_forward.19} parent=5 // pred_check_branch
        %168 = sbr.rel (%p166) target = $region20
      $region19: #{decoder_forward.19} parent=5 // pred_region
        // Predicated region
        $region21: #{decoder_forward.19} parent=19 // pred_check
          %p169 = pneg %p78
        $region22: #{decoder_forward.19} parent=19 // pred_check_branch
          %171 = sbr.rel (%p169) target = $region24
        $region23: #{decoder_forward.19} parent=19 // pred_region
          %s172 = sand.u32 %s68, 1
          %s173 = sand.u32 %s68, 1
          %s174 = smul.addr %s173, 128
          %s175 = scalar_lea.vmem [#allocation3], %s174
          %s176 = smul.u32 16, %s18
          %s177 = smul.u32 2, %s17
          %s178 = smul.addr %s176, 4
          %s179 = sadd.s32 %s177, %s178
          %s180 = smul.addr %s179, 4
          %s181 = scalar_lea.vmem %s1, %s180
          // Predicated region
          $region25: #{decoder_forward.19} parent=23 // pred_check
            _
          $region26: #{decoder_forward.19} parent=23 // pred_check_branch
            %183 = sbr.rel (0) target = $region28
          $region27: #{decoder_forward.19} parent=23 // pred_region
            // Predicated region
            $region29: #{decoder_forward.19} parent=27 // pred_check
              _
            $region30: #{decoder_forward.19} parent=27 // pred_check_branch
              %185 = sbr.rel (0) target = $region32
            $region31: #{decoder_forward.19} parent=27 // pred_region
              // Predicated region
              $region44: #{decoder_forward.19} parent=31 // pred_check
                _
              $region45: #{decoder_forward.19} parent=31 // pred_check_branch
                %231 = sbr.rel (0) target = $region47
              $region46: #{decoder_forward.19} parent=31 // pred_region
                loop: start=0, step=1, limit=1
                $region48: #{decoder_forward.19} parent=46 // loop_pre_header
                  _
                $region49: #{decoder_forward.19} parent=46 // loop_header
                  %s233 = sphi 0, %s237
                  %p234 = scmp.ge.s32.totalorder %s233, 1
                  %s238 = sphi %s181, %s181
                  %s239 = sphi %s175, %s175
                $region50: #{decoder_forward.19} parent=46 // loop_header_branch
                  %236 = sbr.rel (%p234) target = $region54
                $region51: #{decoder_forward.19} parent=46 // loop_body
                  %v240 = vld [vmem:[%s238] sm:$0xff]
                  %241 = vst [vmem:[%s239] sm:$0xff] %v240
                  %v242 = vld [vmem:[%s238 + $0x10] sm:$0xff]
                  %243 = vst [vmem:[%s239 + $0x8] sm:$0xff] %v242
                  %v244 = vld [vmem:[%s238 + $0x20] sm:$0xff]
                  %245 = vst [vmem:[%s239 + $0x10] sm:$0xff] %v244
                  %v246 = vld [vmem:[%s238 + $0x30] sm:$0xff]
                  %247 = vst [vmem:[%s239 + $0x18] sm:$0xff] %v246
                  %v248 = vld [vmem:[%s238 + $0x40] sm:$0xff]
                  %249 = vst [vmem:[%s239 + $0x20] sm:$0xff] %v248
                  %v250 = vld [vmem:[%s238 + $0x50] sm:$0xff]
                  %251 = vst [vmem:[%s239 + $0x28] sm:$0xff] %v250
                  %v252 = vld [vmem:[%s238 + $0x60] sm:$0xff]
                  %253 = vst [vmem:[%s239 + $0x30] sm:$0xff] %v252
                  %v254 = vld [vmem:[%s238 + $0x70] sm:$0xff]
                  %255 = vst [vmem:[%s239 + $0x38] sm:$0xff] %v254
                  %v256 = vld [vmem:[%s238 + $0x80] sm:$0xff]
                  %257 = vst [vmem:[%s239 + $0x40] sm:$0xff] %v256
                  %v258 = vld [vmem:[%s238 + $0x90] sm:$0xff]
                  %259 = vst [vmem:[%s239 + $0x48] sm:$0xff] %v258
                  %v260 = vld [vmem:[%s238 + $0xa0] sm:$0xff]
                  %261 = vst [vmem:[%s239 + $0x50] sm:$0xff] %v260
                  %v262 = vld [vmem:[%s238 + $0xb0] sm:$0xff]
                  %263 = vst [vmem:[%s239 + $0x58] sm:$0xff] %v262
                  %v264 = vld [vmem:[%s238 + $0xc0] sm:$0xff]
                  %265 = vst [vmem:[%s239 + $0x60] sm:$0xff] %v264
                  %v266 = vld [vmem:[%s238 + $0xd0] sm:$0xff]
                  %267 = vst [vmem:[%s239 + $0x68] sm:$0xff] %v266
                  %v268 = vld [vmem:[%s238 + $0xe0] sm:$0xff]
                  %269 = vst [vmem:[%s239 + $0x70] sm:$0xff] %v268
                  %v270 = vld [vmem:[%s238 + $0xf0] sm:$0xff]
                  %271 = vst [vmem:[%s239 + $0x78] sm:$0xff] %v270
                $region52: #{decoder_forward.19} parent=46 // loop_footer
                  %s237 = sadd.s32 1, %s233
                $region53: #{decoder_forward.19} parent=46 // loop_footer_branch
                  %232 = sbr.rel target = $region49
                $region54: #{decoder_forward.19} parent=46 // loop_exit
                  _
              $region47: #{decoder_forward.19} parent=31 // pred_fallthru
                _
              // Predicated region
              $region55: #{decoder_forward.19} parent=31 // pred_check
                _
              $region56: #{decoder_forward.19} parent=31 // pred_check_branch
                %273 = sbr.rel target = $region58
              $region57: #{decoder_forward.19} parent=31 // pred_region
                _
              $region58: #{decoder_forward.19} parent=31 // pred_fallthru
                _
            $region32: #{decoder_forward.19} parent=27 // pred_fallthru
              _
            // Predicated region
            $region33: #{decoder_forward.19} parent=27 // pred_check
              _
            $region34: #{decoder_forward.19} parent=27 // pred_check_branch
              %187 = sbr.rel target = $region36
            $region35: #{decoder_forward.19} parent=27 // pred_region
              %s189 = ssub.s32 256, 1
              loop: start=0, step=1, limit=1
              $region37: #{decoder_forward.19} parent=35 // loop_pre_header
                _
              $region38: #{decoder_forward.19} parent=35 // loop_header
                %s191 = sphi 0, %s195
                %p192 = scmp.ge.s32.totalorder %s191, 1
                %s196 = sphi %s181, %s181
                %s197 = sphi %s175, %s175
              $region39: #{decoder_forward.19} parent=35 // loop_header_branch
                %194 = sbr.rel (%p192) target = $region43
              $region40: #{decoder_forward.19} parent=35 // loop_body
                %v198 = vld [vmem:[%s196] sm:%s189]
                %199 = vst [vmem:[%s197] sm:%s189] %v198
                %v200 = vld [vmem:[%s196 + $0x10] sm:%s189]
                %201 = vst [vmem:[%s197 + $0x8] sm:%s189] %v200
                %v202 = vld [vmem:[%s196 + $0x20] sm:%s189]
                %203 = vst [vmem:[%s197 + $0x10] sm:%s189] %v202
                %v204 = vld [vmem:[%s196 + $0x30] sm:%s189]
                %205 = vst [vmem:[%s197 + $0x18] sm:%s189] %v204
                %v206 = vld [vmem:[%s196 + $0x40] sm:%s189]
                %207 = vst [vmem:[%s197 + $0x20] sm:%s189] %v206
                %v208 = vld [vmem:[%s196 + $0x50] sm:%s189]
                %209 = vst [vmem:[%s197 + $0x28] sm:%s189] %v208
                %v210 = vld [vmem:[%s196 + $0x60] sm:%s189]
                %211 = vst [vmem:[%s197 + $0x30] sm:%s189] %v210
                %v212 = vld [vmem:[%s196 + $0x70] sm:%s189]
                %213 = vst [vmem:[%s197 + $0x38] sm:%s189] %v212
                %v214 = vld [vmem:[%s196 + $0x80] sm:%s189]
                %215 = vst [vmem:[%s197 + $0x40] sm:%s189] %v214
                %v216 = vld [vmem:[%s196 + $0x90] sm:%s189]
                %217 = vst [vmem:[%s197 + $0x48] sm:%s189] %v216
                %v218 = vld [vmem:[%s196 + $0xa0] sm:%s189]
                %219 = vst [vmem:[%s197 + $0x50] sm:%s189] %v218
                %v220 = vld [vmem:[%s196 + $0xb0] sm:%s189]
                %221 = vst [vmem:[%s197 + $0x58] sm:%s189] %v220
                %v222 = vld [vmem:[%s196 + $0xc0] sm:%s189]
                %223 = vst [vmem:[%s197 + $0x60] sm:%s189] %v222
                %v224 = vld [vmem:[%s196 + $0xd0] sm:%s189]
                %225 = vst [vmem:[%s197 + $0x68] sm:%s189] %v224
                %v226 = vld [vmem:[%s196 + $0xe0] sm:%s189]
                %227 = vst [vmem:[%s197 + $0x70] sm:%s189] %v226
                %v228 = vld [vmem:[%s196 + $0xf0] sm:%s189]
                %229 = vst [vmem:[%s197 + $0x78] sm:%s189] %v228
              $region41: #{decoder_forward.19} parent=35 // loop_footer
                %s195 = sadd.s32 1, %s191
              $region42: #{decoder_forward.19} parent=35 // loop_footer_branch
                %190 = sbr.rel target = $region38
              $region43: #{decoder_forward.19} parent=35 // loop_exit
                _
            $region36: #{decoder_forward.19} parent=27 // pred_fallthru
              _
          $region28: #{decoder_forward.19} parent=23 // pred_fallthru
            _
          %274 = vnop
        $region24: #{decoder_forward.19} parent=19 // pred_fallthru
          _
        // Predicated region
        $region59: #{decoder_forward.19} parent=19 // pred_check
          %p275 = pneg %p104
        $region60: #{decoder_forward.19} parent=19 // pred_check_branch
          %277 = sbr.rel (%p275) target = $region62
        $region61: #{decoder_forward.19} parent=19 // pred_region
          %s278 = smul.u32 2, %s17
          %p279 = scmp.lt.s32.totalorder %s278, 3
          %s280 = scalar_select %p279, %s278, 3
          %s281 = scalar_lea.vmem %s2, %s280
          %s282 = smul.u32 2, %s17
        $region62: #{decoder_forward.19} parent=19 // pred_fallthru
          _
      $region20: #{decoder_forward.19} parent=5 // pred_fallthru
        _
      %p283 = scmp.le.s32.totalorder 1, %s9
      %p284 = scmp.lt.s32.totalorder %s9, 3
      %p285 = pnand %p283, %p284
      %p286 = pneg %p285
      // Predicated region
      $region63: #{decoder_forward.19} parent=5 // pred_check
        _
      $region64: #{decoder_forward.19} parent=5 // pred_check_branch
        %288 = sbr.rel (%p285) target = $region66
      $region65: #{decoder_forward.19} parent=5 // pred_region
        %s289 = ssub.s32 %s9, 1
        %s290 = sand.u32 %s71, 1
        %s291 = sand.u32 %s71, 1
        %s292 = smul.addr %s291, 128
        %s293 = scalar_lea.vmem [#allocation3], %s292
        // Predicated region
        $region67: #{decoder_forward.19} parent=65 // pred_check
          %p294 = pneg %p84
        $region68: #{decoder_forward.19} parent=65 // pred_check_branch
          %296 = sbr.rel (%p294) target = $region70
        $region69: #{decoder_forward.19} parent=65 // pred_region
          _
        $region70: #{decoder_forward.19} parent=65 // pred_fallthru
          _
        %s297 = smul.u32 2, %s19
        %p298 = scmp.lt.s32.totalorder %s297, 1
        %s299 = scalar_select %p298, %s297, 1
        %p300 = scmp.lt.s32.totalorder %s21, 0
        %s301 = scalar_select %p300, %s21, 0
        %s302 = sadd.s32 %s301, %s299
        %s303 = smul.addr %s302, 4
        %s304 = scalar_lea.vmem %s0, %s303
        %p305 = pneg %p56
        %p306 = pneg %p53
        %s307 = sand.u32 %s71, 1
        %s308 = sand.u32 %s71, 1
        %s309 = smul.addr %s308, 128
        %s310 = scalar_lea.vmem [#allocation3], %s309
        %p311 = pneg %p84
        %p312 = pneg %p81
        %s313 = smul.u32 2, %s20
        %p314 = scmp.lt.s32.totalorder %s313, 3
        %s315 = scalar_select %p314, %s313, 3
        %s316 = scalar_lea.vmem %s2, %s315
        %p317 = pneg %p110
        %p318 = pneg %p107
        %p319 = pneg %p138
        %p320 = pneg %p135
        %s321 = sand.u32 %s125, 1
        %s322 = sand.u32 %s125, 1
        %s323 = smul.addr %s322, 16
        %s324 = scalar_lea.vmem [#allocation4], %s323
        %s325 = smul.u32 2, %s19
        %p326 = scmp.lt.s32.totalorder %s325, 1
        %s327 = scalar_select %p326, %s325, 1
        %p328 = scmp.lt.s32.totalorder %s21, 0
        %s329 = scalar_select %p328, %s21, 0
        %s330 = sadd.s32 %s329, %s327
        %s331 = smul.addr %s330, 4
        %s332 = scalar_lea.vmem %s0, %s331
        %s333 = smul.u32 2, %s19
        %s334 = smul.u32 16, %s21
        %s335 = smul.u32 2, %s20
        %s336 = smul.u32 2, %s20
        %p337 = scmp.lt.s32.totalorder %s336, 3
        %s338 = scalar_select %p337, %s336, 3
        %s339 = scalar_lea.vmem %s2, %s338
        %s340 = smul.u32 2, %s20
        %s341 = smul.u32 2, %s19
        %s342 = smul.u32 2, %s20
        %p344 = scmp.eq.s32.totalorder %s21, 0
        // Predicated region
        $region71: #{decoder_forward.19} parent=65 // pred_check
          %p345 = pneg %p344
        $region72: #{decoder_forward.19} parent=65 // pred_check_branch
          %347 = sbr.rel (%p345) target = $region74
        $region73: #{decoder_forward.19} parent=65 // pred_region
          %348 = vst [vmem:[#allocation2] sm:$0xff] 0.0
          %349 = vst [vmem:[#allocation2 + $0x8] sm:$0xff] 0.0
          %350 = vst [vmem:[#allocation2 + $0x10] sm:$0xff] 0.0
          %351 = vst [vmem:[#allocation2 + $0x18] sm:$0xff] 0.0
        $region74: #{decoder_forward.19} parent=65 // pred_fallthru
          _
        %v352 = vld [vmem:[#allocation2] sm:$0xff]
        %v353 = vld [vmem:[#allocation2 + $0x8] sm:$0xff]
        %v354 = vld [vmem:[#allocation2 + $0x10] sm:$0xff]
        %v355 = vld [vmem:[#allocation2 + $0x18] sm:$0xff]
        %v356 = vld [vmem:[%s332] sm:$0xf]
        %v357 = vld [vmem:[%s332 + $0x4] sm:$0xf]
        %v358 = vld [vmem:[%s293] sm:$0xff]
        %v359 = vld [vmem:[%s293 + $0x8] sm:$0xff]
        %v360 = vld [vmem:[%s293 + $0x10] sm:$0xff]
        %v361 = vld [vmem:[%s293 + $0x18] sm:$0xff]
        %v362 = vld [vmem:[%s293 + $0x20] sm:$0xff]
        %v363 = vld [vmem:[%s293 + $0x28] sm:$0xff]
        %v364 = vld [vmem:[%s293 + $0x30] sm:$0xff]
        %v365 = vld [vmem:[%s293 + $0x38] sm:$0xff]
        %v366 = vld [vmem:[%s293 + $0x40] sm:$0xff]
        %v367 = vld [vmem:[%s293 + $0x48] sm:$0xff]
        %v368 = vld [vmem:[%s293 + $0x50] sm:$0xff]
        %v369 = vld [vmem:[%s293 + $0x58] sm:$0xff]
        %v370 = vld [vmem:[%s293 + $0x60] sm:$0xff]
        %v371 = vld [vmem:[%s293 + $0x68] sm:$0xff]
        %v372 = vld [vmem:[%s293 + $0x70] sm:$0xff]
        %v373 = vld [vmem:[%s293 + $0x78] sm:$0xff]
        %v376 = vunpack.c.l.b16 %v356
        %v377 = vunpack.c.l.b16 %v357
        %v378 = vpack.c.b16 %v377, %v376
        %v396 = vunpack.c.l.b16 %v358
        %v397 = vunpack.c.h.b16 %v358
        %v398 = vunpack.c.l.b16 %v359
        %v399 = vunpack.c.h.b16 %v359
        %v400 = vunpack.c.l.b16 %v360
        %v401 = vunpack.c.h.b16 %v360
        %v402 = vunpack.c.l.b16 %v361
        %v403 = vunpack.c.h.b16 %v361
        %v404 = vunpack.c.l.b16 %v362
        %v405 = vunpack.c.h.b16 %v362
        %v406 = vunpack.c.l.b16 %v363
        %v407 = vunpack.c.h.b16 %v363
        %v408 = vunpack.c.l.b16 %v364
        %v409 = vunpack.c.h.b16 %v364
        %v410 = vunpack.c.l.b16 %v365
        %v411 = vunpack.c.h.b16 %v365
        %v412 = vunpack.c.l.b16 %v366
        %v413 = vunpack.c.h.b16 %v366
        %v414 = vunpack.c.l.b16 %v367
        %v415 = vunpack.c.h.b16 %v367
        %v416 = vunpack.c.l.b16 %v368
        %v417 = vunpack.c.h.b16 %v368
        %v418 = vunpack.c.l.b16 %v369
        %v419 = vunpack.c.h.b16 %v369
        %v420 = vunpack.c.l.b16 %v370
        %v421 = vunpack.c.h.b16 %v370
        %v422 = vunpack.c.l.b16 %v371
        %v423 = vunpack.c.h.b16 %v371
        %v424 = vunpack.c.l.b16 %v372
        %v425 = vunpack.c.h.b16 %v372
        %v426 = vunpack.c.l.b16 %v373
        %v427 = vunpack.c.h.b16 %v373
        %v428 = vpack.c.b16 %v398, %v396
        %v429 = vpack.c.b16 %v399, %v397
        %v430 = vpack.c.b16 %v402, %v400
        %v431 = vpack.c.b16 %v403, %v401
        %v432 = vpack.c.b16 %v406, %v404
        %v433 = vpack.c.b16 %v407, %v405
        %v434 = vpack.c.b16 %v410, %v408
        %v435 = vpack.c.b16 %v411, %v409
        %v436 = vpack.c.b16 %v414, %v412
        %v437 = vpack.c.b16 %v415, %v413
        %v438 = vpack.c.b16 %v418, %v416
        %v439 = vpack.c.b16 %v419, %v417
        %v440 = vpack.c.b16 %v422, %v420
        %v441 = vpack.c.b16 %v423, %v421
        %v442 = vpack.c.b16 %v426, %v424
        %v443 = vpack.c.b16 %v427, %v425
        %460 = vmatprep.subr.bf16.mxu0 %v443
        %461 = vmatpush1.bf16.msra.mxu0 %v442
        %462 = vmatprep.subr.bf16.mxu0 %v441
        %463 = vmatpush1.bf16.msra.mxu0 %v440
        %464 = vmatprep.subr.bf16.mxu0 %v439
        %465 = vmatpush1.bf16.msra.mxu0 %v438
        %466 = vmatprep.subr.bf16.mxu0 %v437
        %467 = vmatpush1.bf16.msra.mxu0 %v436
        %468 = vmatprep.subr.bf16.mxu0 %v435
        %469 = vmatpush1.bf16.msra.mxu0 %v434
        %470 = vmatprep.subr.bf16.mxu0 %v433
        %471 = vmatpush1.bf16.msra.mxu0 %v432
        %472 = vmatprep.subr.bf16.mxu0 %v431
        %473 = vmatpush1.bf16.msra.mxu0 %v430
        %474 = vmatprep.subr.bf16.mxu0 %v429
        %475 = vmatpush1.bf16.msra.mxu0 %v428
        %476 = vmatprep.subr.bf16.mxu0 0
        %477 = vmatpush2.bf16.msra.mxu0 0
        %478 = vmatprep.subr.bf16.mxu0 0
        %479 = vmatpush2.bf16.msra.mxu0 0
        %480 = vmatprep.subr.bf16.mxu0 0
        %481 = vmatpush2.bf16.msra.mxu0 0
        %482 = vmatprep.subr.bf16.mxu0 0
        %483 = vmatpush2.bf16.msra.mxu0 0
        %484 = vmatprep.subr.bf16.mxu0 0
        %485 = vmatpush2.bf16.msra.mxu0 0
        %486 = vmatprep.subr.bf16.mxu0 0
        %487 = vmatpush2.bf16.msra.mxu0 0
        %488 = vmatprep.subr.bf16.mxu0 0
        %489 = vmatpush2.bf16.msra.mxu0 0
        %490 = vmatprep.subr.bf16.mxu0 0
        %491 = vmatpush2.bf16.msra.mxu0 0
        %492 = vmatprep.mubr.bf16.mxu0 0
        %493 = vmatmul.mubr.bf16.gmra.mxu0 %v378
        %v494 = vpop.f32.mrf.mxu0
        %v495 = vadd.f32 0.0, %v494
        %v496 = vpop.f32.mrf.mxu0
        %v497 = vadd.f32 0.0, %v496
        %v498 = vpop.f32.mrf.mxu0
        %v499 = vadd.f32 0.0, %v498
        %v500 = vpop.f32.mrf.mxu0
        %v501 = vadd.f32 0.0, %v500
        %502 = vdwg.mxu0
        %v503 = vadd.f32 %v352, %v495
        %v504 = vadd.f32 %v353, %v497
        %v505 = vadd.f32 %v354, %v499
        %v506 = vadd.f32 %v355, %v501
        %507 = vst [vmem:[#allocation2] sm:$0xff] %v503
        %508 = vst [vmem:[#allocation2 + $0x8] sm:$0xff] %v504
        %509 = vst [vmem:[#allocation2 + $0x10] sm:$0xff] %v505
        %510 = vst [vmem:[#allocation2 + $0x18] sm:$0xff] %v506
        // Predicated region
        $region75: #{decoder_forward.19} parent=65 // pred_check
          %p511 = pneg %p344
        $region76: #{decoder_forward.19} parent=65 // pred_check_branch
          %513 = sbr.rel (%p511) target = $region78
        $region77: #{decoder_forward.19} parent=65 // pred_region
          %v514 = vld [vmem:[#allocation2] sm:$0xff]
          %v515 = vld [vmem:[#allocation2 + $0x8] sm:$0xff]
          %v516 = vld [vmem:[#allocation2 + $0x10] sm:$0xff]
          %v517 = vld [vmem:[#allocation2 + $0x18] sm:$0xff]
          %v518 = vld [vmem:[%s339] sm:$0x3]
          %v520 = vlaneseq
          %v521 = vshrl.u32 %v520, 7
          %v522 = vsub.s32 0, %v521
          %v523 = vrot.slane %v518, %v522
          %v524 = vlaneseq
          %v525 = vshrl.u32 %v524, 7
          %v526 = vsub.s32 1, %v525
          %v527 = vrot.slane %v518, %v526
          %v530 = vadd.f32 %v514, %v523
          %v531 = vadd.f32 %v515, %v527
          %v532 = vadd.f32 %v516, %v523
          %v533 = vadd.f32 %v517, %v527
          %v534 = vpack.c.bf16 %v532, %v530
          %v535 = vpack.c.bf16 %v533, %v531
          %v538 = vunpack.c.l.b16 %v534
          %v539 = vunpack.c.l.b16 %v535
          %v540 = vunpack.c.h.b16 %v534
          %v541 = vunpack.c.h.b16 %v535
          %v542 = vpack.c.b16 %v539, %v538
          %v543 = vpack.c.b16 %v541, %v540
          %546 = vst [vmem:[%s324] sm:$0xff] %v542
          %547 = vst [vmem:[%s324 + $0x8] sm:$0xff] %v543
        $region78: #{decoder_forward.19} parent=65 // pred_fallthru
          _
        %s548 = sand.u32 %s125, 1
        %s549 = sand.u32 %s125, 1
        %s550 = smul.addr %s549, 16
        %s551 = scalar_lea.vmem [#allocation4], %s550
        // Predicated region
        $region79: #{decoder_forward.19} parent=65 // pred_check
          %p552 = pneg %p135
        $region80: #{decoder_forward.19} parent=65 // pred_check_branch
          %554 = sbr.rel (%p552) target = $region82
        $region81: #{decoder_forward.19} parent=65 // pred_region
          %s555 = smul.u32 2, %s19
          %s556 = smul.u32 2, %s20
          %s557 = smul.addr %s555, 4
          %s558 = sadd.s32 %s556, %s557
          %s559 = smul.addr %s558, 4
          %s560 = scalar_lea.vmem %s3, %s559
          // Predicated region
          $region83: #{decoder_forward.19} parent=81 // pred_check
            _
          $region84: #{decoder_forward.19} parent=81 // pred_check_branch
            %562 = sbr.rel (0) target = $region86
          $region85: #{decoder_forward.19} parent=81 // pred_region
            // Predicated region
            $region87: #{decoder_forward.19} parent=85 // pred_check
              _
            $region88: #{decoder_forward.19} parent=85 // pred_check_branch
              %564 = sbr.rel (0) target = $region90
            $region89: #{decoder_forward.19} parent=85 // pred_region
              // Predicated region
              $region102: #{decoder_forward.19} parent=89 // pred_check
                _
              $region103: #{decoder_forward.19} parent=89 // pred_check_branch
                %582 = sbr.rel (0) target = $region105
              $region104: #{decoder_forward.19} parent=89 // pred_region
                loop: start=0, step=1, limit=1
                $region106: #{decoder_forward.19} parent=104 // loop_pre_header
                  _
                $region107: #{decoder_forward.19} parent=104 // loop_header
                  %s584 = sphi 0, %s588
                  %p585 = scmp.ge.s32.totalorder %s584, 1
                  %s589 = sphi %s551, %s551
                  %s590 = sphi %s560, %s560
                $region108: #{decoder_forward.19} parent=104 // loop_header_branch
                  %587 = sbr.rel (%p585) target = $region112
                $region109: #{decoder_forward.19} parent=104 // loop_body
                  %v591 = vld [vmem:[%s589] sm:$0xff]
                  %592 = vst [vmem:[%s590] sm:$0xff] %v591
                  %v593 = vld [vmem:[%s589 + $0x8] sm:$0xff]
                  %594 = vst [vmem:[%s590 + $0x10] sm:$0xff] %v593
                $region110: #{decoder_forward.19} parent=104 // loop_footer
                  %s588 = sadd.s32 1, %s584
                $region111: #{decoder_forward.19} parent=104 // loop_footer_branch
                  %583 = sbr.rel target = $region107
                $region112: #{decoder_forward.19} parent=104 // loop_exit
                  _
              $region105: #{decoder_forward.19} parent=89 // pred_fallthru
                _
              // Predicated region
              $region113: #{decoder_forward.19} parent=89 // pred_check
                _
              $region114: #{decoder_forward.19} parent=89 // pred_check_branch
                %596 = sbr.rel target = $region116
              $region115: #{decoder_forward.19} parent=89 // pred_region
                _
              $region116: #{decoder_forward.19} parent=89 // pred_fallthru
                _
            $region90: #{decoder_forward.19} parent=85 // pred_fallthru
              _
            // Predicated region
            $region91: #{decoder_forward.19} parent=85 // pred_check
              _
            $region92: #{decoder_forward.19} parent=85 // pred_check_branch
              %566 = sbr.rel target = $region94
            $region93: #{decoder_forward.19} parent=85 // pred_region
              %s568 = ssub.s32 256, 1
              loop: start=0, step=1, limit=1
              $region95: #{decoder_forward.19} parent=93 // loop_pre_header
                _
              $region96: #{decoder_forward.19} parent=93 // loop_header
                %s570 = sphi 0, %s574
                %p571 = scmp.ge.s32.totalorder %s570, 1
                %s575 = sphi %s551, %s551
                %s576 = sphi %s560, %s560
              $region97: #{decoder_forward.19} parent=93 // loop_header_branch
                %573 = sbr.rel (%p571) target = $region101
              $region98: #{decoder_forward.19} parent=93 // loop_body
                %v577 = vld [vmem:[%s575] sm:%s568]
                %578 = vst [vmem:[%s576] sm:%s568] %v577
                %v579 = vld [vmem:[%s575 + $0x8] sm:%s568]
                %580 = vst [vmem:[%s576 + $0x10] sm:%s568] %v579
              $region99: #{decoder_forward.19} parent=93 // loop_footer
                %s574 = sadd.s32 1, %s570
              $region100: #{decoder_forward.19} parent=93 // loop_footer_branch
                %569 = sbr.rel target = $region96
              $region101: #{decoder_forward.19} parent=93 // loop_exit
                _
            $region94: #{decoder_forward.19} parent=85 // pred_fallthru
              _
          $region86: #{decoder_forward.19} parent=81 // pred_fallthru
            _
          %597 = vnop
        $region82: #{decoder_forward.19} parent=65 // pred_fallthru
          _
      $region66: #{decoder_forward.19} parent=5 // pred_fallthru
        _
      %p598 = scmp.le.s32.totalorder 2, %s9
      // Predicated region
      $region117: #{decoder_forward.19} parent=5 // pred_check
        %p599 = pneg %p598
      $region118: #{decoder_forward.19} parent=5 // pred_check_branch
        %601 = sbr.rel (%p599) target = $region120
      $region119: #{decoder_forward.19} parent=5 // pred_region
        %s602 = ssub.s32 %s9, 2
        // Predicated region
        $region121: #{decoder_forward.19} parent=119 // pred_check
          %p603 = pneg %p141
        $region122: #{decoder_forward.19} parent=119 // pred_check_branch
          %605 = sbr.rel (%p603) target = $region124
        $region123: #{decoder_forward.19} parent=119 // pred_region
          %s606 = sand.u32 %s126, 1
          %s607 = sand.u32 %s126, 1
          %s608 = smul.addr %s607, 16
          %s609 = scalar_lea.vmem [#allocation4], %s608
        $region124: #{decoder_forward.19} parent=119 // pred_fallthru
          _
      $region120: #{decoder_forward.19} parent=5 // pred_fallthru
        _
    $region6: #{decoder_forward.19} parent=1 // loop_footer
      %s13 = sadd.s32 1, %s9
    $region7: #{decoder_forward.19} parent=1 // loop_footer_branch
      %8 = sbr.rel target = $region3
    $region8: #{decoder_forward.19} parent=1 // loop_exit
      _

// kernel: decoder_forward.20
$region0: #{decoder_forward.20}
  #allocation0 [shape = 'u32[]', space=smem, size = 0x4, offset = 0x4, fixed_abs, tag = 'smem constant byte address 0x4 - core index']
  #allocation1 [shape = 'u32[144,128]{1,0:T(1,128)}', space=vmem, size = 0x12000, scoped, tag = 'internal scratch']
  %s0 = inlined_call_operand.vmem [shape: bf16[2,8,384], index: 0, kind: input, shape index: {}, may-alias: {0,1,2}]
  %s1 = inlined_call_operand.vmem [shape: bf16[2,8,384], index: 1, kind: input, shape index: {}, may-alias: {0,1,2}]
  %s2 = inlined_call_operand.vmem [shape: bf16[2,8,384], index: 2, kind: input, shape index: {}, may-alias: {0,1,2}]
  %s3 = inlined_call_operand.vmem [shape: bf16[2,8,128], index: 3, kind: output, shape index: {}]
  %s4 = sld [smem:[#allocation0]]
  $region45: #{decoder_forward.20} parent=0
    _
  %s6 = ssub.s32 1, %s4
  %s7 = scalar_select 0, %s6, %s4
  loop: start=0, step=1, limit=4
  $region2: #{decoder_forward.20} parent=0 // loop_pre_header
    _
  $region3: #{decoder_forward.20} parent=0 // loop_header
    %s9 = sphi 0, %s13
    %p10 = scmp.ge.s32.totalorder %s9, 4
    %s16 = sphi 0, %s28
    %s17 = sphi 0, %s24
    %s18 = sphi 0, %s16
    %s19 = sphi 0, %s17
    %s20 = sphi 0, %s18
    %s21 = sphi 0, %s19
    %s33 = sphi 0, %s35
    %s36 = sphi 0, %s33
    %s37 = sphi 0, %s36
    %s53 = sphi 0, %s37
    %s59 = sphi 0, %s61
    %s62 = sphi 0, %s59
    %s63 = sphi 0, %s62
    %s79 = sphi 0, %s63
    %s85 = sphi 0, %s87
    %s88 = sphi 0, %s85
    %s89 = sphi 0, %s88
    %s105 = sphi 0, %s89
    %s113 = sphi 0, %s115
    %s116 = sphi 0, %s113
    %s117 = sphi 0, %s116
    %s133 = sphi 0, %s117
  $region4: #{decoder_forward.20} parent=0 // loop_header_branch
    %12 = sbr.rel (%p10) target = $region8
  $region5: #{decoder_forward.20} parent=0 // loop_body
    %s14 = ssub.s32 %s9, 1
    %s15 = ssub.s32 %s9, 2
    %s22 = sadd.s32 1, %s17
    %p23 = scmp.ge.s32.totalorder %s22, 1
    %s24 = scalar_select %p23, 0, %s22
    %s25 = sadd.s32 1, %s16
    %s26 = scalar_select %p23, %s25, %s16
    %p27 = scmp.ge.s32.totalorder %s26, 2
    %s28 = scalar_select %p27, 0, %s26
    %s29 = ssub.s32 %s16, %s28
    %s30 = ssub.s32 %s17, %s24
    %s31 = sor.u32 %s29, %s30
    %p32 = scmp.eq.s32.totalorder %s31, 0
    %s34 = sadd.s32 %s33, 1
    %s35 = scalar_select %p32, %s33, %s34
    %p38 = pneg %p32
    %p39 = scmp.eq.s32.totalorder %s9, 1
    %p40 = por %p38, %p39
    %p41 = scmp.ne.s32.totalorder %s33, %s36
    %p42 = scmp.eq.s32.totalorder %s9, 0
    %p43 = por %p41, %p42
    %p44 = scmp.ne.s32.totalorder %s33, %s36
    %p45 = scmp.eq.s32.totalorder %s14, 1
    %p46 = por %p44, %p45
    %p47 = scmp.ne.s32.totalorder %s36, %s37
    %p48 = scmp.eq.s32.totalorder %s14, 0
    %p49 = por %p47, %p48
    %p50 = scmp.ne.s32.totalorder %s36, %s37
    %p51 = scmp.eq.s32.totalorder %s15, 1
    %p52 = por %p50, %p51
    %p54 = scmp.ne.s32.totalorder %s37, %s53
    %p55 = scmp.eq.s32.totalorder %s15, 0
    %p56 = por %p54, %p55
    %s57 = ssub.s32 %s16, %s28
    %p58 = scmp.eq.s32.totalorder %s57, 0
    %s60 = sadd.s32 %s59, 1
    %s61 = scalar_select %p58, %s59, %s60
    %p64 = pneg %p58
    %p65 = scmp.eq.s32.totalorder %s9, 1
    %p66 = por %p64, %p65
    %p67 = scmp.ne.s32.totalorder %s59, %s62
    %p68 = scmp.eq.s32.totalorder %s9, 0
    %p69 = por %p67, %p68
    %p70 = scmp.ne.s32.totalorder %s59, %s62
    %p71 = scmp.eq.s32.totalorder %s14, 1
    %p72 = por %p70, %p71
    %p73 = scmp.ne.s32.totalorder %s62, %s63
    %p74 = scmp.eq.s32.totalorder %s14, 0
    %p75 = por %p73, %p74
    %p76 = scmp.ne.s32.totalorder %s62, %s63
    %p77 = scmp.eq.s32.totalorder %s15, 1
    %p78 = por %p76, %p77
    %p80 = scmp.ne.s32.totalorder %s63, %s79
    %p81 = scmp.eq.s32.totalorder %s15, 0
    %p82 = por %p80, %p81
    %s83 = ssub.s32 %s16, %s28
    %p84 = scmp.eq.s32.totalorder %s83, 0
    %s86 = sadd.s32 %s85, 1
    %s87 = scalar_select %p84, %s85, %s86
    %p90 = pneg %p84
    %p91 = scmp.eq.s32.totalorder %s9, 1
    %p92 = por %p90, %p91
    %p93 = scmp.ne.s32.totalorder %s85, %s88
    %p94 = scmp.eq.s32.totalorder %s9, 0
    %p95 = por %p93, %p94
    %p96 = scmp.ne.s32.totalorder %s85, %s88
    %p97 = scmp.eq.s32.totalorder %s14, 1
    %p98 = por %p96, %p97
    %p99 = scmp.ne.s32.totalorder %s88, %s89
    %p100 = scmp.eq.s32.totalorder %s14, 0
    %p101 = por %p99, %p100
    %p102 = scmp.ne.s32.totalorder %s88, %s89
    %p103 = scmp.eq.s32.totalorder %s15, 1
    %p104 = por %p102, %p103
    %p106 = scmp.ne.s32.totalorder %s89, %s105
    %p107 = scmp.eq.s32.totalorder %s15, 0
    %p108 = por %p106, %p107
    %s109 = ssub.s32 %s16, %s28
    %s110 = ssub.s32 %s17, %s24
    %s111 = sor.u32 %s109, %s110
    %p112 = scmp.eq.s32.totalorder %s111, 0
    %s114 = sadd.s32 %s113, 1
    %s115 = scalar_select %p112, %s113, %s114
    %p118 = pneg %p112
    %p119 = scmp.eq.s32.totalorder %s9, 1
    %p120 = por %p118, %p119
    %p121 = scmp.ne.s32.totalorder %s113, %s116
    %p122 = scmp.eq.s32.totalorder %s9, 0
    %p123 = por %p121, %p122
    %p124 = scmp.ne.s32.totalorder %s113, %s116
    %p125 = scmp.eq.s32.totalorder %s14, 1
    %p126 = por %p124, %p125
    %p127 = scmp.ne.s32.totalorder %s116, %s117
    %p128 = scmp.eq.s32.totalorder %s14, 0
    %p129 = por %p127, %p128
    %p130 = scmp.ne.s32.totalorder %s116, %s117
    %p131 = scmp.eq.s32.totalorder %s15, 1
    %p132 = por %p130, %p131
    %p134 = scmp.ne.s32.totalorder %s117, %s133
    %p135 = scmp.eq.s32.totalorder %s15, 0
    %p136 = por %p134, %p135
    %p137 = scmp.le.s32.totalorder 1, %s9
    %p138 = scmp.lt.s32.totalorder %s9, 3
    %p139 = pnand %p137, %p138
    %p140 = pneg %p139
    // Predicated region
    $region9: #{decoder_forward.20} parent=5 // pred_check
      _
    $region10: #{decoder_forward.20} parent=5 // pred_check_branch
      %142 = sbr.rel (%p139) target = $region12
    $region11: #{decoder_forward.20} parent=5 // pred_region
      %s143 = ssub.s32 %s9, 1
    $region12: #{decoder_forward.20} parent=5 // pred_fallthru
      _
    %p144 = scmp.lt.s32.totalorder %s9, 2
    // Predicated region
    $region13: #{decoder_forward.20} parent=5 // pred_check
      %p145 = pneg %p144
    $region14: #{decoder_forward.20} parent=5 // pred_check_branch
      %147 = sbr.rel (%p145) target = $region16
    $region15: #{decoder_forward.20} parent=5 // pred_region
      // Predicated region
      $region17: #{decoder_forward.20} parent=15 // pred_check
        %p148 = pneg %p43
      $region18: #{decoder_forward.20} parent=15 // pred_check_branch
        %150 = sbr.rel (%p148) target = $region20
      $region19: #{decoder_forward.20} parent=15 // pred_region
        %p151 = scmp.lt.s32.totalorder %s16, 1
        %s152 = scalar_select %p151, %s16, 1
        %p153 = scmp.lt.s32.totalorder %s17, 0
        %s154 = scalar_select %p153, %s17, 0
        %s155 = smul.addr %s154, 3
        %s156 = smul.addr %s152, 3
        %s157 = sadd.s32 %s155, %s156
        %s158 = smul.addr %s157, 4
        %s159 = scalar_lea.vmem %s0, %s158
      $region20: #{decoder_forward.20} parent=15 // pred_fallthru
        _
      // Predicated region
      $region21: #{decoder_forward.20} parent=15 // pred_check
        %p160 = pneg %p69
      $region22: #{decoder_forward.20} parent=15 // pred_check_branch
        %162 = sbr.rel (%p160) target = $region24
      $region23: #{decoder_forward.20} parent=15 // pred_region
        %p163 = scmp.lt.s32.totalorder %s16, 1
        %s164 = scalar_select %p163, %s16, 1
        %s165 = smul.addr %s164, 3
        %s166 = sadd.s32 1, %s165
        %s167 = smul.addr %s166, 4
        %s168 = scalar_lea.vmem %s1, %s167
      $region24: #{decoder_forward.20} parent=15 // pred_fallthru
        _
      // Predicated region
      $region25: #{decoder_forward.20} parent=15 // pred_check
        %p169 = pneg %p95
      $region26: #{decoder_forward.20} parent=15 // pred_check_branch
        %171 = sbr.rel (%p169) target = $region28
      $region27: #{decoder_forward.20} parent=15 // pred_region
        %p172 = scmp.lt.s32.totalorder %s16, 1
        %s173 = scalar_select %p172, %s16, 1
        %s174 = smul.addr %s173, 3
        %s175 = sadd.s32 2, %s174
        %s176 = smul.addr %s175, 4
        %s177 = scalar_lea.vmem %s2, %s176
      $region28: #{decoder_forward.20} parent=15 // pred_fallthru
        _
    $region16: #{decoder_forward.20} parent=5 // pred_fallthru
      _
    %p178 = scmp.le.s32.totalorder 1, %s9
    %p179 = scmp.lt.s32.totalorder %s9, 3
    %p180 = pnand %p178, %p179
    %p181 = pneg %p180
    // Predicated region
    $region29: #{decoder_forward.20} parent=5 // pred_check
      _
    $region30: #{decoder_forward.20} parent=5 // pred_check_branch
      %183 = sbr.rel (%p180) target = $region32
    $region31: #{decoder_forward.20} parent=5 // pred_region
      %s184 = ssub.s32 %s9, 1
      %p185 = scmp.lt.s32.totalorder %s18, 1
      %s186 = scalar_select %p185, %s18, 1
      %p187 = scmp.lt.s32.totalorder %s19, 0
      %s188 = scalar_select %p187, %s19, 0
      %s189 = smul.addr %s188, 3
      %s190 = smul.addr %s186, 3
      %s191 = sadd.s32 %s189, %s190
      %s192 = smul.addr %s191, 4
      %s193 = scalar_lea.vmem %s0, %s192
      %p194 = pneg %p49
      %p195 = pneg %p46
      %p196 = scmp.lt.s32.totalorder %s18, 1
      %s197 = scalar_select %p196, %s18, 1
      %s198 = smul.addr %s197, 3
      %s199 = sadd.s32 1, %s198
      %s200 = smul.addr %s199, 4
      %s201 = scalar_lea.vmem %s1, %s200
      %p202 = pneg %p75
      %p203 = pneg %p72
      %p204 = scmp.lt.s32.totalorder %s18, 1
      %s205 = scalar_select %p204, %s18, 1
      %s206 = smul.addr %s205, 3
      %s207 = sadd.s32 2, %s206
      %s208 = smul.addr %s207, 4
      %s209 = scalar_lea.vmem %s2, %s208
      %p210 = pneg %p101
      %p211 = pneg %p98
      %p212 = pneg %p129
      %p213 = pneg %p126
      %p214 = scmp.lt.s32.totalorder %s18, 1
      %s215 = scalar_select %p214, %s18, 1
      %p216 = scmp.lt.s32.totalorder %s19, 0
      %s217 = scalar_select %p216, %s19, 0
      %s218 = sadd.s32 %s217, %s215
      %s219 = smul.addr %s218, 4
      %s220 = scalar_lea.vmem %s3, %s219
      %p221 = scmp.lt.s32.totalorder %s18, 1
      %s222 = scalar_select %p221, %s18, 1
      %p223 = scmp.lt.s32.totalorder %s19, 0
      %s224 = scalar_select %p223, %s19, 0
      %s225 = smul.addr %s224, 3
      %s226 = smul.addr %s222, 3
      %s227 = sadd.s32 %s225, %s226
      %s228 = smul.addr %s227, 4
      %s229 = scalar_lea.vmem %s0, %s228
      %p230 = scmp.lt.s32.totalorder %s18, 1
      %s231 = scalar_select %p230, %s18, 1
      %s232 = smul.addr %s231, 3
      %s233 = sadd.s32 1, %s232
      %s234 = smul.addr %s233, 4
      %s235 = scalar_lea.vmem %s1, %s234
      %p236 = scmp.lt.s32.totalorder %s18, 1
      %s237 = scalar_select %p236, %s18, 1
      %s238 = smul.addr %s237, 3
      %s239 = sadd.s32 2, %s238
      %s240 = smul.addr %s239, 4
      %s241 = scalar_lea.vmem %s2, %s240
      %p242 = scmp.lt.s32.totalorder %s18, 1
      %s243 = scalar_select %p242, %s18, 1
      %p244 = scmp.lt.s32.totalorder %s19, 0
      %s245 = scalar_select %p244, %s19, 0
      %s246 = sadd.s32 %s245, %s243
      %s247 = smul.addr %s246, 4
      %s248 = scalar_lea.vmem %s3, %s247
      %v250 = vld [vmem:[%s229] sm:$0xf]
      %v251 = vunpack.c.l.bf16 %v250
      %v252 = vmul.f32 %v251, 0.17677669
      %v253 = vpack.c.bf16 %v252, %v252
      %v254 = vld [vmem:[%s235] sm:$0xf]
      %v255 = vld [vmem:[%s241] sm:$0xf]
      %s256 = smul.u32 %s19, 8
      %v257 = vlaneseq
      %v258 = vshrl.u32 %v257, 7
      %v259 = vstv %s256
      %v260 = vadd.s32 %v258, %v259
      %v261 = vlaneseq
      %v262 = vand.u32 %v261, 127
      %vm263 = vcmp.le.s32.totalorder %v262, %v260
      %vm264 = vcmask 261120
      %v266 = vsel %vm264, %v253, 0
      %v269 = vsel %vm264, %v254, 0
      %271 = vmatprep.subr.bf16.mxu0 0
      %272 = vmatpush1.bf16.xpose.msra.mxu0 0
      %273 = vmatprep.subr.bf16.mxu0 0
      %274 = vmatpush1.bf16.xpose.msra.mxu0 0
      %275 = vmatprep.subr.bf16.mxu0 0
      %276 = vmatpush1.bf16.xpose.msra.mxu0 0
      %277 = vmatprep.subr.bf16.mxu0 0
      %278 = vmatpush1.bf16.xpose.msra.mxu0 0
      %279 = vmatprep.subr.bf16.mxu0 0
      %280 = vmatpush1.bf16.xpose.msra.mxu0 0
      %281 = vmatprep.subr.bf16.mxu0 0
      %282 = vmatpush1.bf16.xpose.msra.mxu0 0
      %283 = vmatprep.subr.bf16.mxu0 0
      %284 = vmatpush1.bf16.xpose.msra.mxu0 0
      %285 = vmatprep.subr.bf16.mxu0 0
      %286 = vmatpush1.bf16.xpose.msra.mxu0 %v269
      %287 = vmatprep.subr.bf16.mxu0 0
      %288 = vmatpush2.bf16.xpose.msra.mxu0 0
      %289 = vmatprep.subr.bf16.mxu0 0
      %290 = vmatpush2.bf16.xpose.msra.mxu0 0
      %291 = vmatprep.subr.bf16.mxu0 0
      %292 = vmatpush2.bf16.xpose.msra.mxu0 0
      %293 = vmatprep.subr.bf16.mxu0 0
      %294 = vmatpush2.bf16.xpose.msra.mxu0 0
      %295 = vmatprep.subr.bf16.mxu0 0
      %296 = vmatpush2.bf16.xpose.msra.mxu0 0
      %297 = vmatprep.subr.bf16.mxu0 0
      %298 = vmatpush2.bf16.xpose.msra.mxu0 0
      %299 = vmatprep.subr.bf16.mxu0 0
      %300 = vmatpush2.bf16.xpose.msra.mxu0 0
      %301 = vmatprep.subr.bf16.mxu0 0
      %302 = vmatpush2.bf16.xpose.msra.mxu0 0
      %303 = vmatprep.mubr.bf16.mxu0 0
      %304 = vmatmul.mubr.bf16.gmra.mxu0 %v266
      %v305 = vpop.f32.mrf.mxu0
      %v306 = vadd.f32 0.0, %v305
      %v307 = vpop.f32.mrf.mxu0
      %v308 = vpop.f32.mrf.mxu0
      %v309 = vpop.f32.mrf.mxu0
      %310 = vdwg.mxu0
      %v311 = vsel %vm263, %v306, -1e+30
      %vm312 = vcmask 64512
      %v313 = vsel %vm312, %v311, -inf
      %314 = vmax.xlane.f32.xlu0 %v313
      %v315 = vpop.xlane.xlu0 %314
      %v316 = vsub.f32 %v311, %v315
      %v317 = vmul.f32 %v316, 1.442695
      %v318 = vpow.pop %v317
      %v319 = vsel %vm312, %v318, 0.0
      %320 = vadd.xlane.f32.xlu0 %v319
      %v321 = vpop.xlane.xlu0 %320
      %v322 = vrcp.pop %v321
      %v323 = vmul.f32 %v318, %v322
      %v324 = vpack.c.bf16 %v323, %v323
      %v326 = vsel %vm312, %v324, 0
      %vm328 = vcmask 1043456
      %v330 = vsel %vm328, %v255, 0
      %332 = vmatprep.subr.bf16.mxu0 0
      %333 = vmatpush1.bf16.msra.mxu0 0
      %334 = vmatprep.subr.bf16.mxu0 0
      %335 = vmatpush1.bf16.msra.mxu0 0
      %336 = vmatprep.subr.bf16.mxu0 0
      %337 = vmatpush1.bf16.msra.mxu0 0
      %338 = vmatprep.subr.bf16.mxu0 0
      %339 = vmatpush1.bf16.msra.mxu0 0
      %340 = vmatprep.subr.bf16.mxu0 0
      %341 = vmatpush1.bf16.msra.mxu0 0
      %342 = vmatprep.subr.bf16.mxu0 0
      %343 = vmatpush1.bf16.msra.mxu0 0
      %344 = vmatprep.subr.bf16.mxu0 0
      %345 = vmatpush1.bf16.msra.mxu0 0
      %346 = vmatprep.subr.bf16.mxu0 0
      %347 = vmatpush1.bf16.msra.mxu0 %v330
      %348 = vmatprep.subr.bf16.mxu0 0
      %349 = vmatpush2.bf16.msra.mxu0 0
      %350 = vmatprep.subr.bf16.mxu0 0
      %351 = vmatpush2.bf16.msra.mxu0 0
      %352 = vmatprep.subr.bf16.mxu0 0
      %353 = vmatpush2.bf16.msra.mxu0 0
      %354 = vmatprep.subr.bf16.mxu0 0
      %355 = vmatpush2.bf16.msra.mxu0 0
      %356 = vmatprep.subr.bf16.mxu0 0
      %357 = vmatpush2.bf16.msra.mxu0 0
      %358 = vmatprep.subr.bf16.mxu0 0
      %359 = vmatpush2.bf16.msra.mxu0 0
      %360 = vmatprep.subr.bf16.mxu0 0
      %361 = vmatpush2.bf16.msra.mxu0 0
      %362 = vmatprep.subr.bf16.mxu0 0
      %363 = vmatpush2.bf16.msra.mxu0 0
      %364 = vmatprep.mubr.bf16.mxu0 0
      %365 = vmatmul.mubr.bf16.gmra.mxu0 %v326
      %v366 = vpop.f32.mrf.mxu0
      %v367 = vadd.f32 0.0, %v366
      %v368 = vpop.f32.mrf.mxu0
      %v369 = vpop.f32.mrf.mxu0
      %v370 = vpop.f32.mrf.mxu0
      %371 = vdwg.mxu0
      %373 = vrot.lane.b32.xlu0 %v253, 96
      %v374 = vpop.permute.xlu0 %373
      %v376 = vunpack.c.l.b16 %v254
      %v377 = vpack.c.b16 %v376, %v376
      %378 = vrot.lane.b32.xlu0 %v377, 96
      %v379 = vpop.permute.xlu0 %378
      %v381 = vsel %vm264, %v374, 0
      %v384 = vsel %vm264, %v379, 0
      %386 = vmatprep.subr.bf16.mxu0 0
      %387 = vmatpush1.bf16.xpose.msra.mxu0 0
      %388 = vmatprep.subr.bf16.mxu0 0
      %389 = vmatpush1.bf16.xpose.msra.mxu0 0
      %390 = vmatprep.subr.bf16.mxu0 0
      %391 = vmatpush1.bf16.xpose.msra.mxu0 0
      %392 = vmatprep.subr.bf16.mxu0 0
      %393 = vmatpush1.bf16.xpose.msra.mxu0 0
      %394 = vmatprep.subr.bf16.mxu0 0
      %395 = vmatpush1.bf16.xpose.msra.mxu0 0
      %396 = vmatprep.subr.bf16.mxu0 0
      %397 = vmatpush1.bf16.xpose.msra.mxu0 0
      %398 = vmatprep.subr.bf16.mxu0 0
      %399 = vmatpush1.bf16.xpose.msra.mxu0 0
      %400 = vmatprep.subr.bf16.mxu0 0
      %401 = vmatpush1.bf16.xpose.msra.mxu0 %v384
      %402 = vmatprep.subr.bf16.mxu0 0
      %403 = vmatpush2.bf16.xpose.msra.mxu0 0
      %404 = vmatprep.subr.bf16.mxu0 0
      %405 = vmatpush2.bf16.xpose.msra.mxu0 0
      %406 = vmatprep.subr.bf16.mxu0 0
      %407 = vmatpush2.bf16.xpose.msra.mxu0 0
      %408 = vmatprep.subr.bf16.mxu0 0
      %409 = vmatpush2.bf16.xpose.msra.mxu0 0
      %410 = vmatprep.subr.bf16.mxu0 0
      %411 = vmatpush2.bf16.xpose.msra.mxu0 0
      %412 = vmatprep.subr.bf16.mxu0 0
      %413 = vmatpush2.bf16.xpose.msra.mxu0 0
      %414 = vmatprep.subr.bf16.mxu0 0
      %415 = vmatpush2.bf16.xpose.msra.mxu0 0
      %416 = vmatprep.subr.bf16.mxu0 0
      %417 = vmatpush2.bf16.xpose.msra.mxu0 0
      %418 = vmatprep.mubr.bf16.mxu0 0
      %419 = vmatmul.mubr.bf16.gmra.mxu0 %v381
      %v420 = vpop.f32.mrf.mxu0
      %v421 = vadd.f32 0.0, %v420
      %v422 = vpop.f32.mrf.mxu0
      %v423 = vpop.f32.mrf.mxu0
      %v424 = vpop.f32.mrf.mxu0
      %425 = vdwg.mxu0
      %v426 = vsel %vm263, %v421, -1e+30
      %v427 = vsel %vm312, %v426, -inf
      %428 = vmax.xlane.f32.xlu0 %v427
      %v429 = vpop.xlane.xlu0 %428
      %v430 = vsub.f32 %v426, %v429
      %v431 = vmul.f32 %v430, 1.442695
      %v432 = vpow.pop %v431
      %v433 = vsel %vm312, %v432, 0.0
      %434 = vadd.xlane.f32.xlu0 %v433
      %v435 = vpop.xlane.xlu0 %434
      %v436 = vrcp.pop %v435
      %v437 = vmul.f32 %v432, %v436
      %v438 = vpack.c.bf16 %v437, %v437
      %v440 = vunpack.c.l.b16 %v255
      %v441 = vpack.c.b16 %v440, %v440
      %442 = vrot.lane.b32.xlu0 %v441, 96
      %v443 = vpop.permute.xlu0 %442
      %v445 = vsel %vm312, %v438, 0
      %v448 = vsel %vm328, %v443, 0
      %450 = vmatprep.subr.bf16.mxu0 0
      %451 = vmatpush1.bf16.msra.mxu0 0
      %452 = vmatprep.subr.bf16.mxu0 0
      %453 = vmatpush1.bf16.msra.mxu0 0
      %454 = vmatprep.subr.bf16.mxu0 0
      %455 = vmatpush1.bf16.msra.mxu0 0
      %456 = vmatprep.subr.bf16.mxu0 0
      %457 = vmatpush1.bf16.msra.mxu0 0
      %458 = vmatprep.subr.bf16.mxu0 0
      %459 = vmatpush1.bf16.msra.mxu0 0
      %460 = vmatprep.subr.bf16.mxu0 0
      %461 = vmatpush1.bf16.msra.mxu0 0
      %462 = vmatprep.subr.bf16.mxu0 0
      %463 = vmatpush1.bf16.msra.mxu0 0
      %464 = vmatprep.subr.bf16.mxu0 0
      %465 = vmatpush1.bf16.msra.mxu0 %v448
      %466 = vmatprep.subr.bf16.mxu0 0
      %467 = vmatpush2.bf16.msra.mxu0 0
      %468 = vmatprep.subr.bf16.mxu0 0
      %469 = vmatpush2.bf16.msra.mxu0 0
      %470 = vmatprep.subr.bf16.mxu0 0
      %471 = vmatpush2.bf16.msra.mxu0 0
      %472 = vmatprep.subr.bf16.mxu0 0
      %473 = vmatpush2.bf16.msra.mxu0 0
      %474 = vmatprep.subr.bf16.mxu0 0
      %475 = vmatpush2.bf16.msra.mxu0 0
      %476 = vmatprep.subr.bf16.mxu0 0
      %477 = vmatpush2.bf16.msra.mxu0 0
      %478 = vmatprep.subr.bf16.mxu0 0
      %479 = vmatpush2.bf16.msra.mxu0 0
      %480 = vmatprep.subr.bf16.mxu0 0
      %481 = vmatpush2.bf16.msra.mxu0 0
      %482 = vmatprep.mubr.bf16.mxu0 0
      %483 = vmatmul.mubr.bf16.gmra.mxu0 %v445
      %v484 = vpop.f32.mrf.mxu0
      %v485 = vadd.f32 0.0, %v484
      %v486 = vpop.f32.mrf.mxu0
      %v487 = vpop.f32.mrf.mxu0
      %v488 = vpop.f32.mrf.mxu0
      %489 = vdwg.mxu0
      %490 = vrot.lane.b32.xlu0 %v253, 64
      %v491 = vpop.permute.xlu0 %490
      %492 = vrot.lane.b32.xlu0 %v377, 64
      %v493 = vpop.permute.xlu0 %492
      %v495 = vsel %vm264, %v491, 0
      %v498 = vsel %vm264, %v493, 0
      %500 = vmatprep.subr.bf16.mxu0 0
      %501 = vmatpush1.bf16.xpose.msra.mxu0 0
      %502 = vmatprep.subr.bf16.mxu0 0
      %503 = vmatpush1.bf16.xpose.msra.mxu0 0
      %504 = vmatprep.subr.bf16.mxu0 0
      %505 = vmatpush1.bf16.xpose.msra.mxu0 0
      %506 = vmatprep.subr.bf16.mxu0 0
      %507 = vmatpush1.bf16.xpose.msra.mxu0 0
      %508 = vmatprep.subr.bf16.mxu0 0
      %509 = vmatpush1.bf16.xpose.msra.mxu0 0
      %510 = vmatprep.subr.bf16.mxu0 0
      %511 = vmatpush1.bf16.xpose.msra.mxu0 0
      %512 = vmatprep.subr.bf16.mxu0 0
      %513 = vmatpush1.bf16.xpose.msra.mxu0 0
      %514 = vmatprep.subr.bf16.mxu0 0
      %515 = vmatpush1.bf16.xpose.msra.mxu0 %v498
      %516 = vmatprep.subr.bf16.mxu0 0
      %517 = vmatpush2.bf16.xpose.msra.mxu0 0
      %518 = vmatprep.subr.bf16.mxu0 0
      %519 = vmatpush2.bf16.xpose.msra.mxu0 0
      %520 = vmatprep.subr.bf16.mxu0 0
      %521 = vmatpush2.bf16.xpose.msra.mxu0 0
      %522 = vmatprep.subr.bf16.mxu0 0
      %523 = vmatpush2.bf16.xpose.msra.mxu0 0
      %524 = vmatprep.subr.bf16.mxu0 0
      %525 = vmatpush2.bf16.xpose.msra.mxu0 0
      %526 = vmatprep.subr.bf16.mxu0 0
      %527 = vmatpush2.bf16.xpose.msra.mxu0 0
      %528 = vmatprep.subr.bf16.mxu0 0
      %529 = vmatpush2.bf16.xpose.msra.mxu0 0
      %530 = vmatprep.subr.bf16.mxu0 0
      %531 = vmatpush2.bf16.xpose.msra.mxu0 0
      %532 = vmatprep.mubr.bf16.mxu0 0
      %533 = vmatmul.mubr.bf16.gmra.mxu0 %v495
      %v534 = vpop.f32.mrf.mxu0
      %v535 = vadd.f32 0.0, %v534
      %v536 = vpop.f32.mrf.mxu0
      %v537 = vpop.f32.mrf.mxu0
      %v538 = vpop.f32.mrf.mxu0
      %539 = vdwg.mxu0
      %v540 = vsel %vm263, %v535, -1e+30
      %v541 = vsel %vm312, %v540, -inf
      %542 = vmax.xlane.f32.xlu0 %v541
      %v543 = vpop.xlane.xlu0 %542
      %v544 = vsub.f32 %v540, %v543
      %v545 = vmul.f32 %v544, 1.442695
      %v546 = vpow.pop %v545
      %v547 = vsel %vm312, %v546, 0.0
      %548 = vadd.xlane.f32.xlu0 %v547
      %v549 = vpop.xlane.xlu0 %548
      %v550 = vrcp.pop %v549
      %v551 = vmul.f32 %v546, %v550
      %v552 = vpack.c.bf16 %v551, %v551
      %553 = vrot.lane.b32.xlu0 %v441, 64
      %v554 = vpop.permute.xlu0 %553
      %v556 = vsel %vm312, %v552, 0
      %v559 = vsel %vm328, %v554, 0
      %561 = vmatprep.subr.bf16.mxu0 0
      %562 = vmatpush1.bf16.msra.mxu0 0
      %563 = vmatprep.subr.bf16.mxu0 0
      %564 = vmatpush1.bf16.msra.mxu0 0
      %565 = vmatprep.subr.bf16.mxu0 0
      %566 = vmatpush1.bf16.msra.mxu0 0
      %567 = vmatprep.subr.bf16.mxu0 0
      %568 = vmatpush1.bf16.msra.mxu0 0
      %569 = vmatprep.subr.bf16.mxu0 0
      %570 = vmatpush1.bf16.msra.mxu0 0
      %571 = vmatprep.subr.bf16.mxu0 0
      %572 = vmatpush1.bf16.msra.mxu0 0
      %573 = vmatprep.subr.bf16.mxu0 0
      %574 = vmatpush1.bf16.msra.mxu0 0
      %575 = vmatprep.subr.bf16.mxu0 0
      %576 = vmatpush1.bf16.msra.mxu0 %v559
      %577 = vmatprep.subr.bf16.mxu0 0
      %578 = vmatpush2.bf16.msra.mxu0 0
      %579 = vmatprep.subr.bf16.mxu0 0
      %580 = vmatpush2.bf16.msra.mxu0 0
      %581 = vmatprep.subr.bf16.mxu0 0
      %582 = vmatpush2.bf16.msra.mxu0 0
      %583 = vmatprep.subr.bf16.mxu0 0
      %584 = vmatpush2.bf16.msra.mxu0 0
      %585 = vmatprep.subr.bf16.mxu0 0
      %586 = vmatpush2.bf16.msra.mxu0 0
      %587 = vmatprep.subr.bf16.mxu0 0
      %588 = vmatpush2.bf16.msra.mxu0 0
      %589 = vmatprep.subr.bf16.mxu0 0
      %590 = vmatpush2.bf16.msra.mxu0 0
      %591 = vmatprep.subr.bf16.mxu0 0
      %592 = vmatpush2.bf16.msra.mxu0 0
      %593 = vmatprep.mubr.bf16.mxu0 0
      %594 = vmatmul.mubr.bf16.gmra.mxu0 %v556
      %v595 = vpop.f32.mrf.mxu0
      %v596 = vadd.f32 0.0, %v595
      %v597 = vpop.f32.mrf.mxu0
      %v598 = vpop.f32.mrf.mxu0
      %v599 = vpop.f32.mrf.mxu0
      %600 = vdwg.mxu0
      %601 = vrot.lane.b32.xlu0 %v253, 32
      %v602 = vpop.permute.xlu0 %601
      %603 = vrot.lane.b32.xlu0 %v377, 32
      %v604 = vpop.permute.xlu0 %603
      %v606 = vsel %vm264, %v602, 0
      %v609 = vsel %vm264, %v604, 0
      %611 = vmatprep.subr.bf16.mxu0 0
      %612 = vmatpush1.bf16.xpose.msra.mxu0 0
      %613 = vmatprep.subr.bf16.mxu0 0
      %614 = vmatpush1.bf16.xpose.msra.mxu0 0
      %615 = vmatprep.subr.bf16.mxu0 0
      %616 = vmatpush1.bf16.xpose.msra.mxu0 0
      %617 = vmatprep.subr.bf16.mxu0 0
      %618 = vmatpush1.bf16.xpose.msra.mxu0 0
      %619 = vmatprep.subr.bf16.mxu0 0
      %620 = vmatpush1.bf16.xpose.msra.mxu0 0
      %621 = vmatprep.subr.bf16.mxu0 0
      %622 = vmatpush1.bf16.xpose.msra.mxu0 0
      %623 = vmatprep.subr.bf16.mxu0 0
      %624 = vmatpush1.bf16.xpose.msra.mxu0 0
      %625 = vmatprep.subr.bf16.mxu0 0
      %626 = vmatpush1.bf16.xpose.msra.mxu0 %v609
      %627 = vmatprep.subr.bf16.mxu0 0
      %628 = vmatpush2.bf16.xpose.msra.mxu0 0
      %629 = vmatprep.subr.bf16.mxu0 0
      %630 = vmatpush2.bf16.xpose.msra.mxu0 0
      %631 = vmatprep.subr.bf16.mxu0 0
      %632 = vmatpush2.bf16.xpose.msra.mxu0 0
      %633 = vmatprep.subr.bf16.mxu0 0
      %634 = vmatpush2.bf16.xpose.msra.mxu0 0
      %635 = vmatprep.subr.bf16.mxu0 0
      %636 = vmatpush2.bf16.xpose.msra.mxu0 0
      %637 = vmatprep.subr.bf16.mxu0 0
      %638 = vmatpush2.bf16.xpose.msra.mxu0 0
      %639 = vmatprep.subr.bf16.mxu0 0
      %640 = vmatpush2.bf16.xpose.msra.mxu0 0
      %641 = vmatprep.subr.bf16.mxu0 0
      %642 = vmatpush2.bf16.xpose.msra.mxu0 0
      %643 = vmatprep.mubr.bf16.mxu0 0
      %644 = vmatmul.mubr.bf16.gmra.mxu0 %v606
      %v645 = vpop.f32.mrf.mxu0
      %v646 = vadd.f32 0.0, %v645
      %v647 = vpop.f32.mrf.mxu0
      %v648 = vpop.f32.mrf.mxu0
      %v649 = vpop.f32.mrf.mxu0
      %650 = vdwg.mxu0
      %v651 = vsel %vm263, %v646, -1e+30
      %v652 = vsel %vm312, %v651, -inf
      %653 = vmax.xlane.f32.xlu0 %v652
      %v654 = vpop.xlane.xlu0 %653
      %v655 = vsub.f32 %v651, %v654
      %v656 = vmul.f32 %v655, 1.442695
      %v657 = vpow.pop %v656
      %v658 = vsel %vm312, %v657, 0.0
      %659 = vadd.xlane.f32.xlu0 %v658
      %v660 = vpop.xlane.xlu0 %659
      %v661 = vrcp.pop %v660
      %v662 = vmul.f32 %v657, %v661
      %v663 = vpack.c.bf16 %v662, %v662
      %664 = vrot.lane.b32.xlu0 %v441, 32
      %v665 = vpop.permute.xlu0 %664
      %v667 = vsel %vm312, %v663, 0
      %v670 = vsel %vm328, %v665, 0
      %672 = vmatprep.subr.bf16.mxu0 0
      %673 = vmatpush1.bf16.msra.mxu0 0
      %674 = vmatprep.subr.bf16.mxu0 0
      %675 = vmatpush1.bf16.msra.mxu0 0
      %676 = vmatprep.subr.bf16.mxu0 0
      %677 = vmatpush1.bf16.msra.mxu0 0
      %678 = vmatprep.subr.bf16.mxu0 0
      %679 = vmatpush1.bf16.msra.mxu0 0
      %680 = vmatprep.subr.bf16.mxu0 0
      %681 = vmatpush1.bf16.msra.mxu0 0
      %682 = vmatprep.subr.bf16.mxu0 0
      %683 = vmatpush1.bf16.msra.mxu0 0
      %684 = vmatprep.subr.bf16.mxu0 0
      %685 = vmatpush1.bf16.msra.mxu0 0
      %686 = vmatprep.subr.bf16.mxu0 0
      %687 = vmatpush1.bf16.msra.mxu0 %v670
      %688 = vmatprep.subr.bf16.mxu0 0
      %689 = vmatpush2.bf16.msra.mxu0 0
      %690 = vmatprep.subr.bf16.mxu0 0
      %691 = vmatpush2.bf16.msra.mxu0 0
      %692 = vmatprep.subr.bf16.mxu0 0
      %693 = vmatpush2.bf16.msra.mxu0 0
      %694 = vmatprep.subr.bf16.mxu0 0
      %695 = vmatpush2.bf16.msra.mxu0 0
      %696 = vmatprep.subr.bf16.mxu0 0
      %697 = vmatpush2.bf16.msra.mxu0 0
      %698 = vmatprep.subr.bf16.mxu0 0
      %699 = vmatpush2.bf16.msra.mxu0 0
      %700 = vmatprep.subr.bf16.mxu0 0
      %701 = vmatpush2.bf16.msra.mxu0 0
      %702 = vmatprep.subr.bf16.mxu0 0
      %703 = vmatpush2.bf16.msra.mxu0 0
      %704 = vmatprep.mubr.bf16.mxu0 0
      %705 = vmatmul.mubr.bf16.gmra.mxu0 %v667
      %v706 = vpop.f32.mrf.mxu0
      %v707 = vadd.f32 0.0, %v706
      %v708 = vpop.f32.mrf.mxu0
      %v709 = vpop.f32.mrf.mxu0
      %v710 = vpop.f32.mrf.mxu0
      %711 = vdwg.mxu0
      %713 = vrot.lane.b32.xlu0 %v485, 32
      %v714 = vpop.permute.xlu0 %713
      %717 = vrot.lane.b32.xlu0 %v596, 64
      %v718 = vpop.permute.xlu0 %717
      %721 = vrot.lane.b32.xlu0 %v707, 96
      %v722 = vpop.permute.xlu0 %721
      %v724 = vsel %vm264, %v367, %v714
      %vm725 = vcmask 523264
      %v726 = vsel %vm725, %v724, %v718
      %vm727 = vcmask 785408
      %v728 = vsel %vm727, %v726, %v722
      %v729 = vpack.c.bf16 %v728, %v728
      %730 = vst [vmem:[%s248] sm:$0xf] %v729
      %p731 = scmp.lt.s32.totalorder %s18, 1
      %s732 = scalar_select %p731, %s18, 1
      %p733 = scmp.lt.s32.totalorder %s19, 0
      %s734 = scalar_select %p733, %s19, 0
      %s735 = sadd.s32 %s734, %s732
      %s736 = smul.addr %s735, 4
      %s737 = scalar_lea.vmem %s3, %s736
      // Predicated region
      $region33: #{decoder_forward.20} parent=31 // pred_check
        %p738 = pneg %p126
      $region34: #{decoder_forward.20} parent=31 // pred_check_branch
        %740 = sbr.rel (%p738) target = $region36
      $region35: #{decoder_forward.20} parent=31 // pred_region
        _
      $region36: #{decoder_forward.20} parent=31 // pred_fallthru
        _
    $region32: #{decoder_forward.20} parent=5 // pred_fallthru
      _
    %p741 = scmp.le.s32.totalorder 2, %s9
    // Predicated region
    $region37: #{decoder_forward.20} parent=5 // pred_check
      %p742 = pneg %p741
    $region38: #{decoder_forward.20} parent=5 // pred_check_branch
      %744 = sbr.rel (%p742) target = $region40
    $region39: #{decoder_forward.20} parent=5 // pred_region
      %s745 = ssub.s32 %s9, 2
      // Predicated region
      $region41: #{decoder_forward.20} parent=39 // pred_check
        %p746 = pneg %p132
      $region42: #{decoder_forward.20} parent=39 // pred_check_branch
        %748 = sbr.rel (%p746) target = $region44
      $region43: #{decoder_forward.20} parent=39 // pred_region
        %p749 = scmp.lt.s32.totalorder %s20, 1
        %s750 = scalar_select %p749, %s20, 1
        %p751 = scmp.lt.s32.totalorder %s21, 0
        %s752 = scalar_select %p751, %s21, 0
        %s753 = sadd.s32 %s752, %s750
        %s754 = smul.addr %s753, 4
        %s755 = scalar_lea.vmem %s3, %s754
      $region44: #{decoder_forward.20} parent=39 // pred_fallthru
        _
    $region40: #{decoder_forward.20} parent=5 // pred_fallthru
      _
  $region6: #{decoder_forward.20} parent=0 // loop_footer
    %s13 = sadd.s32 1, %s9
  $region7: #{decoder_forward.20} parent=0 // loop_footer_branch
    %8 = sbr.rel target = $region3
  $region8: #{decoder_forward.20} parent=0 // loop_exit
    _

// kernel: decoder_forward.23
$region0: #{decoder_forward.23}
  #allocation0 [shape = 'u32[]', space=smem, size = 0x4, offset = 0x4, fixed_abs, tag = 'smem constant byte address 0x4 - core index']
  #allocation1 [shape = 'u32[144,128]{1,0:T(1,128)}', space=vmem, size = 0x12000, scoped, tag = 'internal scratch']
  #allocation2 [shape = 'f32[16,256]{1,0:T(8,128)}', space=vmem, size = 0x4000, scoped, tag = 'scratch operand']
  %s0 = inlined_call_operand.vmem [shape: bf16[16,128], index: 0, kind: input, shape index: {}]
  %s1 = inlined_call_operand.vmem [shape: bf16[128,256], index: 1, kind: input, shape index: {}]
  %s2 = inlined_call_operand.vmem [shape: f32[1,256], index: 2, kind: input, shape index: {}]
  %s3 = inlined_call_operand.vmem [shape: bf16[16,256], index: 3, kind: output, shape index: {}]
  %s4 = sld [smem:[#allocation0]]
  $region30: #{decoder_forward.23} parent=0
    _
  %s6 = ssub.s32 1, %s4
  %s7 = scalar_select 0, %s6, %s4
  // Predicated region
  $region2: #{decoder_forward.23} parent=0 // pred_check
    _
  $region3: #{decoder_forward.23} parent=0 // pred_check_branch
    %9 = sbr.rel (0) target = $region5
  $region4: #{decoder_forward.23} parent=0 // pred_region
    _
  $region5: #{decoder_forward.23} parent=0 // pred_fallthru
    _
  // Predicated region
  $region6: #{decoder_forward.23} parent=0 // pred_check
    _
  $region7: #{decoder_forward.23} parent=0 // pred_check_branch
    %11 = sbr.rel (0) target = $region9
  $region8: #{decoder_forward.23} parent=0 // pred_region
    _
  $region9: #{decoder_forward.23} parent=0 // pred_fallthru
    _
  // Predicated region
  $region10: #{decoder_forward.23} parent=0 // pred_check
    _
  $region11: #{decoder_forward.23} parent=0 // pred_check_branch
    %13 = sbr.rel (0) target = $region13
  $region12: #{decoder_forward.23} parent=0 // pred_region
    _
  $region13: #{decoder_forward.23} parent=0 // pred_fallthru
    _
  %p15 = scmp.eq.s32.totalorder 0, 0
  // Predicated region
  $region14: #{decoder_forward.23} parent=0 // pred_check
    %p16 = pneg %p15
  $region15: #{decoder_forward.23} parent=0 // pred_check_branch
    %18 = sbr.rel (%p16) target = $region17
  $region16: #{decoder_forward.23} parent=0 // pred_region
    %19 = vst [vmem:[#allocation2] sm:$0xff] 0.0
    %20 = vst [vmem:[#allocation2 + $0x8] sm:$0xff] 0.0
    %21 = vst [vmem:[#allocation2 + $0x10] sm:$0xff] 0.0
    %22 = vst [vmem:[#allocation2 + $0x18] sm:$0xff] 0.0
  $region17: #{decoder_forward.23} parent=0 // pred_fallthru
    _
  %v23 = vld [vmem:[#allocation2] sm:$0xff]
  %v24 = vld [vmem:[#allocation2 + $0x8] sm:$0xff]
  %v25 = vld [vmem:[#allocation2 + $0x10] sm:$0xff]
  %v26 = vld [vmem:[#allocation2 + $0x18] sm:$0xff]
  %v27 = vld [vmem:[%s0] sm:$0xf]
  %v28 = vld [vmem:[%s0 + $0x4] sm:$0xf]
  %v29 = vld [vmem:[%s1] sm:$0xff]
  %v30 = vld [vmem:[%s1 + $0x8] sm:$0xff]
  %v31 = vld [vmem:[%s1 + $0x10] sm:$0xff]
  %v32 = vld [vmem:[%s1 + $0x18] sm:$0xff]
  %v33 = vld [vmem:[%s1 + $0x20] sm:$0xff]
  %v34 = vld [vmem:[%s1 + $0x28] sm:$0xff]
  %v35 = vld [vmem:[%s1 + $0x30] sm:$0xff]
  %v36 = vld [vmem:[%s1 + $0x38] sm:$0xff]
  %v37 = vld [vmem:[%s1 + $0x40] sm:$0xff]
  %v38 = vld [vmem:[%s1 + $0x48] sm:$0xff]
  %v39 = vld [vmem:[%s1 + $0x50] sm:$0xff]
  %v40 = vld [vmem:[%s1 + $0x58] sm:$0xff]
  %v41 = vld [vmem:[%s1 + $0x60] sm:$0xff]
  %v42 = vld [vmem:[%s1 + $0x68] sm:$0xff]
  %v43 = vld [vmem:[%s1 + $0x70] sm:$0xff]
  %v44 = vld [vmem:[%s1 + $0x78] sm:$0xff]
  %v47 = vunpack.c.l.b16 %v27
  %v48 = vunpack.c.l.b16 %v28
  %v49 = vpack.c.b16 %v48, %v47
  %v67 = vunpack.c.l.b16 %v29
  %v68 = vunpack.c.h.b16 %v29
  %v69 = vunpack.c.l.b16 %v30
  %v70 = vunpack.c.h.b16 %v30
  %v71 = vunpack.c.l.b16 %v31
  %v72 = vunpack.c.h.b16 %v31
  %v73 = vunpack.c.l.b16 %v32
  %v74 = vunpack.c.h.b16 %v32
  %v75 = vunpack.c.l.b16 %v33
  %v76 = vunpack.c.h.b16 %v33
  %v77 = vunpack.c.l.b16 %v34
  %v78 = vunpack.c.h.b16 %v34
  %v79 = vunpack.c.l.b16 %v35
  %v80 = vunpack.c.h.b16 %v35
  %v81 = vunpack.c.l.b16 %v36
  %v82 = vunpack.c.h.b16 %v36
  %v83 = vunpack.c.l.b16 %v37
  %v84 = vunpack.c.h.b16 %v37
  %v85 = vunpack.c.l.b16 %v38
  %v86 = vunpack.c.h.b16 %v38
  %v87 = vunpack.c.l.b16 %v39
  %v88 = vunpack.c.h.b16 %v39
  %v89 = vunpack.c.l.b16 %v40
  %v90 = vunpack.c.h.b16 %v40
  %v91 = vunpack.c.l.b16 %v41
  %v92 = vunpack.c.h.b16 %v41
  %v93 = vunpack.c.l.b16 %v42
  %v94 = vunpack.c.h.b16 %v42
  %v95 = vunpack.c.l.b16 %v43
  %v96 = vunpack.c.h.b16 %v43
  %v97 = vunpack.c.l.b16 %v44
  %v98 = vunpack.c.h.b16 %v44
  %v99 = vpack.c.b16 %v69, %v67
  %v100 = vpack.c.b16 %v70, %v68
  %v101 = vpack.c.b16 %v73, %v71
  %v102 = vpack.c.b16 %v74, %v72
  %v103 = vpack.c.b16 %v77, %v75
  %v104 = vpack.c.b16 %v78, %v76
  %v105 = vpack.c.b16 %v81, %v79
  %v106 = vpack.c.b16 %v82, %v80
  %v107 = vpack.c.b16 %v85, %v83
  %v108 = vpack.c.b16 %v86, %v84
  %v109 = vpack.c.b16 %v89, %v87
  %v110 = vpack.c.b16 %v90, %v88
  %v111 = vpack.c.b16 %v93, %v91
  %v112 = vpack.c.b16 %v94, %v92
  %v113 = vpack.c.b16 %v97, %v95
  %v114 = vpack.c.b16 %v98, %v96
  %131 = vmatprep.subr.bf16.mxu0 %v114
  %132 = vmatpush1.bf16.msra.mxu0 %v113
  %133 = vmatprep.subr.bf16.mxu0 %v112
  %134 = vmatpush1.bf16.msra.mxu0 %v111
  %135 = vmatprep.subr.bf16.mxu0 %v110
  %136 = vmatpush1.bf16.msra.mxu0 %v109
  %137 = vmatprep.subr.bf16.mxu0 %v108
  %138 = vmatpush1.bf16.msra.mxu0 %v107
  %139 = vmatprep.subr.bf16.mxu0 %v106
  %140 = vmatpush1.bf16.msra.mxu0 %v105
  %141 = vmatprep.subr.bf16.mxu0 %v104
  %142 = vmatpush1.bf16.msra.mxu0 %v103
  %143 = vmatprep.subr.bf16.mxu0 %v102
  %144 = vmatpush1.bf16.msra.mxu0 %v101
  %145 = vmatprep.subr.bf16.mxu0 %v100
  %146 = vmatpush1.bf16.msra.mxu0 %v99
  %147 = vmatprep.subr.bf16.mxu0 0
  %148 = vmatpush2.bf16.msra.mxu0 0
  %149 = vmatprep.subr.bf16.mxu0 0
  %150 = vmatpush2.bf16.msra.mxu0 0
  %151 = vmatprep.subr.bf16.mxu0 0
  %152 = vmatpush2.bf16.msra.mxu0 0
  %153 = vmatprep.subr.bf16.mxu0 0
  %154 = vmatpush2.bf16.msra.mxu0 0
  %155 = vmatprep.subr.bf16.mxu0 0
  %156 = vmatpush2.bf16.msra.mxu0 0
  %157 = vmatprep.subr.bf16.mxu0 0
  %158 = vmatpush2.bf16.msra.mxu0 0
  %159 = vmatprep.subr.bf16.mxu0 0
  %160 = vmatpush2.bf16.msra.mxu0 0
  %161 = vmatprep.subr.bf16.mxu0 0
  %162 = vmatpush2.bf16.msra.mxu0 0
  %163 = vmatprep.mubr.bf16.mxu0 0
  %164 = vmatmul.mubr.bf16.gmra.mxu0 %v49
  %v165 = vpop.f32.mrf.mxu0
  %v166 = vadd.f32 0.0, %v165
  %v167 = vpop.f32.mrf.mxu0
  %v168 = vadd.f32 0.0, %v167
  %v169 = vpop.f32.mrf.mxu0
  %v170 = vadd.f32 0.0, %v169
  %v171 = vpop.f32.mrf.mxu0
  %v172 = vadd.f32 0.0, %v171
  %173 = vdwg.mxu0
  %v174 = vadd.f32 %v23, %v166
  %v175 = vadd.f32 %v24, %v168
  %v176 = vadd.f32 %v25, %v170
  %v177 = vadd.f32 %v26, %v172
  %178 = vst [vmem:[#allocation2] sm:$0xff] %v174
  %179 = vst [vmem:[#allocation2 + $0x8] sm:$0xff] %v175
  %180 = vst [vmem:[#allocation2 + $0x10] sm:$0xff] %v176
  %181 = vst [vmem:[#allocation2 + $0x18] sm:$0xff] %v177
  // Predicated region
  $region18: #{decoder_forward.23} parent=0 // pred_check
    %p182 = pneg %p15
  $region19: #{decoder_forward.23} parent=0 // pred_check_branch
    %184 = sbr.rel (%p182) target = $region21
  $region20: #{decoder_forward.23} parent=0 // pred_region
    %v185 = vld [vmem:[#allocation2] sm:$0xff]
    %v186 = vld [vmem:[#allocation2 + $0x8] sm:$0xff]
    %v187 = vld [vmem:[#allocation2 + $0x10] sm:$0xff]
    %v188 = vld [vmem:[#allocation2 + $0x18] sm:$0xff]
    %v189 = vld [vmem:[%s2] sm:$0x3]
    %v191 = vlaneseq
    %v192 = vshrl.u32 %v191, 7
    %v193 = vsub.s32 0, %v192
    %v194 = vrot.slane %v189, %v193
    %v195 = vlaneseq
    %v196 = vshrl.u32 %v195, 7
    %v197 = vsub.s32 1, %v196
    %v198 = vrot.slane %v189, %v197
    %v201 = vadd.f32 %v185, %v194
    %v202 = vadd.f32 %v186, %v198
    %v203 = vadd.f32 %v187, %v194
    %v204 = vadd.f32 %v188, %v198
    %v205 = vpack.c.bf16 %v203, %v201
    %v206 = vpack.c.bf16 %v204, %v202
    %v209 = vunpack.c.l.b16 %v205
    %v210 = vunpack.c.l.b16 %v206
    %v211 = vunpack.c.h.b16 %v205
    %v212 = vunpack.c.h.b16 %v206
    %v213 = vpack.c.b16 %v210, %v209
    %v214 = vpack.c.b16 %v212, %v211
    %217 = vst [vmem:[%s3] sm:$0xff] %v213
    %218 = vst [vmem:[%s3 + $0x8] sm:$0xff] %v214
  $region21: #{decoder_forward.23} parent=0 // pred_fallthru
    _
  // Predicated region
  $region22: #{decoder_forward.23} parent=0 // pred_check
    _
  $region23: #{decoder_forward.23} parent=0 // pred_check_branch
    %220 = sbr.rel (0) target = $region25
  $region24: #{decoder_forward.23} parent=0 // pred_region
    _
  $region25: #{decoder_forward.23} parent=0 // pred_fallthru
    _
  // Predicated region
  $region26: #{decoder_forward.23} parent=0 // pred_check
    _
  $region27: #{decoder_forward.23} parent=0 // pred_check_branch
    %222 = sbr.rel (0) target = $region29
  $region28: #{decoder_forward.23} parent=0 // pred_region
    _
  $region29: #{decoder_forward.23} parent=0 // pred_fallthru
    _

// kernel: decoder_forward.26
$region0: #{decoder_forward.26}
  #allocation0 [shape = 'u32[]', space=smem, size = 0x4, offset = 0x4, fixed_abs, tag = 'smem constant byte address 0x4 - core index']
  #allocation1 [shape = 'u32[144,128]{1,0:T(1,128)}', space=vmem, size = 0x12000, scoped, tag = 'internal scratch']
  #allocation2 [shape = 'f32[16,256]{1,0:T(8,128)}', space=vmem, size = 0x4000, scoped, tag = 'scratch operand']
  %s0 = inlined_call_operand.vmem [shape: bf16[16,128], index: 0, kind: input, shape index: {}]
  %s1 = inlined_call_operand.vmem [shape: bf16[128,256], index: 1, kind: input, shape index: {}]
  %s2 = inlined_call_operand.vmem [shape: f32[1,256], index: 2, kind: input, shape index: {}]
  %s3 = inlined_call_operand.vmem [shape: bf16[16,256], index: 3, kind: output, shape index: {}]
  %s4 = sld [smem:[#allocation0]]
  $region30: #{decoder_forward.26} parent=0
    _
  %s6 = ssub.s32 1, %s4
  %s7 = scalar_select 0, %s6, %s4
  // Predicated region
  $region2: #{decoder_forward.26} parent=0 // pred_check
    _
  $region3: #{decoder_forward.26} parent=0 // pred_check_branch
    %9 = sbr.rel (0) target = $region5
  $region4: #{decoder_forward.26} parent=0 // pred_region
    _
  $region5: #{decoder_forward.26} parent=0 // pred_fallthru
    _
  // Predicated region
  $region6: #{decoder_forward.26} parent=0 // pred_check
    _
  $region7: #{decoder_forward.26} parent=0 // pred_check_branch
    %11 = sbr.rel (0) target = $region9
  $region8: #{decoder_forward.26} parent=0 // pred_region
    _
  $region9: #{decoder_forward.26} parent=0 // pred_fallthru
    _
  // Predicated region
  $region10: #{decoder_forward.26} parent=0 // pred_check
    _
  $region11: #{decoder_forward.26} parent=0 // pred_check_branch
    %13 = sbr.rel (0) target = $region13
  $region12: #{decoder_forward.26} parent=0 // pred_region
    _
  $region13: #{decoder_forward.26} parent=0 // pred_fallthru
    _
  %p15 = scmp.eq.s32.totalorder 0, 0
  // Predicated region
  $region14: #{decoder_forward.26} parent=0 // pred_check
    %p16 = pneg %p15
  $region15: #{decoder_forward.26} parent=0 // pred_check_branch
    %18 = sbr.rel (%p16) target = $region17
  $region16: #{decoder_forward.26} parent=0 // pred_region
    %19 = vst [vmem:[#allocation2] sm:$0xff] 0.0
    %20 = vst [vmem:[#allocation2 + $0x8] sm:$0xff] 0.0
    %21 = vst [vmem:[#allocation2 + $0x10] sm:$0xff] 0.0
    %22 = vst [vmem:[#allocation2 + $0x18] sm:$0xff] 0.0
  $region17: #{decoder_forward.26} parent=0 // pred_fallthru
    _
  %v23 = vld [vmem:[#allocation2] sm:$0xff]
  %v24 = vld [vmem:[#allocation2 + $0x8] sm:$0xff]
  %v25 = vld [vmem:[#allocation2 + $0x10] sm:$0xff]
  %v26 = vld [vmem:[#allocation2 + $0x18] sm:$0xff]
  %v27 = vld [vmem:[%s0] sm:$0xf]
  %v28 = vld [vmem:[%s0 + $0x4] sm:$0xf]
  %v29 = vld [vmem:[%s1] sm:$0xff]
  %v30 = vld [vmem:[%s1 + $0x8] sm:$0xff]
  %v31 = vld [vmem:[%s1 + $0x10] sm:$0xff]
  %v32 = vld [vmem:[%s1 + $0x18] sm:$0xff]
  %v33 = vld [vmem:[%s1 + $0x20] sm:$0xff]
  %v34 = vld [vmem:[%s1 + $0x28] sm:$0xff]
  %v35 = vld [vmem:[%s1 + $0x30] sm:$0xff]
  %v36 = vld [vmem:[%s1 + $0x38] sm:$0xff]
  %v37 = vld [vmem:[%s1 + $0x40] sm:$0xff]
  %v38 = vld [vmem:[%s1 + $0x48] sm:$0xff]
  %v39 = vld [vmem:[%s1 + $0x50] sm:$0xff]
  %v40 = vld [vmem:[%s1 + $0x58] sm:$0xff]
  %v41 = vld [vmem:[%s1 + $0x60] sm:$0xff]
  %v42 = vld [vmem:[%s1 + $0x68] sm:$0xff]
  %v43 = vld [vmem:[%s1 + $0x70] sm:$0xff]
  %v44 = vld [vmem:[%s1 + $0x78] sm:$0xff]
  %v47 = vunpack.c.l.b16 %v27
  %v48 = vunpack.c.l.b16 %v28
  %v49 = vpack.c.b16 %v48, %v47
  %v67 = vunpack.c.l.b16 %v29
  %v68 = vunpack.c.h.b16 %v29
  %v69 = vunpack.c.l.b16 %v30
  %v70 = vunpack.c.h.b16 %v30
  %v71 = vunpack.c.l.b16 %v31
  %v72 = vunpack.c.h.b16 %v31
  %v73 = vunpack.c.l.b16 %v32
  %v74 = vunpack.c.h.b16 %v32
  %v75 = vunpack.c.l.b16 %v33
  %v76 = vunpack.c.h.b16 %v33
  %v77 = vunpack.c.l.b16 %v34
  %v78 = vunpack.c.h.b16 %v34
  %v79 = vunpack.c.l.b16 %v35
  %v80 = vunpack.c.h.b16 %v35
  %v81 = vunpack.c.l.b16 %v36
  %v82 = vunpack.c.h.b16 %v36
  %v83 = vunpack.c.l.b16 %v37
  %v84 = vunpack.c.h.b16 %v37
  %v85 = vunpack.c.l.b16 %v38
  %v86 = vunpack.c.h.b16 %v38
  %v87 = vunpack.c.l.b16 %v39
  %v88 = vunpack.c.h.b16 %v39
  %v89 = vunpack.c.l.b16 %v40
  %v90 = vunpack.c.h.b16 %v40
  %v91 = vunpack.c.l.b16 %v41
  %v92 = vunpack.c.h.b16 %v41
  %v93 = vunpack.c.l.b16 %v42
  %v94 = vunpack.c.h.b16 %v42
  %v95 = vunpack.c.l.b16 %v43
  %v96 = vunpack.c.h.b16 %v43
  %v97 = vunpack.c.l.b16 %v44
  %v98 = vunpack.c.h.b16 %v44
  %v99 = vpack.c.b16 %v69, %v67
  %v100 = vpack.c.b16 %v70, %v68
  %v101 = vpack.c.b16 %v73, %v71
  %v102 = vpack.c.b16 %v74, %v72
  %v103 = vpack.c.b16 %v77, %v75
  %v104 = vpack.c.b16 %v78, %v76
  %v105 = vpack.c.b16 %v81, %v79
  %v106 = vpack.c.b16 %v82, %v80
  %v107 = vpack.c.b16 %v85, %v83
  %v108 = vpack.c.b16 %v86, %v84
  %v109 = vpack.c.b16 %v89, %v87
  %v110 = vpack.c.b16 %v90, %v88
  %v111 = vpack.c.b16 %v93, %v91
  %v112 = vpack.c.b16 %v94, %v92
  %v113 = vpack.c.b16 %v97, %v95
  %v114 = vpack.c.b16 %v98, %v96
  %131 = vmatprep.subr.bf16.mxu0 %v114
  %132 = vmatpush1.bf16.msra.mxu0 %v113
  %133 = vmatprep.subr.bf16.mxu0 %v112
  %134 = vmatpush1.bf16.msra.mxu0 %v111
  %135 = vmatprep.subr.bf16.mxu0 %v110
  %136 = vmatpush1.bf16.msra.mxu0 %v109
  %137 = vmatprep.subr.bf16.mxu0 %v108
  %138 = vmatpush1.bf16.msra.mxu0 %v107
  %139 = vmatprep.subr.bf16.mxu0 %v106
  %140 = vmatpush1.bf16.msra.mxu0 %v105
  %141 = vmatprep.subr.bf16.mxu0 %v104
  %142 = vmatpush1.bf16.msra.mxu0 %v103
  %143 = vmatprep.subr.bf16.mxu0 %v102
  %144 = vmatpush1.bf16.msra.mxu0 %v101
  %145 = vmatprep.subr.bf16.mxu0 %v100
  %146 = vmatpush1.bf16.msra.mxu0 %v99
  %147 = vmatprep.subr.bf16.mxu0 0
  %148 = vmatpush2.bf16.msra.mxu0 0
  %149 = vmatprep.subr.bf16.mxu0 0
  %150 = vmatpush2.bf16.msra.mxu0 0
  %151 = vmatprep.subr.bf16.mxu0 0
  %152 = vmatpush2.bf16.msra.mxu0 0
  %153 = vmatprep.subr.bf16.mxu0 0
  %154 = vmatpush2.bf16.msra.mxu0 0
  %155 = vmatprep.subr.bf16.mxu0 0
  %156 = vmatpush2.bf16.msra.mxu0 0
  %157 = vmatprep.subr.bf16.mxu0 0
  %158 = vmatpush2.bf16.msra.mxu0 0
  %159 = vmatprep.subr.bf16.mxu0 0
  %160 = vmatpush2.bf16.msra.mxu0 0
  %161 = vmatprep.subr.bf16.mxu0 0
  %162 = vmatpush2.bf16.msra.mxu0 0
  %163 = vmatprep.mubr.bf16.mxu0 0
  %164 = vmatmul.mubr.bf16.gmra.mxu0 %v49
  %v165 = vpop.f32.mrf.mxu0
  %v166 = vadd.f32 0.0, %v165
  %v167 = vpop.f32.mrf.mxu0
  %v168 = vadd.f32 0.0, %v167
  %v169 = vpop.f32.mrf.mxu0
  %v170 = vadd.f32 0.0, %v169
  %v171 = vpop.f32.mrf.mxu0
  %v172 = vadd.f32 0.0, %v171
  %173 = vdwg.mxu0
  %v174 = vadd.f32 %v23, %v166
  %v175 = vadd.f32 %v24, %v168
  %v176 = vadd.f32 %v25, %v170
  %v177 = vadd.f32 %v26, %v172
  %178 = vst [vmem:[#allocation2] sm:$0xff] %v174
  %179 = vst [vmem:[#allocation2 + $0x8] sm:$0xff] %v175
  %180 = vst [vmem:[#allocation2 + $0x10] sm:$0xff] %v176
  %181 = vst [vmem:[#allocation2 + $0x18] sm:$0xff] %v177
  // Predicated region
  $region18: #{decoder_forward.26} parent=0 // pred_check
    %p182 = pneg %p15
  $region19: #{decoder_forward.26} parent=0 // pred_check_branch
    %184 = sbr.rel (%p182) target = $region21
  $region20: #{decoder_forward.26} parent=0 // pred_region
    %v185 = vld [vmem:[#allocation2] sm:$0xff]
    %v186 = vld [vmem:[#allocation2 + $0x8] sm:$0xff]
    %v187 = vld [vmem:[#allocation2 + $0x10] sm:$0xff]
    %v188 = vld [vmem:[#allocation2 + $0x18] sm:$0xff]
    %v189 = vld [vmem:[%s2] sm:$0x3]
    %v191 = vlaneseq
    %v192 = vshrl.u32 %v191, 7
    %v193 = vsub.s32 0, %v192
    %v194 = vrot.slane %v189, %v193
    %v195 = vlaneseq
    %v196 = vshrl.u32 %v195, 7
    %v197 = vsub.s32 1, %v196
    %v198 = vrot.slane %v189, %v197
    %v201 = vadd.f32 %v185, %v194
    %v202 = vadd.f32 %v186, %v198
    %v203 = vadd.f32 %v187, %v194
    %v204 = vadd.f32 %v188, %v198
    %v205 = vmax.f32 %v201, 0.0
    %v206 = vmax.f32 %v202, 0.0
    %v207 = vmax.f32 %v203, 0.0
    %v208 = vmax.f32 %v204, 0.0
    %v209 = vpack.c.bf16 %v207, %v205
    %v210 = vpack.c.bf16 %v208, %v206
    %v213 = vunpack.c.l.b16 %v209
    %v214 = vunpack.c.l.b16 %v210
    %v215 = vunpack.c.h.b16 %v209
    %v216 = vunpack.c.h.b16 %v210
    %v217 = vpack.c.b16 %v214, %v213
    %v218 = vpack.c.b16 %v216, %v215
    %221 = vst [vmem:[%s3] sm:$0xff] %v217
    %222 = vst [vmem:[%s3 + $0x8] sm:$0xff] %v218
  $region21: #{decoder_forward.26} parent=0 // pred_fallthru
    _
  // Predicated region
  $region22: #{decoder_forward.26} parent=0 // pred_check
    _
  $region23: #{decoder_forward.26} parent=0 // pred_check_branch
    %224 = sbr.rel (0) target = $region25
  $region24: #{decoder_forward.26} parent=0 // pred_region
    _
  $region25: #{decoder_forward.26} parent=0 // pred_fallthru
    _
  // Predicated region
  $region26: #{decoder_forward.26} parent=0 // pred_check
    _
  $region27: #{decoder_forward.26} parent=0 // pred_check_branch
    %226 = sbr.rel (0) target = $region29
  $region28: #{decoder_forward.26} parent=0 // pred_region
    _
  $region29: #{decoder_forward.26} parent=0 // pred_fallthru
    _

// kernel: decoder_forward.27
$region0: #{decoder_forward.27}
  #allocation0 [shape = 'u32[]', space=smem, size = 0x4, offset = 0x4, fixed_abs, tag = 'smem constant byte address 0x4 - core index']
  #allocation1 [shape = 'u32[144,128]{1,0:T(1,128)}', space=vmem, size = 0x12000, scoped, tag = 'internal scratch']
  #allocation2 [shape = 'f32[16,128]{1,0:T(8,128)}', space=vmem, size = 0x2000, scoped, tag = 'scratch operand']
  %s0 = inlined_call_operand.vmem [shape: bf16[16,256], index: 0, kind: input, shape index: {}]
  %s1 = inlined_call_operand.vmem [shape: bf16[256,128], index: 1, kind: input, shape index: {}]
  %s2 = inlined_call_operand.vmem [shape: f32[1,128], index: 2, kind: input, shape index: {}]
  %s3 = inlined_call_operand.vmem [shape: bf16[16,128], index: 3, kind: input, shape index: {}]
  %s4 = inlined_call_operand.vmem [shape: f32[1,128], index: 4, kind: input, shape index: {}]
  %s5 = inlined_call_operand.vmem [shape: f32[1,128], index: 5, kind: input, shape index: {}]
  %s6 = inlined_call_operand.vmem [shape: bf16[16,128], index: 6, kind: output, shape index: {}]
  %s7 = sld [smem:[#allocation0]]
  $region42: #{decoder_forward.27} parent=0
    _
  %s9 = ssub.s32 1, %s7
  %s10 = scalar_select 0, %s9, %s7
  // Predicated region
  $region2: #{decoder_forward.27} parent=0 // pred_check
    _
  $region3: #{decoder_forward.27} parent=0 // pred_check_branch
    %12 = sbr.rel (0) target = $region5
  $region4: #{decoder_forward.27} parent=0 // pred_region
    _
  $region5: #{decoder_forward.27} parent=0 // pred_fallthru
    _
  // Predicated region
  $region6: #{decoder_forward.27} parent=0 // pred_check
    _
  $region7: #{decoder_forward.27} parent=0 // pred_check_branch
    %14 = sbr.rel (0) target = $region9
  $region8: #{decoder_forward.27} parent=0 // pred_region
    _
  $region9: #{decoder_forward.27} parent=0 // pred_fallthru
    _
  // Predicated region
  $region10: #{decoder_forward.27} parent=0 // pred_check
    _
  $region11: #{decoder_forward.27} parent=0 // pred_check_branch
    %16 = sbr.rel (0) target = $region13
  $region12: #{decoder_forward.27} parent=0 // pred_region
    _
  $region13: #{decoder_forward.27} parent=0 // pred_fallthru
    _
  // Predicated region
  $region14: #{decoder_forward.27} parent=0 // pred_check
    _
  $region15: #{decoder_forward.27} parent=0 // pred_check_branch
    %18 = sbr.rel (0) target = $region17
  $region16: #{decoder_forward.27} parent=0 // pred_region
    _
  $region17: #{decoder_forward.27} parent=0 // pred_fallthru
    _
  // Predicated region
  $region18: #{decoder_forward.27} parent=0 // pred_check
    _
  $region19: #{decoder_forward.27} parent=0 // pred_check_branch
    %20 = sbr.rel (0) target = $region21
  $region20: #{decoder_forward.27} parent=0 // pred_region
    _
  $region21: #{decoder_forward.27} parent=0 // pred_fallthru
    _
  // Predicated region
  $region22: #{decoder_forward.27} parent=0 // pred_check
    _
  $region23: #{decoder_forward.27} parent=0 // pred_check_branch
    %22 = sbr.rel (0) target = $region25
  $region24: #{decoder_forward.27} parent=0 // pred_region
    _
  $region25: #{decoder_forward.27} parent=0 // pred_fallthru
    _
  %p24 = scmp.eq.s32.totalorder 0, 0
  // Predicated region
  $region26: #{decoder_forward.27} parent=0 // pred_check
    %p25 = pneg %p24
  $region27: #{decoder_forward.27} parent=0 // pred_check_branch
    %27 = sbr.rel (%p25) target = $region29
  $region28: #{decoder_forward.27} parent=0 // pred_region
    %28 = vst [vmem:[#allocation2] sm:$0xff] 0.0
    %29 = vst [vmem:[#allocation2 + $0x8] sm:$0xff] 0.0
  $region29: #{decoder_forward.27} parent=0 // pred_fallthru
    _
  %v30 = vld [vmem:[#allocation2] sm:$0xff]
  %v31 = vld [vmem:[#allocation2 + $0x8] sm:$0xff]
  %v32 = vld [vmem:[%s0] sm:$0xff]
  %v33 = vld [vmem:[%s0 + $0x8] sm:$0xff]
  %v34 = vld [vmem:[%s1] sm:$0xf]
  %v35 = vld [vmem:[%s1 + $0x4] sm:$0xf]
  %v36 = vld [vmem:[%s1 + $0x8] sm:$0xf]
  %v37 = vld [vmem:[%s1 + $0xc] sm:$0xf]
  %v38 = vld [vmem:[%s1 + $0x10] sm:$0xf]
  %v39 = vld [vmem:[%s1 + $0x14] sm:$0xf]
  %v40 = vld [vmem:[%s1 + $0x18] sm:$0xf]
  %v41 = vld [vmem:[%s1 + $0x1c] sm:$0xf]
  %v42 = vld [vmem:[%s1 + $0x20] sm:$0xf]
  %v43 = vld [vmem:[%s1 + $0x24] sm:$0xf]
  %v44 = vld [vmem:[%s1 + $0x28] sm:$0xf]
  %v45 = vld [vmem:[%s1 + $0x2c] sm:$0xf]
  %v46 = vld [vmem:[%s1 + $0x30] sm:$0xf]
  %v47 = vld [vmem:[%s1 + $0x34] sm:$0xf]
  %v48 = vld [vmem:[%s1 + $0x38] sm:$0xf]
  %v49 = vld [vmem:[%s1 + $0x3c] sm:$0xf]
  %v50 = vld [vmem:[%s1 + $0x40] sm:$0xf]
  %v51 = vld [vmem:[%s1 + $0x44] sm:$0xf]
  %v52 = vld [vmem:[%s1 + $0x48] sm:$0xf]
  %v53 = vld [vmem:[%s1 + $0x4c] sm:$0xf]
  %v54 = vld [vmem:[%s1 + $0x50] sm:$0xf]
  %v55 = vld [vmem:[%s1 + $0x54] sm:$0xf]
  %v56 = vld [vmem:[%s1 + $0x58] sm:$0xf]
  %v57 = vld [vmem:[%s1 + $0x5c] sm:$0xf]
  %v58 = vld [vmem:[%s1 + $0x60] sm:$0xf]
  %v59 = vld [vmem:[%s1 + $0x64] sm:$0xf]
  %v60 = vld [vmem:[%s1 + $0x68] sm:$0xf]
  %v61 = vld [vmem:[%s1 + $0x6c] sm:$0xf]
  %v62 = vld [vmem:[%s1 + $0x70] sm:$0xf]
  %v63 = vld [vmem:[%s1 + $0x74] sm:$0xf]
  %v64 = vld [vmem:[%s1 + $0x78] sm:$0xf]
  %v65 = vld [vmem:[%s1 + $0x7c] sm:$0xf]
  %v68 = vunpack.c.l.b16 %v32
  %v69 = vunpack.c.h.b16 %v32
  %v70 = vunpack.c.l.b16 %v33
  %v71 = vunpack.c.h.b16 %v33
  %v72 = vpack.c.b16 %v70, %v68
  %v73 = vpack.c.b16 %v71, %v69
  %v108 = vunpack.c.l.b16 %v34
  %v109 = vunpack.c.l.b16 %v35
  %v110 = vunpack.c.l.b16 %v36
  %v111 = vunpack.c.l.b16 %v37
  %v112 = vunpack.c.l.b16 %v38
  %v113 = vunpack.c.l.b16 %v39
  %v114 = vunpack.c.l.b16 %v40
  %v115 = vunpack.c.l.b16 %v41
  %v116 = vunpack.c.l.b16 %v42
  %v117 = vunpack.c.l.b16 %v43
  %v118 = vunpack.c.l.b16 %v44
  %v119 = vunpack.c.l.b16 %v45
  %v120 = vunpack.c.l.b16 %v46
  %v121 = vunpack.c.l.b16 %v47
  %v122 = vunpack.c.l.b16 %v48
  %v123 = vunpack.c.l.b16 %v49
  %v124 = vunpack.c.l.b16 %v50
  %v125 = vunpack.c.l.b16 %v51
  %v126 = vunpack.c.l.b16 %v52
  %v127 = vunpack.c.l.b16 %v53
  %v128 = vunpack.c.l.b16 %v54
  %v129 = vunpack.c.l.b16 %v55
  %v130 = vunpack.c.l.b16 %v56
  %v131 = vunpack.c.l.b16 %v57
  %v132 = vunpack.c.l.b16 %v58
  %v133 = vunpack.c.l.b16 %v59
  %v134 = vunpack.c.l.b16 %v60
  %v135 = vunpack.c.l.b16 %v61
  %v136 = vunpack.c.l.b16 %v62
  %v137 = vunpack.c.l.b16 %v63
  %v138 = vunpack.c.l.b16 %v64
  %v139 = vunpack.c.l.b16 %v65
  %v140 = vpack.c.b16 %v109, %v108
  %v141 = vpack.c.b16 %v111, %v110
  %v142 = vpack.c.b16 %v113, %v112
  %v143 = vpack.c.b16 %v115, %v114
  %v144 = vpack.c.b16 %v117, %v116
  %v145 = vpack.c.b16 %v119, %v118
  %v146 = vpack.c.b16 %v121, %v120
  %v147 = vpack.c.b16 %v123, %v122
  %v148 = vpack.c.b16 %v125, %v124
  %v149 = vpack.c.b16 %v127, %v126
  %v150 = vpack.c.b16 %v129, %v128
  %v151 = vpack.c.b16 %v131, %v130
  %v152 = vpack.c.b16 %v133, %v132
  %v153 = vpack.c.b16 %v135, %v134
  %v154 = vpack.c.b16 %v137, %v136
  %v155 = vpack.c.b16 %v139, %v138
  %172 = vmatprep.subr.bf16.mxu0 0
  %173 = vmatpush1.bf16.msra.mxu0 %v147
  %174 = vmatprep.subr.bf16.mxu0 0
  %175 = vmatpush1.bf16.msra.mxu0 %v146
  %176 = vmatprep.subr.bf16.mxu0 0
  %177 = vmatpush1.bf16.msra.mxu0 %v145
  %178 = vmatprep.subr.bf16.mxu0 0
  %179 = vmatpush1.bf16.msra.mxu0 %v144
  %180 = vmatprep.subr.bf16.mxu0 0
  %181 = vmatpush1.bf16.msra.mxu0 %v143
  %182 = vmatprep.subr.bf16.mxu0 0
  %183 = vmatpush1.bf16.msra.mxu0 %v142
  %184 = vmatprep.subr.bf16.mxu0 0
  %185 = vmatpush1.bf16.msra.mxu0 %v141
  %186 = vmatprep.subr.bf16.mxu0 0
  %187 = vmatpush1.bf16.msra.mxu0 %v140
  %188 = vmatprep.subr.bf16.mxu0 0
  %189 = vmatpush2.bf16.msra.mxu0 %v155
  %190 = vmatprep.subr.bf16.mxu0 0
  %191 = vmatpush2.bf16.msra.mxu0 %v154
  %192 = vmatprep.subr.bf16.mxu0 0
  %193 = vmatpush2.bf16.msra.mxu0 %v153
  %194 = vmatprep.subr.bf16.mxu0 0
  %195 = vmatpush2.bf16.msra.mxu0 %v152
  %196 = vmatprep.subr.bf16.mxu0 0
  %197 = vmatpush2.bf16.msra.mxu0 %v151
  %198 = vmatprep.subr.bf16.mxu0 0
  %199 = vmatpush2.bf16.msra.mxu0 %v150
  %200 = vmatprep.subr.bf16.mxu0 0
  %201 = vmatpush2.bf16.msra.mxu0 %v149
  %202 = vmatprep.subr.bf16.mxu0 0
  %203 = vmatpush2.bf16.msra.mxu0 %v148
  %204 = vmatprep.mubr.bf16.mxu0 %v73
  %205 = vmatmul.mubr.bf16.gmra.mxu0 %v72
  %v206 = vpop.f32.mrf.mxu0
  %v207 = vadd.f32 0.0, %v206
  %v208 = vpop.f32.mrf.mxu0
  %v209 = vpop.f32.mrf.mxu0
  %v210 = vadd.f32 0.0, %v209
  %v211 = vpop.f32.mrf.mxu0
  %212 = vdwg.mxu0
  %v213 = vadd.f32 %v30, %v207
  %v214 = vadd.f32 %v31, %v210
  %215 = vst [vmem:[#allocation2] sm:$0xff] %v213
  %216 = vst [vmem:[#allocation2 + $0x8] sm:$0xff] %v214
  // Predicated region
  $region30: #{decoder_forward.27} parent=0 // pred_check
    %p217 = pneg %p24
  $region31: #{decoder_forward.27} parent=0 // pred_check_branch
    %219 = sbr.rel (%p217) target = $region33
  $region32: #{decoder_forward.27} parent=0 // pred_region
    %v220 = vld [vmem:[#allocation2] sm:$0xff]
    %v221 = vld [vmem:[#allocation2 + $0x8] sm:$0xff]
    %v222 = vld [vmem:[%s2] sm:$0x1]
    %v224 = vlaneseq
    %v225 = vshrl.u32 %v224, 7
    %v226 = vsub.s32 0, %v225
    %v227 = vrot.slane %v222, %v226
    %v229 = vadd.f32 %v220, %v227
    %v230 = vadd.f32 %v221, %v227
    %v231 = vld [vmem:[%s3] sm:$0xf]
    %v232 = vld [vmem:[%s3 + $0x4] sm:$0xf]
    %v233 = vunpack.c.l.bf16 %v231
    %v234 = vunpack.c.l.bf16 %v232
    %v235 = vadd.f32 %v229, %v233
    %v236 = vadd.f32 %v230, %v234
    %237 = vadd.xlane.f32.xlu0 %v235
    %v238 = vpop.xlane.xlu0 %237
    %239 = vadd.xlane.f32.xlu0 %v236
    %v240 = vpop.xlane.xlu0 %239
    %v241 = vrcp.pop 128.0
    %v242 = vmul.f32 %v238, %v241
    %v243 = vmul.f32 %v240, %v241
    %v244 = vsub.f32 %v235, %v242
    %v245 = vsub.f32 %v236, %v243
    %v246 = vmul.f32 %v244, %v244
    %v247 = vmul.f32 %v245, %v245
    %248 = vadd.xlane.f32.xlu0 %v246
    %v249 = vpop.xlane.xlu0 %248
    %250 = vadd.xlane.f32.xlu0 %v247
    %v251 = vpop.xlane.xlu0 %250
    %v252 = vmul.f32 %v249, %v241
    %v253 = vmul.f32 %v251, %v241
    %v254 = vadd.f32 %v252, 1e-05
    %v255 = vadd.f32 %v253, 1e-05
    %v256 = vrsqrt.pop %v254
    %v257 = vrsqrt.pop %v255
    %v258 = vmul.f32 %v244, %v256
    %v259 = vmul.f32 %v245, %v257
    %v260 = vld [vmem:[%s4] sm:$0x1]
    %v262 = vlaneseq
    %v263 = vshrl.u32 %v262, 7
    %v264 = vsub.s32 0, %v263
    %v265 = vrot.slane %v260, %v264
    %v267 = vmul.f32 %v258, %v265
    %v268 = vmul.f32 %v259, %v265
    %v269 = vld [vmem:[%s5] sm:$0x1]
    %v271 = vlaneseq
    %v272 = vshrl.u32 %v271, 7
    %v273 = vsub.s32 0, %v272
    %v274 = vrot.slane %v269, %v273
    %v276 = vadd.f32 %v267, %v274
    %v277 = vadd.f32 %v268, %v274
    %v278 = vpack.c.bf16 %v277, %v276
    %v280 = vunpack.c.l.b16 %v278
    %v281 = vunpack.c.h.b16 %v278
    %v282 = vpack.c.b16 %v280, %v280
    %v283 = vpack.c.b16 %v281, %v281
    %286 = vst [vmem:[%s6] sm:$0xf] %v282
    %287 = vst [vmem:[%s6 + $0x4] sm:$0xf] %v283
  $region33: #{decoder_forward.27} parent=0 // pred_fallthru
    _
  // Predicated region
  $region34: #{decoder_forward.27} parent=0 // pred_check
    _
  $region35: #{decoder_forward.27} parent=0 // pred_check_branch
    %289 = sbr.rel (0) target = $region37
  $region36: #{decoder_forward.27} parent=0 // pred_region
    _
  $region37: #{decoder_forward.27} parent=0 // pred_fallthru
    _
  // Predicated region
  $region38: #{decoder_forward.27} parent=0 // pred_check
    _
  $region39: #{decoder_forward.27} parent=0 // pred_check_branch
    %291 = sbr.rel (0) target = $region41
  $region40: #{decoder_forward.27} parent=0 // pred_region
    _
  $region41: #{decoder_forward.27} parent=0 // pred_fallthru
    _

// kernel: decoder_forward.24
$region0: #{decoder_forward.24}
  #allocation0 [shape = 'u32[]', space=smem, size = 0x4, offset = 0x4, fixed_abs, tag = 'smem constant byte address 0x4 - core index']
  #allocation1 [shape = 'u32[144,128]{1,0:T(1,128)}', space=vmem, size = 0x12000, scoped, tag = 'internal scratch']
  %s0 = inlined_call_operand.vmem [shape: bf16[2,8,128], index: 0, kind: input, shape index: {}]
  %s1 = inlined_call_operand.vmem [shape: bf16[2,8,256], index: 1, kind: input, shape index: {}, may-alias: {1,2}]
  %s2 = inlined_call_operand.vmem [shape: bf16[2,8,256], index: 2, kind: input, shape index: {}, may-alias: {1,2}]
  %s3 = inlined_call_operand.vmem [shape: bf16[2,8,128], index: 3, kind: output, shape index: {}]
  %s4 = sld [smem:[#allocation0]]
  $region45: #{decoder_forward.24} parent=0
    _
  %s6 = ssub.s32 1, %s4
  %s7 = scalar_select 0, %s6, %s4
  loop: start=0, step=1, limit=4
  $region2: #{decoder_forward.24} parent=0 // loop_pre_header
    _
  $region3: #{decoder_forward.24} parent=0 // loop_header
    %s9 = sphi 0, %s13
    %p10 = scmp.ge.s32.totalorder %s9, 4
    %s16 = sphi 0, %s28
    %s17 = sphi 0, %s24
    %s18 = sphi 0, %s16
    %s19 = sphi 0, %s17
    %s20 = sphi 0, %s18
    %s21 = sphi 0, %s19
    %s33 = sphi 0, %s35
    %s36 = sphi 0, %s33
    %s37 = sphi 0, %s36
    %s53 = sphi 0, %s37
    %s59 = sphi 0, %s61
    %s62 = sphi 0, %s59
    %s63 = sphi 0, %s62
    %s79 = sphi 0, %s63
    %s85 = sphi 0, %s87
    %s88 = sphi 0, %s85
    %s89 = sphi 0, %s88
    %s105 = sphi 0, %s89
    %s113 = sphi 0, %s115
    %s116 = sphi 0, %s113
    %s117 = sphi 0, %s116
    %s133 = sphi 0, %s117
  $region4: #{decoder_forward.24} parent=0 // loop_header_branch
    %12 = sbr.rel (%p10) target = $region8
  $region5: #{decoder_forward.24} parent=0 // loop_body
    %s14 = ssub.s32 %s9, 1
    %s15 = ssub.s32 %s9, 2
    %s22 = sadd.s32 1, %s17
    %p23 = scmp.ge.s32.totalorder %s22, 1
    %s24 = scalar_select %p23, 0, %s22
    %s25 = sadd.s32 1, %s16
    %s26 = scalar_select %p23, %s25, %s16
    %p27 = scmp.ge.s32.totalorder %s26, 2
    %s28 = scalar_select %p27, 0, %s26
    %s29 = ssub.s32 %s16, %s28
    %s30 = ssub.s32 %s17, %s24
    %s31 = sor.u32 %s29, %s30
    %p32 = scmp.eq.s32.totalorder %s31, 0
    %s34 = sadd.s32 %s33, 1
    %s35 = scalar_select %p32, %s33, %s34
    %p38 = pneg %p32
    %p39 = scmp.eq.s32.totalorder %s9, 1
    %p40 = por %p38, %p39
    %p41 = scmp.ne.s32.totalorder %s33, %s36
    %p42 = scmp.eq.s32.totalorder %s9, 0
    %p43 = por %p41, %p42
    %p44 = scmp.ne.s32.totalorder %s33, %s36
    %p45 = scmp.eq.s32.totalorder %s14, 1
    %p46 = por %p44, %p45
    %p47 = scmp.ne.s32.totalorder %s36, %s37
    %p48 = scmp.eq.s32.totalorder %s14, 0
    %p49 = por %p47, %p48
    %p50 = scmp.ne.s32.totalorder %s36, %s37
    %p51 = scmp.eq.s32.totalorder %s15, 1
    %p52 = por %p50, %p51
    %p54 = scmp.ne.s32.totalorder %s37, %s53
    %p55 = scmp.eq.s32.totalorder %s15, 0
    %p56 = por %p54, %p55
    %s57 = ssub.s32 %s16, %s28
    %p58 = scmp.eq.s32.totalorder %s57, 0
    %s60 = sadd.s32 %s59, 1
    %s61 = scalar_select %p58, %s59, %s60
    %p64 = pneg %p58
    %p65 = scmp.eq.s32.totalorder %s9, 1
    %p66 = por %p64, %p65
    %p67 = scmp.ne.s32.totalorder %s59, %s62
    %p68 = scmp.eq.s32.totalorder %s9, 0
    %p69 = por %p67, %p68
    %p70 = scmp.ne.s32.totalorder %s59, %s62
    %p71 = scmp.eq.s32.totalorder %s14, 1
    %p72 = por %p70, %p71
    %p73 = scmp.ne.s32.totalorder %s62, %s63
    %p74 = scmp.eq.s32.totalorder %s14, 0
    %p75 = por %p73, %p74
    %p76 = scmp.ne.s32.totalorder %s62, %s63
    %p77 = scmp.eq.s32.totalorder %s15, 1
    %p78 = por %p76, %p77
    %p80 = scmp.ne.s32.totalorder %s63, %s79
    %p81 = scmp.eq.s32.totalorder %s15, 0
    %p82 = por %p80, %p81
    %s83 = ssub.s32 %s16, %s28
    %p84 = scmp.eq.s32.totalorder %s83, 0
    %s86 = sadd.s32 %s85, 1
    %s87 = scalar_select %p84, %s85, %s86
    %p90 = pneg %p84
    %p91 = scmp.eq.s32.totalorder %s9, 1
    %p92 = por %p90, %p91
    %p93 = scmp.ne.s32.totalorder %s85, %s88
    %p94 = scmp.eq.s32.totalorder %s9, 0
    %p95 = por %p93, %p94
    %p96 = scmp.ne.s32.totalorder %s85, %s88
    %p97 = scmp.eq.s32.totalorder %s14, 1
    %p98 = por %p96, %p97
    %p99 = scmp.ne.s32.totalorder %s88, %s89
    %p100 = scmp.eq.s32.totalorder %s14, 0
    %p101 = por %p99, %p100
    %p102 = scmp.ne.s32.totalorder %s88, %s89
    %p103 = scmp.eq.s32.totalorder %s15, 1
    %p104 = por %p102, %p103
    %p106 = scmp.ne.s32.totalorder %s89, %s105
    %p107 = scmp.eq.s32.totalorder %s15, 0
    %p108 = por %p106, %p107
    %s109 = ssub.s32 %s16, %s28
    %s110 = ssub.s32 %s17, %s24
    %s111 = sor.u32 %s109, %s110
    %p112 = scmp.eq.s32.totalorder %s111, 0
    %s114 = sadd.s32 %s113, 1
    %s115 = scalar_select %p112, %s113, %s114
    %p118 = pneg %p112
    %p119 = scmp.eq.s32.totalorder %s9, 1
    %p120 = por %p118, %p119
    %p121 = scmp.ne.s32.totalorder %s113, %s116
    %p122 = scmp.eq.s32.totalorder %s9, 0
    %p123 = por %p121, %p122
    %p124 = scmp.ne.s32.totalorder %s113, %s116
    %p125 = scmp.eq.s32.totalorder %s14, 1
    %p126 = por %p124, %p125
    %p127 = scmp.ne.s32.totalorder %s116, %s117
    %p128 = scmp.eq.s32.totalorder %s14, 0
    %p129 = por %p127, %p128
    %p130 = scmp.ne.s32.totalorder %s116, %s117
    %p131 = scmp.eq.s32.totalorder %s15, 1
    %p132 = por %p130, %p131
    %p134 = scmp.ne.s32.totalorder %s117, %s133
    %p135 = scmp.eq.s32.totalorder %s15, 0
    %p136 = por %p134, %p135
    %p137 = scmp.le.s32.totalorder 1, %s9
    %p138 = scmp.lt.s32.totalorder %s9, 3
    %p139 = pnand %p137, %p138
    %p140 = pneg %p139
    // Predicated region
    $region9: #{decoder_forward.24} parent=5 // pred_check
      _
    $region10: #{decoder_forward.24} parent=5 // pred_check_branch
      %142 = sbr.rel (%p139) target = $region12
    $region11: #{decoder_forward.24} parent=5 // pred_region
      %s143 = ssub.s32 %s9, 1
    $region12: #{decoder_forward.24} parent=5 // pred_fallthru
      _
    %p144 = scmp.lt.s32.totalorder %s9, 2
    // Predicated region
    $region13: #{decoder_forward.24} parent=5 // pred_check
      %p145 = pneg %p144
    $region14: #{decoder_forward.24} parent=5 // pred_check_branch
      %147 = sbr.rel (%p145) target = $region16
    $region15: #{decoder_forward.24} parent=5 // pred_region
      // Predicated region
      $region17: #{decoder_forward.24} parent=15 // pred_check
        %p148 = pneg %p43
      $region18: #{decoder_forward.24} parent=15 // pred_check_branch
        %150 = sbr.rel (%p148) target = $region20
      $region19: #{decoder_forward.24} parent=15 // pred_region
        %p151 = scmp.lt.s32.totalorder %s16, 1
        %s152 = scalar_select %p151, %s16, 1
        %p153 = scmp.lt.s32.totalorder %s17, 0
        %s154 = scalar_select %p153, %s17, 0
        %s155 = sadd.s32 %s154, %s152
        %s156 = smul.addr %s155, 4
        %s157 = scalar_lea.vmem %s0, %s156
      $region20: #{decoder_forward.24} parent=15 // pred_fallthru
        _
      // Predicated region
      $region21: #{decoder_forward.24} parent=15 // pred_check
        %p158 = pneg %p69
      $region22: #{decoder_forward.24} parent=15 // pred_check_branch
        %160 = sbr.rel (%p158) target = $region24
      $region23: #{decoder_forward.24} parent=15 // pred_region
        %p161 = scmp.lt.s32.totalorder %s16, 1
        %s162 = scalar_select %p161, %s16, 1
        %s163 = smul.addr %s162, 2
        %s164 = smul.addr %s163, 4
        %s165 = scalar_lea.vmem %s1, %s164
      $region24: #{decoder_forward.24} parent=15 // pred_fallthru
        _
      // Predicated region
      $region25: #{decoder_forward.24} parent=15 // pred_check
        %p166 = pneg %p95
      $region26: #{decoder_forward.24} parent=15 // pred_check_branch
        %168 = sbr.rel (%p166) target = $region28
      $region27: #{decoder_forward.24} parent=15 // pred_region
        %p169 = scmp.lt.s32.totalorder %s16, 1
        %s170 = scalar_select %p169, %s16, 1
        %s171 = smul.addr %s170, 2
        %s172 = sadd.s32 1, %s171
        %s173 = smul.addr %s172, 4
        %s174 = scalar_lea.vmem %s2, %s173
      $region28: #{decoder_forward.24} parent=15 // pred_fallthru
        _
    $region16: #{decoder_forward.24} parent=5 // pred_fallthru
      _
    %p175 = scmp.le.s32.totalorder 1, %s9
    %p176 = scmp.lt.s32.totalorder %s9, 3
    %p177 = pnand %p175, %p176
    %p178 = pneg %p177
    // Predicated region
    $region29: #{decoder_forward.24} parent=5 // pred_check
      _
    $region30: #{decoder_forward.24} parent=5 // pred_check_branch
      %180 = sbr.rel (%p177) target = $region32
    $region31: #{decoder_forward.24} parent=5 // pred_region
      %s181 = ssub.s32 %s9, 1
      %p182 = scmp.lt.s32.totalorder %s18, 1
      %s183 = scalar_select %p182, %s18, 1
      %p184 = scmp.lt.s32.totalorder %s19, 0
      %s185 = scalar_select %p184, %s19, 0
      %s186 = sadd.s32 %s185, %s183
      %s187 = smul.addr %s186, 4
      %s188 = scalar_lea.vmem %s0, %s187
      %p189 = pneg %p49
      %p190 = pneg %p46
      %p191 = scmp.lt.s32.totalorder %s18, 1
      %s192 = scalar_select %p191, %s18, 1
      %s193 = smul.addr %s192, 2
      %s194 = smul.addr %s193, 4
      %s195 = scalar_lea.vmem %s1, %s194
      %p196 = pneg %p75
      %p197 = pneg %p72
      %p198 = scmp.lt.s32.totalorder %s18, 1
      %s199 = scalar_select %p198, %s18, 1
      %s200 = smul.addr %s199, 2
      %s201 = sadd.s32 1, %s200
      %s202 = smul.addr %s201, 4
      %s203 = scalar_lea.vmem %s2, %s202
      %p204 = pneg %p101
      %p205 = pneg %p98
      %p206 = pneg %p129
      %p207 = pneg %p126
      %p208 = scmp.lt.s32.totalorder %s18, 1
      %s209 = scalar_select %p208, %s18, 1
      %p210 = scmp.lt.s32.totalorder %s19, 0
      %s211 = scalar_select %p210, %s19, 0
      %s212 = sadd.s32 %s211, %s209
      %s213 = smul.addr %s212, 4
      %s214 = scalar_lea.vmem %s3, %s213
      %p215 = scmp.lt.s32.totalorder %s18, 1
      %s216 = scalar_select %p215, %s18, 1
      %p217 = scmp.lt.s32.totalorder %s19, 0
      %s218 = scalar_select %p217, %s19, 0
      %s219 = sadd.s32 %s218, %s216
      %s220 = smul.addr %s219, 4
      %s221 = scalar_lea.vmem %s0, %s220
      %p222 = scmp.lt.s32.totalorder %s18, 1
      %s223 = scalar_select %p222, %s18, 1
      %s224 = smul.addr %s223, 2
      %s225 = smul.addr %s224, 4
      %s226 = scalar_lea.vmem %s1, %s225
      %p227 = scmp.lt.s32.totalorder %s18, 1
      %s228 = scalar_select %p227, %s18, 1
      %s229 = smul.addr %s228, 2
      %s230 = sadd.s32 1, %s229
      %s231 = smul.addr %s230, 4
      %s232 = scalar_lea.vmem %s2, %s231
      %p233 = scmp.lt.s32.totalorder %s18, 1
      %s234 = scalar_select %p233, %s18, 1
      %p235 = scmp.lt.s32.totalorder %s19, 0
      %s236 = scalar_select %p235, %s19, 0
      %s237 = sadd.s32 %s236, %s234
      %s238 = smul.addr %s237, 4
      %s239 = scalar_lea.vmem %s3, %s238
      %v241 = vld [vmem:[%s221] sm:$0xf]
      %v242 = vunpack.c.l.bf16 %v241
      %v243 = vmul.f32 %v242, 0.17677669
      %v244 = vpack.c.bf16 %v243, %v243
      %v245 = vld [vmem:[%s226] sm:$0xf]
      %v246 = vld [vmem:[%s232] sm:$0xf]
      %vm247 = vcmask 261120
      %v249 = vsel %vm247, %v244, 0
      %v252 = vsel %vm247, %v245, 0
      %254 = vmatprep.subr.bf16.mxu0 0
      %255 = vmatpush1.bf16.xpose.msra.mxu0 0
      %256 = vmatprep.subr.bf16.mxu0 0
      %257 = vmatpush1.bf16.xpose.msra.mxu0 0
      %258 = vmatprep.subr.bf16.mxu0 0
      %259 = vmatpush1.bf16.xpose.msra.mxu0 0
      %260 = vmatprep.subr.bf16.mxu0 0
      %261 = vmatpush1.bf16.xpose.msra.mxu0 0
      %262 = vmatprep.subr.bf16.mxu0 0
      %263 = vmatpush1.bf16.xpose.msra.mxu0 0
      %264 = vmatprep.subr.bf16.mxu0 0
      %265 = vmatpush1.bf16.xpose.msra.mxu0 0
      %266 = vmatprep.subr.bf16.mxu0 0
      %267 = vmatpush1.bf16.xpose.msra.mxu0 0
      %268 = vmatprep.subr.bf16.mxu0 0
      %269 = vmatpush1.bf16.xpose.msra.mxu0 %v252
      %270 = vmatprep.subr.bf16.mxu0 0
      %271 = vmatpush2.bf16.xpose.msra.mxu0 0
      %272 = vmatprep.subr.bf16.mxu0 0
      %273 = vmatpush2.bf16.xpose.msra.mxu0 0
      %274 = vmatprep.subr.bf16.mxu0 0
      %275 = vmatpush2.bf16.xpose.msra.mxu0 0
      %276 = vmatprep.subr.bf16.mxu0 0
      %277 = vmatpush2.bf16.xpose.msra.mxu0 0
      %278 = vmatprep.subr.bf16.mxu0 0
      %279 = vmatpush2.bf16.xpose.msra.mxu0 0
      %280 = vmatprep.subr.bf16.mxu0 0
      %281 = vmatpush2.bf16.xpose.msra.mxu0 0
      %282 = vmatprep.subr.bf16.mxu0 0
      %283 = vmatpush2.bf16.xpose.msra.mxu0 0
      %284 = vmatprep.subr.bf16.mxu0 0
      %285 = vmatpush2.bf16.xpose.msra.mxu0 0
      %286 = vmatprep.mubr.bf16.mxu0 0
      %287 = vmatmul.mubr.bf16.gmra.mxu0 %v249
      %v288 = vpop.f32.mrf.mxu0
      %v289 = vadd.f32 0.0, %v288
      %v290 = vpop.f32.mrf.mxu0
      %v291 = vpop.f32.mrf.mxu0
      %v292 = vpop.f32.mrf.mxu0
      %293 = vdwg.mxu0
      %vm294 = vcmask 64512
      %v295 = vsel %vm294, %v289, -inf
      %296 = vmax.xlane.f32.xlu0 %v295
      %v297 = vpop.xlane.xlu0 %296
      %v298 = vsub.f32 %v289, %v297
      %v299 = vmul.f32 %v298, 1.442695
      %v300 = vpow.pop %v299
      %v301 = vsel %vm294, %v300, 0.0
      %302 = vadd.xlane.f32.xlu0 %v301
      %v303 = vpop.xlane.xlu0 %302
      %v304 = vrcp.pop %v303
      %v305 = vmul.f32 %v300, %v304
      %v306 = vpack.c.bf16 %v305, %v305
      %v308 = vsel %vm294, %v306, 0
      %vm310 = vcmask 1043456
      %v312 = vsel %vm310, %v246, 0
      %314 = vmatprep.subr.bf16.mxu0 0
      %315 = vmatpush1.bf16.msra.mxu0 0
      %316 = vmatprep.subr.bf16.mxu0 0
      %317 = vmatpush1.bf16.msra.mxu0 0
      %318 = vmatprep.subr.bf16.mxu0 0
      %319 = vmatpush1.bf16.msra.mxu0 0
      %320 = vmatprep.subr.bf16.mxu0 0
      %321 = vmatpush1.bf16.msra.mxu0 0
      %322 = vmatprep.subr.bf16.mxu0 0
      %323 = vmatpush1.bf16.msra.mxu0 0
      %324 = vmatprep.subr.bf16.mxu0 0
      %325 = vmatpush1.bf16.msra.mxu0 0
      %326 = vmatprep.subr.bf16.mxu0 0
      %327 = vmatpush1.bf16.msra.mxu0 0
      %328 = vmatprep.subr.bf16.mxu0 0
      %329 = vmatpush1.bf16.msra.mxu0 %v312
      %330 = vmatprep.subr.bf16.mxu0 0
      %331 = vmatpush2.bf16.msra.mxu0 0
      %332 = vmatprep.subr.bf16.mxu0 0
      %333 = vmatpush2.bf16.msra.mxu0 0
      %334 = vmatprep.subr.bf16.mxu0 0
      %335 = vmatpush2.bf16.msra.mxu0 0
      %336 = vmatprep.subr.bf16.mxu0 0
      %337 = vmatpush2.bf16.msra.mxu0 0
      %338 = vmatprep.subr.bf16.mxu0 0
      %339 = vmatpush2.bf16.msra.mxu0 0
      %340 = vmatprep.subr.bf16.mxu0 0
      %341 = vmatpush2.bf16.msra.mxu0 0
      %342 = vmatprep.subr.bf16.mxu0 0
      %343 = vmatpush2.bf16.msra.mxu0 0
      %344 = vmatprep.subr.bf16.mxu0 0
      %345 = vmatpush2.bf16.msra.mxu0 0
      %346 = vmatprep.mubr.bf16.mxu0 0
      %347 = vmatmul.mubr.bf16.gmra.mxu0 %v308
      %v348 = vpop.f32.mrf.mxu0
      %v349 = vadd.f32 0.0, %v348
      %v350 = vpop.f32.mrf.mxu0
      %v351 = vpop.f32.mrf.mxu0
      %v352 = vpop.f32.mrf.mxu0
      %353 = vdwg.mxu0
      %355 = vrot.lane.b32.xlu0 %v244, 96
      %v356 = vpop.permute.xlu0 %355
      %v358 = vunpack.c.l.b16 %v245
      %v359 = vpack.c.b16 %v358, %v358
      %360 = vrot.lane.b32.xlu0 %v359, 96
      %v361 = vpop.permute.xlu0 %360
      %v363 = vsel %vm247, %v356, 0
      %v366 = vsel %vm247, %v361, 0
      %368 = vmatprep.subr.bf16.mxu0 0
      %369 = vmatpush1.bf16.xpose.msra.mxu0 0
      %370 = vmatprep.subr.bf16.mxu0 0
      %371 = vmatpush1.bf16.xpose.msra.mxu0 0
      %372 = vmatprep.subr.bf16.mxu0 0
      %373 = vmatpush1.bf16.xpose.msra.mxu0 0
      %374 = vmatprep.subr.bf16.mxu0 0
      %375 = vmatpush1.bf16.xpose.msra.mxu0 0
      %376 = vmatprep.subr.bf16.mxu0 0
      %377 = vmatpush1.bf16.xpose.msra.mxu0 0
      %378 = vmatprep.subr.bf16.mxu0 0
      %379 = vmatpush1.bf16.xpose.msra.mxu0 0
      %380 = vmatprep.subr.bf16.mxu0 0
      %381 = vmatpush1.bf16.xpose.msra.mxu0 0
      %382 = vmatprep.subr.bf16.mxu0 0
      %383 = vmatpush1.bf16.xpose.msra.mxu0 %v366
      %384 = vmatprep.subr.bf16.mxu0 0
      %385 = vmatpush2.bf16.xpose.msra.mxu0 0
      %386 = vmatprep.subr.bf16.mxu0 0
      %387 = vmatpush2.bf16.xpose.msra.mxu0 0
      %388 = vmatprep.subr.bf16.mxu0 0
      %389 = vmatpush2.bf16.xpose.msra.mxu0 0
      %390 = vmatprep.subr.bf16.mxu0 0
      %391 = vmatpush2.bf16.xpose.msra.mxu0 0
      %392 = vmatprep.subr.bf16.mxu0 0
      %393 = vmatpush2.bf16.xpose.msra.mxu0 0
      %394 = vmatprep.subr.bf16.mxu0 0
      %395 = vmatpush2.bf16.xpose.msra.mxu0 0
      %396 = vmatprep.subr.bf16.mxu0 0
      %397 = vmatpush2.bf16.xpose.msra.mxu0 0
      %398 = vmatprep.subr.bf16.mxu0 0
      %399 = vmatpush2.bf16.xpose.msra.mxu0 0
      %400 = vmatprep.mubr.bf16.mxu0 0
      %401 = vmatmul.mubr.bf16.gmra.mxu0 %v363
      %v402 = vpop.f32.mrf.mxu0
      %v403 = vadd.f32 0.0, %v402
      %v404 = vpop.f32.mrf.mxu0
      %v405 = vpop.f32.mrf.mxu0
      %v406 = vpop.f32.mrf.mxu0
      %407 = vdwg.mxu0
      %v408 = vsel %vm294, %v403, -inf
      %409 = vmax.xlane.f32.xlu0 %v408
      %v410 = vpop.xlane.xlu0 %409
      %v411 = vsub.f32 %v403, %v410
      %v412 = vmul.f32 %v411, 1.442695
      %v413 = vpow.pop %v412
      %v414 = vsel %vm294, %v413, 0.0
      %415 = vadd.xlane.f32.xlu0 %v414
      %v416 = vpop.xlane.xlu0 %415
      %v417 = vrcp.pop %v416
      %v418 = vmul.f32 %v413, %v417
      %v419 = vpack.c.bf16 %v418, %v418
      %v421 = vunpack.c.l.b16 %v246
      %v422 = vpack.c.b16 %v421, %v421
      %423 = vrot.lane.b32.xlu0 %v422, 96
      %v424 = vpop.permute.xlu0 %423
      %v426 = vsel %vm294, %v419, 0
      %v429 = vsel %vm310, %v424, 0
      %431 = vmatprep.subr.bf16.mxu0 0
      %432 = vmatpush1.bf16.msra.mxu0 0
      %433 = vmatprep.subr.bf16.mxu0 0
      %434 = vmatpush1.bf16.msra.mxu0 0
      %435 = vmatprep.subr.bf16.mxu0 0
      %436 = vmatpush1.bf16.msra.mxu0 0
      %437 = vmatprep.subr.bf16.mxu0 0
      %438 = vmatpush1.bf16.msra.mxu0 0
      %439 = vmatprep.subr.bf16.mxu0 0
      %440 = vmatpush1.bf16.msra.mxu0 0
      %441 = vmatprep.subr.bf16.mxu0 0
      %442 = vmatpush1.bf16.msra.mxu0 0
      %443 = vmatprep.subr.bf16.mxu0 0
      %444 = vmatpush1.bf16.msra.mxu0 0
      %445 = vmatprep.subr.bf16.mxu0 0
      %446 = vmatpush1.bf16.msra.mxu0 %v429
      %447 = vmatprep.subr.bf16.mxu0 0
      %448 = vmatpush2.bf16.msra.mxu0 0
      %449 = vmatprep.subr.bf16.mxu0 0
      %450 = vmatpush2.bf16.msra.mxu0 0
      %451 = vmatprep.subr.bf16.mxu0 0
      %452 = vmatpush2.bf16.msra.mxu0 0
      %453 = vmatprep.subr.bf16.mxu0 0
      %454 = vmatpush2.bf16.msra.mxu0 0
      %455 = vmatprep.subr.bf16.mxu0 0
      %456 = vmatpush2.bf16.msra.mxu0 0
      %457 = vmatprep.subr.bf16.mxu0 0
      %458 = vmatpush2.bf16.msra.mxu0 0
      %459 = vmatprep.subr.bf16.mxu0 0
      %460 = vmatpush2.bf16.msra.mxu0 0
      %461 = vmatprep.subr.bf16.mxu0 0
      %462 = vmatpush2.bf16.msra.mxu0 0
      %463 = vmatprep.mubr.bf16.mxu0 0
      %464 = vmatmul.mubr.bf16.gmra.mxu0 %v426
      %v465 = vpop.f32.mrf.mxu0
      %v466 = vadd.f32 0.0, %v465
      %v467 = vpop.f32.mrf.mxu0
      %v468 = vpop.f32.mrf.mxu0
      %v469 = vpop.f32.mrf.mxu0
      %470 = vdwg.mxu0
      %471 = vrot.lane.b32.xlu0 %v244, 64
      %v472 = vpop.permute.xlu0 %471
      %473 = vrot.lane.b32.xlu0 %v359, 64
      %v474 = vpop.permute.xlu0 %473
      %v476 = vsel %vm247, %v472, 0
      %v479 = vsel %vm247, %v474, 0
      %481 = vmatprep.subr.bf16.mxu0 0
      %482 = vmatpush1.bf16.xpose.msra.mxu0 0
      %483 = vmatprep.subr.bf16.mxu0 0
      %484 = vmatpush1.bf16.xpose.msra.mxu0 0
      %485 = vmatprep.subr.bf16.mxu0 0
      %486 = vmatpush1.bf16.xpose.msra.mxu0 0
      %487 = vmatprep.subr.bf16.mxu0 0
      %488 = vmatpush1.bf16.xpose.msra.mxu0 0
      %489 = vmatprep.subr.bf16.mxu0 0
      %490 = vmatpush1.bf16.xpose.msra.mxu0 0
      %491 = vmatprep.subr.bf16.mxu0 0
      %492 = vmatpush1.bf16.xpose.msra.mxu0 0
      %493 = vmatprep.subr.bf16.mxu0 0
      %494 = vmatpush1.bf16.xpose.msra.mxu0 0
      %495 = vmatprep.subr.bf16.mxu0 0
      %496 = vmatpush1.bf16.xpose.msra.mxu0 %v479
      %497 = vmatprep.subr.bf16.mxu0 0
      %498 = vmatpush2.bf16.xpose.msra.mxu0 0
      %499 = vmatprep.subr.bf16.mxu0 0
      %500 = vmatpush2.bf16.xpose.msra.mxu0 0
      %501 = vmatprep.subr.bf16.mxu0 0
      %502 = vmatpush2.bf16.xpose.msra.mxu0 0
      %503 = vmatprep.subr.bf16.mxu0 0
      %504 = vmatpush2.bf16.xpose.msra.mxu0 0
      %505 = vmatprep.subr.bf16.mxu0 0
      %506 = vmatpush2.bf16.xpose.msra.mxu0 0
      %507 = vmatprep.subr.bf16.mxu0 0
      %508 = vmatpush2.bf16.xpose.msra.mxu0 0
      %509 = vmatprep.subr.bf16.mxu0 0
      %510 = vmatpush2.bf16.xpose.msra.mxu0 0
      %511 = vmatprep.subr.bf16.mxu0 0
      %512 = vmatpush2.bf16.xpose.msra.mxu0 0
      %513 = vmatprep.mubr.bf16.mxu0 0
      %514 = vmatmul.mubr.bf16.gmra.mxu0 %v476
      %v515 = vpop.f32.mrf.mxu0
      %v516 = vadd.f32 0.0, %v515
      %v517 = vpop.f32.mrf.mxu0
      %v518 = vpop.f32.mrf.mxu0
      %v519 = vpop.f32.mrf.mxu0
      %520 = vdwg.mxu0
      %v521 = vsel %vm294, %v516, -inf
      %522 = vmax.xlane.f32.xlu0 %v521
      %v523 = vpop.xlane.xlu0 %522
      %v524 = vsub.f32 %v516, %v523
      %v525 = vmul.f32 %v524, 1.442695
      %v526 = vpow.pop %v525
      %v527 = vsel %vm294, %v526, 0.0
      %528 = vadd.xlane.f32.xlu0 %v527
      %v529 = vpop.xlane.xlu0 %528
      %v530 = vrcp.pop %v529
      %v531 = vmul.f32 %v526, %v530
      %v532 = vpack.c.bf16 %v531, %v531
      %533 = vrot.lane.b32.xlu0 %v422, 64
      %v534 = vpop.permute.xlu0 %533
      %v536 = vsel %vm294, %v532, 0
      %v539 = vsel %vm310, %v534, 0
      %541 = vmatprep.subr.bf16.mxu0 0
      %542 = vmatpush1.bf16.msra.mxu0 0
      %543 = vmatprep.subr.bf16.mxu0 0
      %544 = vmatpush1.bf16.msra.mxu0 0
      %545 = vmatprep.subr.bf16.mxu0 0
      %546 = vmatpush1.bf16.msra.mxu0 0
      %547 = vmatprep.subr.bf16.mxu0 0
      %548 = vmatpush1.bf16.msra.mxu0 0
      %549 = vmatprep.subr.bf16.mxu0 0
      %550 = vmatpush1.bf16.msra.mxu0 0
      %551 = vmatprep.subr.bf16.mxu0 0
      %552 = vmatpush1.bf16.msra.mxu0 0
      %553 = vmatprep.subr.bf16.mxu0 0
      %554 = vmatpush1.bf16.msra.mxu0 0
      %555 = vmatprep.subr.bf16.mxu0 0
      %556 = vmatpush1.bf16.msra.mxu0 %v539
      %557 = vmatprep.subr.bf16.mxu0 0
      %558 = vmatpush2.bf16.msra.mxu0 0
      %559 = vmatprep.subr.bf16.mxu0 0
      %560 = vmatpush2.bf16.msra.mxu0 0
      %561 = vmatprep.subr.bf16.mxu0 0
      %562 = vmatpush2.bf16.msra.mxu0 0
      %563 = vmatprep.subr.bf16.mxu0 0
      %564 = vmatpush2.bf16.msra.mxu0 0
      %565 = vmatprep.subr.bf16.mxu0 0
      %566 = vmatpush2.bf16.msra.mxu0 0
      %567 = vmatprep.subr.bf16.mxu0 0
      %568 = vmatpush2.bf16.msra.mxu0 0
      %569 = vmatprep.subr.bf16.mxu0 0
      %570 = vmatpush2.bf16.msra.mxu0 0
      %571 = vmatprep.subr.bf16.mxu0 0
      %572 = vmatpush2.bf16.msra.mxu0 0
      %573 = vmatprep.mubr.bf16.mxu0 0
      %574 = vmatmul.mubr.bf16.gmra.mxu0 %v536
      %v575 = vpop.f32.mrf.mxu0
      %v576 = vadd.f32 0.0, %v575
      %v577 = vpop.f32.mrf.mxu0
      %v578 = vpop.f32.mrf.mxu0
      %v579 = vpop.f32.mrf.mxu0
      %580 = vdwg.mxu0
      %581 = vrot.lane.b32.xlu0 %v244, 32
      %v582 = vpop.permute.xlu0 %581
      %583 = vrot.lane.b32.xlu0 %v359, 32
      %v584 = vpop.permute.xlu0 %583
      %v586 = vsel %vm247, %v582, 0
      %v589 = vsel %vm247, %v584, 0
      %591 = vmatprep.subr.bf16.mxu0 0
      %592 = vmatpush1.bf16.xpose.msra.mxu0 0
      %593 = vmatprep.subr.bf16.mxu0 0
      %594 = vmatpush1.bf16.xpose.msra.mxu0 0
      %595 = vmatprep.subr.bf16.mxu0 0
      %596 = vmatpush1.bf16.xpose.msra.mxu0 0
      %597 = vmatprep.subr.bf16.mxu0 0
      %598 = vmatpush1.bf16.xpose.msra.mxu0 0
      %599 = vmatprep.subr.bf16.mxu0 0
      %600 = vmatpush1.bf16.xpose.msra.mxu0 0
      %601 = vmatprep.subr.bf16.mxu0 0
      %602 = vmatpush1.bf16.xpose.msra.mxu0 0
      %603 = vmatprep.subr.bf16.mxu0 0
      %604 = vmatpush1.bf16.xpose.msra.mxu0 0
      %605 = vmatprep.subr.bf16.mxu0 0
      %606 = vmatpush1.bf16.xpose.msra.mxu0 %v589
      %607 = vmatprep.subr.bf16.mxu0 0
      %608 = vmatpush2.bf16.xpose.msra.mxu0 0
      %609 = vmatprep.subr.bf16.mxu0 0
      %610 = vmatpush2.bf16.xpose.msra.mxu0 0
      %611 = vmatprep.subr.bf16.mxu0 0
      %612 = vmatpush2.bf16.xpose.msra.mxu0 0
      %613 = vmatprep.subr.bf16.mxu0 0
      %614 = vmatpush2.bf16.xpose.msra.mxu0 0
      %615 = vmatprep.subr.bf16.mxu0 0
      %616 = vmatpush2.bf16.xpose.msra.mxu0 0
      %617 = vmatprep.subr.bf16.mxu0 0
      %618 = vmatpush2.bf16.xpose.msra.mxu0 0
      %619 = vmatprep.subr.bf16.mxu0 0
      %620 = vmatpush2.bf16.xpose.msra.mxu0 0
      %621 = vmatprep.subr.bf16.mxu0 0
      %622 = vmatpush2.bf16.xpose.msra.mxu0 0
      %623 = vmatprep.mubr.bf16.mxu0 0
      %624 = vmatmul.mubr.bf16.gmra.mxu0 %v586
      %v625 = vpop.f32.mrf.mxu0
      %v626 = vadd.f32 0.0, %v625
      %v627 = vpop.f32.mrf.mxu0
      %v628 = vpop.f32.mrf.mxu0
      %v629 = vpop.f32.mrf.mxu0
      %630 = vdwg.mxu0
      %v631 = vsel %vm294, %v626, -inf
      %632 = vmax.xlane.f32.xlu0 %v631
      %v633 = vpop.xlane.xlu0 %632
      %v634 = vsub.f32 %v626, %v633
      %v635 = vmul.f32 %v634, 1.442695
      %v636 = vpow.pop %v635
      %v637 = vsel %vm294, %v636, 0.0
      %638 = vadd.xlane.f32.xlu0 %v637
      %v639 = vpop.xlane.xlu0 %638
      %v640 = vrcp.pop %v639
      %v641 = vmul.f32 %v636, %v640
      %v642 = vpack.c.bf16 %v641, %v641
      %643 = vrot.lane.b32.xlu0 %v422, 32
      %v644 = vpop.permute.xlu0 %643
      %v646 = vsel %vm294, %v642, 0
      %v649 = vsel %vm310, %v644, 0
      %651 = vmatprep.subr.bf16.mxu0 0
      %652 = vmatpush1.bf16.msra.mxu0 0
      %653 = vmatprep.subr.bf16.mxu0 0
      %654 = vmatpush1.bf16.msra.mxu0 0
      %655 = vmatprep.subr.bf16.mxu0 0
      %656 = vmatpush1.bf16.msra.mxu0 0
      %657 = vmatprep.subr.bf16.mxu0 0
      %658 = vmatpush1.bf16.msra.mxu0 0
      %659 = vmatprep.subr.bf16.mxu0 0
      %660 = vmatpush1.bf16.msra.mxu0 0
      %661 = vmatprep.subr.bf16.mxu0 0
      %662 = vmatpush1.bf16.msra.mxu0 0
      %663 = vmatprep.subr.bf16.mxu0 0
      %664 = vmatpush1.bf16.msra.mxu0 0
      %665 = vmatprep.subr.bf16.mxu0 0
      %666 = vmatpush1.bf16.msra.mxu0 %v649
      %667 = vmatprep.subr.bf16.mxu0 0
      %668 = vmatpush2.bf16.msra.mxu0 0
      %669 = vmatprep.subr.bf16.mxu0 0
      %670 = vmatpush2.bf16.msra.mxu0 0
      %671 = vmatprep.subr.bf16.mxu0 0
      %672 = vmatpush2.bf16.msra.mxu0 0
      %673 = vmatprep.subr.bf16.mxu0 0
      %674 = vmatpush2.bf16.msra.mxu0 0
      %675 = vmatprep.subr.bf16.mxu0 0
      %676 = vmatpush2.bf16.msra.mxu0 0
      %677 = vmatprep.subr.bf16.mxu0 0
      %678 = vmatpush2.bf16.msra.mxu0 0
      %679 = vmatprep.subr.bf16.mxu0 0
      %680 = vmatpush2.bf16.msra.mxu0 0
      %681 = vmatprep.subr.bf16.mxu0 0
      %682 = vmatpush2.bf16.msra.mxu0 0
      %683 = vmatprep.mubr.bf16.mxu0 0
      %684 = vmatmul.mubr.bf16.gmra.mxu0 %v646
      %v685 = vpop.f32.mrf.mxu0
      %v686 = vadd.f32 0.0, %v685
      %v687 = vpop.f32.mrf.mxu0
      %v688 = vpop.f32.mrf.mxu0
      %v689 = vpop.f32.mrf.mxu0
      %690 = vdwg.mxu0
      %692 = vrot.lane.b32.xlu0 %v466, 32
      %v693 = vpop.permute.xlu0 %692
      %696 = vrot.lane.b32.xlu0 %v576, 64
      %v697 = vpop.permute.xlu0 %696
      %700 = vrot.lane.b32.xlu0 %v686, 96
      %v701 = vpop.permute.xlu0 %700
      %v703 = vsel %vm247, %v349, %v693
      %vm704 = vcmask 523264
      %v705 = vsel %vm704, %v703, %v697
      %vm706 = vcmask 785408
      %v707 = vsel %vm706, %v705, %v701
      %v708 = vpack.c.bf16 %v707, %v707
      %709 = vst [vmem:[%s239] sm:$0xf] %v708
      %p710 = scmp.lt.s32.totalorder %s18, 1
      %s711 = scalar_select %p710, %s18, 1
      %p712 = scmp.lt.s32.totalorder %s19, 0
      %s713 = scalar_select %p712, %s19, 0
      %s714 = sadd.s32 %s713, %s711
      %s715 = smul.addr %s714, 4
      %s716 = scalar_lea.vmem %s3, %s715
      // Predicated region
      $region33: #{decoder_forward.24} parent=31 // pred_check
        %p717 = pneg %p126
      $region34: #{decoder_forward.24} parent=31 // pred_check_branch
        %719 = sbr.rel (%p717) target = $region36
      $region35: #{decoder_forward.24} parent=31 // pred_region
        _
      $region36: #{decoder_forward.24} parent=31 // pred_fallthru
        _
    $region32: #{decoder_forward.24} parent=5 // pred_fallthru
      _
    %p720 = scmp.le.s32.totalorder 2, %s9
    // Predicated region
    $region37: #{decoder_forward.24} parent=5 // pred_check
      %p721 = pneg %p720
    $region38: #{decoder_forward.24} parent=5 // pred_check_branch
      %723 = sbr.rel (%p721) target = $region40
    $region39: #{decoder_forward.24} parent=5 // pred_region
      %s724 = ssub.s32 %s9, 2
      // Predicated region
      $region41: #{decoder_forward.24} parent=39 // pred_check
        %p725 = pneg %p132
      $region42: #{decoder_forward.24} parent=39 // pred_check_branch
        %727 = sbr.rel (%p725) target = $region44
      $region43: #{decoder_forward.24} parent=39 // pred_region
        %p728 = scmp.lt.s32.totalorder %s20, 1
        %s729 = scalar_select %p728, %s20, 1
        %p730 = scmp.lt.s32.totalorder %s21, 0
        %s731 = scalar_select %p730, %s21, 0
        %s732 = sadd.s32 %s731, %s729
        %s733 = smul.addr %s732, 4
        %s734 = scalar_lea.vmem %s3, %s733
      $region44: #{decoder_forward.24} parent=39 // pred_fallthru
        _
    $region40: #{decoder_forward.24} parent=5 // pred_fallthru
      _
  $region6: #{decoder_forward.24} parent=0 // loop_footer
    %s13 = sadd.s32 1, %s9
  $region7: #{decoder_forward.24} parent=0 // loop_footer_branch
    %8 = sbr.rel target = $region3
  $region8: #{decoder_forward.24} parent=0 // loop_exit
    _

// kernel: decoder_forward.37
$region0: #{decoder_forward.37}
  #allocation0 [shape = 'u32[]', space=smem, size = 0x4, offset = 0x4, fixed_abs, tag = 'smem constant byte address 0x4 - core index']
  #allocation1 [shape = 'u32[144,128]{1,0:T(1,128)}', space=vmem, size = 0x12000, scoped, tag = 'internal scratch']
  #allocation2 [shape = 'f32[16,128]{1,0:T(8,128)}', space=vmem, size = 0x2000, scoped, tag = 'scratch operand']
  %s0 = inlined_call_operand.vmem [shape: bf16[16,128], index: 0, kind: input, shape index: {}]
  %s1 = inlined_call_operand.vmem [shape: bf16[128,128], index: 1, kind: input, shape index: {}]
  %s2 = inlined_call_operand.vmem [shape: f32[1,128], index: 2, kind: input, shape index: {}]
  %s3 = inlined_call_operand.hbm [shape: f32[16,128], index: 3, kind: output, shape index: {}]
  %s4 = sld [smem:[#allocation0]]
  $region30: #{decoder_forward.37} parent=0
    _
  %s6 = ssub.s32 1, %s4
  %s7 = scalar_select 0, %s6, %s4
  $region1: #{decoder_forward.37} parent=0
    #allocation3 [shape = 'u8[8192]{0}', space=vmem, size = 0x2000, scoped, tag = 'output window, operand 0, single buffered']
    #allocation4 [shape = 's32[1]{0}', space=sflag, size = 0x4, scoped, tag = 'scoped memory for decoder_forward.37']
    %8 = vsyncpa [#allocation4], 0
    // Predicated region
    $region2: #{decoder_forward.37} parent=1 // pred_check
      _
    $region3: #{decoder_forward.37} parent=1 // pred_check_branch
      %10 = sbr.rel (0) target = $region5
    $region4: #{decoder_forward.37} parent=1 // pred_region
      _
    $region5: #{decoder_forward.37} parent=1 // pred_fallthru
      _
    // Predicated region
    $region6: #{decoder_forward.37} parent=1 // pred_check
      _
    $region7: #{decoder_forward.37} parent=1 // pred_check_branch
      %12 = sbr.rel (0) target = $region9
    $region8: #{decoder_forward.37} parent=1 // pred_region
      _
    $region9: #{decoder_forward.37} parent=1 // pred_fallthru
      _
    // Predicated region
    $region10: #{decoder_forward.37} parent=1 // pred_check
      _
    $region11: #{decoder_forward.37} parent=1 // pred_check_branch
      %14 = sbr.rel (0) target = $region13
    $region12: #{decoder_forward.37} parent=1 // pred_region
      _
    $region13: #{decoder_forward.37} parent=1 // pred_fallthru
      _
    %p16 = scmp.eq.s32.totalorder 0, 0
    // Predicated region
    $region14: #{decoder_forward.37} parent=1 // pred_check
      %p17 = pneg %p16
    $region15: #{decoder_forward.37} parent=1 // pred_check_branch
      %19 = sbr.rel (%p17) target = $region17
    $region16: #{decoder_forward.37} parent=1 // pred_region
      %20 = vst [vmem:[#allocation2] sm:$0xff] 0.0
      %21 = vst [vmem:[#allocation2 + $0x8] sm:$0xff] 0.0
    $region17: #{decoder_forward.37} parent=1 // pred_fallthru
      _
    %v22 = vld [vmem:[#allocation2] sm:$0xff]
    %v23 = vld [vmem:[#allocation2 + $0x8] sm:$0xff]
    %v24 = vld [vmem:[%s0] sm:$0xf]
    %v25 = vld [vmem:[%s0 + $0x4] sm:$0xf]
    %v26 = vld [vmem:[%s1] sm:$0xf]
    %v27 = vld [vmem:[%s1 + $0x4] sm:$0xf]
    %v28 = vld [vmem:[%s1 + $0x8] sm:$0xf]
    %v29 = vld [vmem:[%s1 + $0xc] sm:$0xf]
    %v30 = vld [vmem:[%s1 + $0x10] sm:$0xf]
    %v31 = vld [vmem:[%s1 + $0x14] sm:$0xf]
    %v32 = vld [vmem:[%s1 + $0x18] sm:$0xf]
    %v33 = vld [vmem:[%s1 + $0x1c] sm:$0xf]
    %v34 = vld [vmem:[%s1 + $0x20] sm:$0xf]
    %v35 = vld [vmem:[%s1 + $0x24] sm:$0xf]
    %v36 = vld [vmem:[%s1 + $0x28] sm:$0xf]
    %v37 = vld [vmem:[%s1 + $0x2c] sm:$0xf]
    %v38 = vld [vmem:[%s1 + $0x30] sm:$0xf]
    %v39 = vld [vmem:[%s1 + $0x34] sm:$0xf]
    %v40 = vld [vmem:[%s1 + $0x38] sm:$0xf]
    %v41 = vld [vmem:[%s1 + $0x3c] sm:$0xf]
    %v44 = vunpack.c.l.b16 %v24
    %v45 = vunpack.c.l.b16 %v25
    %v46 = vpack.c.b16 %v45, %v44
    %v64 = vunpack.c.l.b16 %v26
    %v65 = vunpack.c.l.b16 %v27
    %v66 = vunpack.c.l.b16 %v28
    %v67 = vunpack.c.l.b16 %v29
    %v68 = vunpack.c.l.b16 %v30
    %v69 = vunpack.c.l.b16 %v31
    %v70 = vunpack.c.l.b16 %v32
    %v71 = vunpack.c.l.b16 %v33
    %v72 = vunpack.c.l.b16 %v34
    %v73 = vunpack.c.l.b16 %v35
    %v74 = vunpack.c.l.b16 %v36
    %v75 = vunpack.c.l.b16 %v37
    %v76 = vunpack.c.l.b16 %v38
    %v77 = vunpack.c.l.b16 %v39
    %v78 = vunpack.c.l.b16 %v40
    %v79 = vunpack.c.l.b16 %v41
    %v80 = vpack.c.b16 %v65, %v64
    %v81 = vpack.c.b16 %v67, %v66
    %v82 = vpack.c.b16 %v69, %v68
    %v83 = vpack.c.b16 %v71, %v70
    %v84 = vpack.c.b16 %v73, %v72
    %v85 = vpack.c.b16 %v75, %v74
    %v86 = vpack.c.b16 %v77, %v76
    %v87 = vpack.c.b16 %v79, %v78
    %96 = vmatprep.subr.bf16.mxu0 0
    %97 = vmatpush1.bf16.msra.mxu0 %v87
    %98 = vmatprep.subr.bf16.mxu0 0
    %99 = vmatpush1.bf16.msra.mxu0 %v86
    %100 = vmatprep.subr.bf16.mxu0 0
    %101 = vmatpush1.bf16.msra.mxu0 %v85
    %102 = vmatprep.subr.bf16.mxu0 0
    %103 = vmatpush1.bf16.msra.mxu0 %v84
    %104 = vmatprep.subr.bf16.mxu0 0
    %105 = vmatpush1.bf16.msra.mxu0 %v83
    %106 = vmatprep.subr.bf16.mxu0 0
    %107 = vmatpush1.bf16.msra.mxu0 %v82
    %108 = vmatprep.subr.bf16.mxu0 0
    %109 = vmatpush1.bf16.msra.mxu0 %v81
    %110 = vmatprep.subr.bf16.mxu0 0
    %111 = vmatpush1.bf16.msra.mxu0 %v80
    %112 = vmatprep.subr.bf16.mxu0 0
    %113 = vmatpush2.bf16.msra.mxu0 0
    %114 = vmatprep.subr.bf16.mxu0 0
    %115 = vmatpush2.bf16.msra.mxu0 0
    %116 = vmatprep.subr.bf16.mxu0 0
    %117 = vmatpush2.bf16.msra.mxu0 0
    %118 = vmatprep.subr.bf16.mxu0 0
    %119 = vmatpush2.bf16.msra.mxu0 0
    %120 = vmatprep.subr.bf16.mxu0 0
    %121 = vmatpush2.bf16.msra.mxu0 0
    %122 = vmatprep.subr.bf16.mxu0 0
    %123 = vmatpush2.bf16.msra.mxu0 0
    %124 = vmatprep.subr.bf16.mxu0 0
    %125 = vmatpush2.bf16.msra.mxu0 0
    %126 = vmatprep.subr.bf16.mxu0 0
    %127 = vmatpush2.bf16.msra.mxu0 0
    %128 = vmatprep.mubr.bf16.mxu0 0
    %129 = vmatmul.mubr.bf16.gmra.mxu0 %v46
    %v130 = vpop.f32.mrf.mxu0
    %v131 = vadd.f32 0.0, %v130
    %v132 = vpop.f32.mrf.mxu0
    %v133 = vpop.f32.mrf.mxu0
    %v134 = vadd.f32 0.0, %v133
    %v135 = vpop.f32.mrf.mxu0
    %136 = vdwg.mxu0
    %v137 = vadd.f32 %v22, %v131
    %v138 = vadd.f32 %v23, %v134
    %139 = vst [vmem:[#allocation2] sm:$0xff] %v137
    %140 = vst [vmem:[#allocation2 + $0x8] sm:$0xff] %v138
    // Predicated region
    $region18: #{decoder_forward.37} parent=1 // pred_check
      %p141 = pneg %p16
    $region19: #{decoder_forward.37} parent=1 // pred_check_branch
      %143 = sbr.rel (%p141) target = $region21
    $region20: #{decoder_forward.37} parent=1 // pred_region
      %v144 = vld [vmem:[#allocation2] sm:$0xff]
      %v145 = vld [vmem:[#allocation2 + $0x8] sm:$0xff]
      %v146 = vld [vmem:[%s2] sm:$0x1]
      %v148 = vlaneseq
      %v149 = vshrl.u32 %v148, 7
      %v150 = vsub.s32 0, %v149
      %v151 = vrot.slane %v146, %v150
      %v153 = vadd.f32 %v144, %v151
      %v154 = vadd.f32 %v145, %v151
      %155 = vst [vmem:[#allocation3] sm:$0xff] %v153
      %156 = vst [vmem:[#allocation3 + $0x8] sm:$0xff] %v154
    $region21: #{decoder_forward.37} parent=1 // pred_fallthru
      _
    // Predicated region
    $region22: #{decoder_forward.37} parent=1 // pred_check
      _
    $region23: #{decoder_forward.37} parent=1 // pred_check_branch
      %158 = sbr.rel (0) target = $region25
    $region24: #{decoder_forward.37} parent=1 // pred_region
      %s160 = ssub.s32 256, 256
      %161 = vsyncadd [#allocation4], %s160
      %s162 = sshll.u32 [#allocation3], 4
      %s163 = int_to_ptr.vmem [resolvable:$true] %s162
      %168 = dma.vmem_to_hbm [thread:$0]  %s163, 256, %s3, [#allocation4], 128, 128, 8
    $region25: #{decoder_forward.37} parent=1 // pred_fallthru
      _
    // Predicated region
    $region26: #{decoder_forward.37} parent=1 // pred_check
      _
    $region27: #{decoder_forward.37} parent=1 // pred_check_branch
      %170 = sbr.rel (0) target = $region29
    $region28: #{decoder_forward.37} parent=1 // pred_region
      %171 = dma.done [#allocation4], 256
    $region29: #{decoder_forward.37} parent=1 // pred_fallthru
      _
    %172 = vsyncpa [#allocation4], 1

</llo_original>
